<compile_context>
chip_gen: v6e
topology: v6e:2x2x1
jax: 0.10.0
libtpu: 0.0.40
codegen_flags: <defaults>
</compile_context>

<pallas_src>
import functools

import jax
import jax.numpy as jnp
import numpy as np
from jax.experimental import pallas as pl
from jax.experimental.pallas import tpu as pltpu

# ---------------------------------------------------------------------------
# Small synthetic BERT hyper-parameters (original module loads bert-base).
# ---------------------------------------------------------------------------
NUM_LAYERS   = 2
MOE_POSITION = (1,)        # layers whose intermediate.dense is SharedExpertMOE
HIDDEN       = 32
NUM_HEADS    = 4
INTERMEDIATE = 64
NUM_EXPERTS  = 4
TOP_K        = 2
NUM_SHARED   = 1
NUM_LABELS   = 2
LN_EPS       = 1e-12       # BERT LayerNorm eps


# ---------------------------------------------------------------------------
# Math helpers shared by the Pallas kernel and the pure-JAX reference.
# ---------------------------------------------------------------------------
def _mm(a, w):
    """bf16 x bf16 matmul with f32 accumulation (MXU native path)."""
    return jnp.dot(a.astype(jnp.bfloat16), w.astype(jnp.bfloat16),
                   preferred_element_type=jnp.float32)


def _softmax(x):
    m = jnp.max(x, axis=-1, keepdims=True)
    e = jnp.exp(x - m)
    return e / jnp.sum(e, axis=-1, keepdims=True)


def _layernorm(x, g, b):
    mu = jnp.mean(x, axis=-1, keepdims=True)
    var = jnp.mean((x - mu) ** 2, axis=-1, keepdims=True)
    return (x - mu) * jax.lax.rsqrt(var + LN_EPS) * g + b


def _gelu(x):
    # TODO(synk): BERT's default is exact erf-GELU; tanh approximation used here.
    return 0.5 * x * (1.0 + jnp.tanh(0.7978845608028654 * (x + 0.044715 * x * x * x)))


def _softmax_approx(x):
    """Kernel-only softmax: denominator via EUP approximate reciprocal."""
    m = jnp.max(x, axis=-1, keepdims=True)
    e = jnp.exp(x - m)
    return e * pl.reciprocal(jnp.sum(e, axis=-1, keepdims=True), approx=True)


# ---------------------------------------------------------------------------
# Fused Pallas kernel: one sequence through encoder + pooler + classifier.
# ---------------------------------------------------------------------------
def _fused_kernel(*refs, num_heads, layer_is_moe, top_k,
                  intermediate, num_experts, num_shared):
    x_ref = refs[0]          # [1, S, H]
    bias_ref = refs[1]       # [R, MAXW] packed small operands (f32)
    o_ref = refs[-1]         # [1, 1, NUM_LABELS]
    wit = iter(refs[2:-1])
    nxt = lambda: next(wit)

    # Static cursor into the packed small-operand array.
    cursor = [0]
    def small(width):
        r = cursor[0]
        cursor[0] += 1
        return bias_ref[r:r + 1, 0:width]            # [1, width] f32

    h = x_ref[0].astype(jnp.float32)                 # [S, H] activations, f32
    S, H = h.shape
    hd = H // num_heads
    scale = float(hd) ** -0.5
    I = intermediate
    E, NS = num_experts, num_shared

    for is_moe in layer_is_moe:
        # ---------------- BertSelfAttention + BertSelfOutput ------------------
        wqkv, wo = nxt(), nxt()
        bqkv, bo, g1, be1 = small(3 * H), small(H), small(H), small(H)

        h_bf = h.astype(jnp.bfloat16)                # hoisted cast (1x per LN out)
        qkv = _mm(h_bf, wqkv[...]) + bqkv            # [S, 3H] f32, one fused matmul
        ctx_heads = []
        for i in range(num_heads):                   # static per-head loop
            qh = (qkv[:, i*hd:(i+1)*hd] * scale).astype(jnp.bfloat16)
            kh = qkv[:, H + i*hd:H + (i+1)*hd].astype(jnp.bfloat16)
            vh = qkv[:, 2*H + i*hd:2*H + (i+1)*hd].astype(jnp.bfloat16)
            s = jax.lax.dot_general(qh, kh, (((1,), (1,)), ((), ())),
                                    preferred_element_type=jnp.float32)   # [S,S]
            p = _softmax_approx(s).astype(jnp.bfloat16)
            ctx_heads.append(jnp.dot(p, vh, preferred_element_type=jnp.float32))
        ctx = jnp.concatenate(ctx_heads, axis=-1)    # [S, H]
        attn = _mm(ctx, wo[...]) + bo                # ONE fused output projection
        h = _layernorm(attn + h, g1, be1)

        # ---------------- FFN: SharedExpertMOE or plain BertIntermediate ------
        h_bf = h.astype(jnp.bfloat16)
        if is_moe:
            wr, wec, w2 = nxt(), nxt(), nxt()
            br, bec = small(E), small((E + NS) * I)
            b2, g2, be2 = small(H), small(H), small(H)

            logits = _mm(h_bf, wr[...]) + br                     # [S, E]
            probs = _softmax_approx(logits)
            work = logits
            mask = jnp.zeros(logits.shape, jnp.bool_)
            for _ in range(top_k):                               # iterative top-k
                m = jnp.max(work, axis=-1, keepdims=True)
                hit = work >= m
                mask = jnp.logical_or(mask, hit)
                work = jnp.where(hit, -1e30, work)
            w_top = jnp.where(mask, probs, 0.0)
            w_top = w_top * pl.reciprocal(
                jnp.sum(w_top, axis=-1, keepdims=True), approx=True)

            # One lane-dense matmul for ALL experts (routed + shared), then a
            # static-slice weighted group reduction (no selector matmul).
            inter_all = _mm(h_bf, wec[...]) + bec                # [S, (E+NS)*I]
            inter = jnp.zeros((S, I), jnp.float32)
            for e in range(E):
                inter = inter + w_top[:, e:e+1] * inter_all[:, e*I:(e+1)*I]
            for s_ in range(NS):
                g_ = E + s_
                inter = inter + inter_all[:, g_*I:(g_+1)*I]
            y = _mm(_gelu(inter), w2[...]) + b2
        else:
            w1, w2 = nxt(), nxt()
            b1, b2, g2, be2 = small(I), small(H), small(H), small(H)
            y = _mm(_gelu(_mm(h_bf, w1[...]) + b1), w2[...]) + b2
        h = _layernorm(y + h, g2, be2)

    # ------------- BertPooler (tanh on [CLS]) + dropout(id) + classifier -----
    wp, wc = nxt(), nxt()
    bp, bc = small(H), small(NUM_LABELS)
    cls = h[0:1, :]                                  # CLS row of this sequence
    pooled = jnp.tanh(_mm(cls, wp[...]) + bp)        # [1, H]
    o_ref[0] = _mm(pooled, wc[...]) + bc             # [1, NUM_LABELS]


# ---------------------------------------------------------------------------
# Wrapper: weight layout prep (fused QKV, concatenated experts, packed small
# operands) + single pallas_call with a parallel batch grid.
# ---------------------------------------------------------------------------
def _prepare_kernel_weights(params):
    H, I = HIDDEN, INTERMEDIATE
    E, NS = NUM_EXPERTS, NUM_SHARED
    maxw = max(3 * H, (E + NS) * I, I, H, E, NUM_LABELS)

    weights, rows, layer_is_moe = [], [], []

    def add_row(vec):
        buf = np.zeros((maxw,), np.float32)
        a = np.asarray(jax.device_get(jnp.asarray(vec, jnp.float32))).reshape(-1)
        buf[:a.shape[0]] = a
        rows.append(buf)

    for li in range(NUM_LAYERS):
        lp = params["layers"][li]
        wqkv = jnp.concatenate([lp["wq"], lp["wk"], lp["wv"]], axis=1)   # [H,3H]
        weights += [wqkv.astype(jnp.bfloat16), lp["wo"].astype(jnp.bfloat16)]
        add_row(jnp.concatenate([lp["bq"], lp["bk"], lp["bv"]], axis=1))
        add_row(lp["bo"]); add_row(lp["ln1_g"]); add_row(lp["ln1_b"])
        if li in MOE_POSITION:
            we_cat = jnp.concatenate([lp["we"][e] for e in range(E)]
                                     + [lp["ws"][s] for s in range(NS)], axis=1)
            be_cat = jnp.concatenate([lp["be"][e] for e in range(E)]
                                     + [lp["bs"][s] for s in range(NS)], axis=1)
            weights += [lp["wr"].astype(jnp.bfloat16),
                        we_cat.astype(jnp.bfloat16),
                        lp["w2"].astype(jnp.bfloat16)]
            add_row(lp["br"]); add_row(be_cat)
            add_row(lp["b2"]); add_row(lp["ln2_g"]); add_row(lp["ln2_b"])
            layer_is_moe.append(True)
        else:
            weights += [lp["w1"].astype(jnp.bfloat16), lp["w2"].astype(jnp.bfloat16)]
            add_row(lp["b1"]); add_row(lp["b2"])
            add_row(lp["ln2_g"]); add_row(lp["ln2_b"])
            layer_is_moe.append(False)

    weights += [params["wp"].astype(jnp.bfloat16), params["wc"].astype(jnp.bfloat16)]
    add_row(params["bp"]); add_row(params["bc"])

    bias_pack = jnp.asarray(np.stack(rows, axis=0))                # [R, maxw] f32
    return bias_pack, weights, tuple(layer_is_moe)


def moe_bert_forward(x, params):
    """MoEBert.forward: encoder -> pooler -> dropout(id) -> classifier."""
    B, S, H = x.shape
    bias_pack, weights, layer_is_moe = _prepare_kernel_weights(params)
    kernel = functools.partial(
        _fused_kernel, num_heads=NUM_HEADS, layer_is_moe=layer_is_moe,
        top_k=TOP_K, intermediate=INTERMEDIATE,
        num_experts=NUM_EXPERTS, num_shared=NUM_SHARED)

    in_specs = [pl.BlockSpec((1, S, H), lambda b: (b, 0, 0)),
                pl.BlockSpec(bias_pack.shape, lambda b: (0, 0))]
    in_specs += [pl.BlockSpec(w.shape, lambda b: (0, 0)) for w in weights]

    out = pl.pallas_call(
        kernel,
        out_shape=jax.ShapeDtypeStruct((B, 1, NUM_LABELS), jnp.float32),
        grid=(B,),
        in_specs=in_specs,
        out_specs=pl.BlockSpec((1, 1, NUM_LABELS), lambda b: (b, 0, 0)),
        compiler_params=pltpu.CompilerParams(dimension_semantics=("parallel",)),
    )(x, bias_pack, *weights)
    return out.reshape(B, NUM_LABELS)


# ---------------------------------------------------------------------------
# Deterministic synthetic parameters (stand-in for pretrained bert-base).
# Matmul weights are stored in bf16 (MXU native); biases / LN params in f32.
# ---------------------------------------------------------------------------
def init_params(key):
    kit = iter(jax.random.split(key, 64))

    def w(shape, dtype=jnp.bfloat16, scale=0.02):
        return (scale * jax.random.normal(next(kit), shape, jnp.float32)).astype(dtype)

    layers = []
    for li in range(NUM_LAYERS):
        lp = dict(
            wq=w((HIDDEN, HIDDEN)), bq=w((1, HIDDEN), jnp.float32),
            wk=w((HIDDEN, HIDDEN)), bk=w((1, HIDDEN), jnp.float32),
            wv=w((HIDDEN, HIDDEN)), bv=w((1, HIDDEN), jnp.float32),
            wo=w((HIDDEN, HIDDEN)), bo=w((1, HIDDEN), jnp.float32),
            ln1_g=jnp.ones((1, HIDDEN), jnp.float32),
            ln1_b=jnp.zeros((1, HIDDEN), jnp.float32),
            w2=w((INTERMEDIATE, HIDDEN)), b2=w((1, HIDDEN), jnp.float32),
            ln2_g=jnp.ones((1, HIDDEN), jnp.float32),
            ln2_b=jnp.zeros((1, HIDDEN), jnp.float32),
        )
        if li in MOE_POSITION:
            lp.update(
                wr=w((HIDDEN, NUM_EXPERTS)), br=w((1, NUM_EXPERTS), jnp.float32),
                we=w((NUM_EXPERTS, HIDDEN, INTERMEDIATE)),
                be=w((NUM_EXPERTS, 1, INTERMEDIATE), jnp.float32),
                ws=w((NUM_SHARED, HIDDEN, INTERMEDIATE)),
                bs=w((NUM_SHARED, 1, INTERMEDIATE), jnp.float32),
            )
        else:
            lp.update(w1=w((HIDDEN, INTERMEDIATE)),
                      b1=w((1, INTERMEDIATE), jnp.float32))
        layers.append(lp)

    return dict(layers=layers,
                wp=w((HIDDEN, HIDDEN)), bp=w((1, HIDDEN), jnp.float32),
                wc=w((HIDDEN, NUM_LABELS)), bc=w((1, NUM_LABELS), jnp.float32))


# ---------------------------------------------------------------------------
# Pure-JAX reference mirroring the kernel math (bf16 matmul operands, q scaled
# before the bf16 cast, p cast to bf16) except for the approximate reciprocals.
# ---------------------------------------------------------------------------
def ref_forward(x, params):
    B, S, H = x.shape
    hd = H // NUM_HEADS
    scale = float(hd) ** -0.5
    h = x.astype(jnp.float32)
    for li in range(NUM_LAYERS):
        lp = params["layers"][li]
        q = _mm(h, lp["wq"]) + lp["bq"]
        k = _mm(h, lp["wk"]) + lp["bk"]
        v = _mm(h, lp["wv"]) + lp["bv"]
        ctx_heads = []
        for i in range(NUM_HEADS):
            qh = (q[..., i*hd:(i+1)*hd] * scale).astype(jnp.bfloat16)
            kh = k[..., i*hd:(i+1)*hd].astype(jnp.bfloat16)
            vh = v[..., i*hd:(i+1)*hd].astype(jnp.bfloat16)
            s = jnp.einsum("bqd,bkd->bqk", qh, kh,
                           preferred_element_type=jnp.float32)
            p = _softmax(s).astype(jnp.bfloat16)
            ctx_heads.append(jnp.einsum("bqk,bkd->bqd", p, vh,
                                        preferred_element_type=jnp.float32))
        ctx = jnp.concatenate(ctx_heads, axis=-1)
        attn = _mm(ctx, lp["wo"]) + lp["bo"]
        h = _layernorm(attn + h, lp["ln1_g"], lp["ln1_b"])
        if li in MOE_POSITION:
            logits = _mm(h, lp["wr"]) + lp["br"]
            probs = _softmax(logits)
            work = logits
            mask = jnp.zeros(logits.shape, jnp.bool_)
            for _ in range(TOP_K):
                m = jnp.max(work, axis=-1, keepdims=True)
                hit = work >= m
                mask = jnp.logical_or(mask, hit)
                work = jnp.where(hit, -1e30, work)
            wt = jnp.where(mask, probs, 0.0)
            wt = wt / jnp.sum(wt, axis=-1, keepdims=True)
            inter = jnp.zeros((B, S, INTERMEDIATE), jnp.float32)
            for e in range(NUM_EXPERTS):
                inter = inter + wt[..., e:e + 1] * (_mm(h, lp["we"][e]) + lp["be"][e])
            for se in range(NUM_SHARED):
                inter = inter + _mm(h, lp["ws"][se]) + lp["bs"][se]
            y = _mm(_gelu(inter), lp["w2"]) + lp["b2"]
        else:
            y = _mm(_gelu(_mm(h, lp["w1"]) + lp["b1"]), lp["w2"]) + lp["b2"]
        h = _layernorm(y + h, lp["ln2_g"], lp["ln2_b"])
    pooled = jnp.tanh(_mm(h[:, 0, :], params["wp"]) + params["bp"])
    return _mm(pooled, params["wc"]) + params["bc"]


if __name__ == "__main__":
    key = jax.random.PRNGKey(0)
    pkey, xkey = jax.random.split(key)
    params = init_params(pkey)

    B, S = 2, 8
    x = jax.random.normal(xkey, (B, S, HIDDEN), jnp.float32)   # encoder input embeddings

    out = moe_bert_forward(x, params)
    out = jax.block_until_ready(out)
    assert out.shape == (B, NUM_LABELS)

    ref = ref_forward(x, params)
    # Tolerance accounts for the kernel-only approximate-reciprocal softmax /
    # routing-weight denominators; all bf16 matmul casts are mirrored exactly.
    np.testing.assert_allclose(np.asarray(out), np.asarray(ref), rtol=2e-2, atol=2e-3)

    print("KERNEL_OK")
</pallas_src>

<mosaic_0001>
module attributes {stable_mosaic.version = 11 : i64} {
  func.func @_fused_kernel(%arg0: i32, %arg1: memref<1x8x32xf32, #tpu.memory_space<vmem>>, %arg2: memref<19x320xf32, #tpu.memory_space<vmem>>, %arg3: memref<32x96xbf16, #tpu.memory_space<vmem>>, %arg4: memref<32x32xbf16, #tpu.memory_space<vmem>>, %arg5: memref<32x64xbf16, #tpu.memory_space<vmem>>, %arg6: memref<64x32xbf16, #tpu.memory_space<vmem>>, %arg7: memref<32x96xbf16, #tpu.memory_space<vmem>>, %arg8: memref<32x32xbf16, #tpu.memory_space<vmem>>, %arg9: memref<32x4xbf16, #tpu.memory_space<vmem>>, %arg10: memref<32x320xbf16, #tpu.memory_space<vmem>>, %arg11: memref<64x32xbf16, #tpu.memory_space<vmem>>, %arg12: memref<32x32xbf16, #tpu.memory_space<vmem>>, %arg13: memref<32x2xbf16, #tpu.memory_space<vmem>>, %arg14: memref<1x1x2xf32, #tpu.memory_space<vmem>>) attributes {dimension_semantics = [#tpu.dimension_semantics<parallel>], iteration_bounds = array<i64: 2>, scalar_prefetch = 0 : i64, scratch_operands = 0 : i64, tpu.core_type = #tpu.core_type<tc>, window_params = [{transform_indices = @transform_0, window_bounds = array<i64: 1, 8, 32>}, {pipeline_mode = #tpu.pipeline_mode<synchronous>, transform_indices = @transform_1, window_bounds = array<i64: 19, 320>}, {pipeline_mode = #tpu.pipeline_mode<synchronous>, transform_indices = @transform_2, window_bounds = array<i64: 32, 96>}, {pipeline_mode = #tpu.pipeline_mode<synchronous>, transform_indices = @transform_3, window_bounds = array<i64: 32, 32>}, {pipeline_mode = #tpu.pipeline_mode<synchronous>, transform_indices = @transform_4, window_bounds = array<i64: 32, 64>}, {pipeline_mode = #tpu.pipeline_mode<synchronous>, transform_indices = @transform_5, window_bounds = array<i64: 64, 32>}, {pipeline_mode = #tpu.pipeline_mode<synchronous>, transform_indices = @transform_6, window_bounds = array<i64: 32, 96>}, {pipeline_mode = #tpu.pipeline_mode<synchronous>, transform_indices = @transform_7, window_bounds = array<i64: 32, 32>}, {pipeline_mode = #tpu.pipeline_mode<synchronous>, transform_indices = @transform_8, window_bounds = array<i64: 32, 4>}, {pipeline_mode = #tpu.pipeline_mode<synchronous>, transform_indices = @transform_9, window_bounds = array<i64: 32, 320>}, {pipeline_mode = #tpu.pipeline_mode<synchronous>, transform_indices = @transform_10, window_bounds = array<i64: 64, 32>}, {pipeline_mode = #tpu.pipeline_mode<synchronous>, transform_indices = @transform_11, window_bounds = array<i64: 32, 32>}, {pipeline_mode = #tpu.pipeline_mode<synchronous>, transform_indices = @transform_12, window_bounds = array<i64: 32, 2>}, {transform_indices = @transform_13, window_bounds = array<i64: 1, 1, 2>}]} {
    %c0 = arith.constant 0 : index
    %c0_0 = arith.constant 0 : index
    %c0_1 = arith.constant 0 : index
    %0 = vector.load %arg1[%c0, %c0_0, %c0_1] : memref<1x8x32xf32, #tpu.memory_space<vmem>>, vector<1x8x32xf32>
    %1 = vector.shape_cast %0 : vector<1x8x32xf32> to vector<8x32xf32>
    %c0_2 = arith.constant 0 : index
    %c0_3 = arith.constant 0 : index
    %2 = vector.load %arg2[%c0_2, %c0_3] : memref<19x320xf32, #tpu.memory_space<vmem>>, vector<1x96xf32>
    %c1 = arith.constant 1 : index
    %c0_4 = arith.constant 0 : index
    %3 = vector.load %arg2[%c1, %c0_4] : memref<19x320xf32, #tpu.memory_space<vmem>>, vector<1x32xf32>
    %c2 = arith.constant 2 : index
    %c0_5 = arith.constant 0 : index
    %4 = vector.load %arg2[%c2, %c0_5] : memref<19x320xf32, #tpu.memory_space<vmem>>, vector<1x32xf32>
    %c3 = arith.constant 3 : index
    %c0_6 = arith.constant 0 : index
    %5 = vector.load %arg2[%c3, %c0_6] : memref<19x320xf32, #tpu.memory_space<vmem>>, vector<1x32xf32>
    %6 = arith.truncf %1 : vector<8x32xf32> to vector<8x32xbf16>
    %c0_7 = arith.constant 0 : index
    %c0_8 = arith.constant 0 : index
    %7 = vector.load %arg3[%c0_7, %c0_8] : memref<32x96xbf16, #tpu.memory_space<vmem>>, vector<32x96xbf16>
    %cst = arith.constant dense<0.000000e+00> : vector<8x96xf32>
    %8 = tpu.matmul %6, %7, %cst {dimension_numbers = #tpu.dot_dimension_numbers<[1], [0], [0], [1], [0, 0, 1, 1], [], []>} : vector<8x32xbf16>, vector<32x96xbf16>, vector<8x96xf32> -> vector<8x96xf32>
    %9 = vector.broadcast %2 : vector<1x96xf32> to vector<8x96xf32>
    %10 = arith.addf %8, %9 : vector<8x96xf32>
    %11 = vector.extract_strided_slice %10 {offsets = [0, 0], sizes = [8, 8], strides = [1, 1]} : vector<8x96xf32> to vector<8x8xf32>
    %cst_9 = arith.constant 0.353553385 : f32
    %12 = vector.broadcast %cst_9 : f32 to vector<8x8xf32>
    %13 = arith.mulf %11, %12 : vector<8x8xf32>
    %14 = arith.truncf %13 : vector<8x8xf32> to vector<8x8xbf16>
    %15 = vector.extract_strided_slice %10 {offsets = [0, 32], sizes = [8, 8], strides = [1, 1]} : vector<8x96xf32> to vector<8x8xf32>
    %16 = arith.truncf %15 : vector<8x8xf32> to vector<8x8xbf16>
    %17 = vector.extract_strided_slice %10 {offsets = [0, 64], sizes = [8, 8], strides = [1, 1]} : vector<8x96xf32> to vector<8x8xf32>
    %18 = arith.truncf %17 : vector<8x8xf32> to vector<8x8xbf16>
    %cst_10 = arith.constant dense<0.000000e+00> : vector<8x8xf32>
    %19 = tpu.matmul %14, %16, %cst_10 {dimension_numbers = #tpu.dot_dimension_numbers<[1], [1], [0], [0], [0, 0, 1, 0], [], []>} : vector<8x8xbf16>, vector<8x8xbf16>, vector<8x8xf32> -> vector<8x8xf32>
    %cst_11 = arith.constant dense<0xFF800000> : vector<8xf32>
    %20 = vector.multi_reduction <maximumf>, %19, %cst_11 [1] : vector<8x8xf32> to vector<8xf32>
    %21 = vector.shape_cast %20 : vector<8xf32> to vector<8x1xf32>
    %22 = vector.broadcast %21 : vector<8x1xf32> to vector<8x8xf32>
    %23 = arith.subf %19, %22 : vector<8x8xf32>
    %24 = math.exp %23 : vector<8x8xf32>
    %cst_12 = arith.constant dense<0.000000e+00> : vector<8xf32>
    %25 = vector.multi_reduction <add>, %24, %cst_12 [1] : vector<8x8xf32> to vector<8xf32>
    %26 = vector.shape_cast %25 : vector<8xf32> to vector<8x1xf32>
    %27 = tpu.reciprocal %26 {approx = true} : vector<8x1xf32> -> vector<8x1xf32>
    %28 = vector.broadcast %27 : vector<8x1xf32> to vector<8x8xf32>
    %29 = arith.mulf %24, %28 : vector<8x8xf32>
    %30 = arith.truncf %29 : vector<8x8xf32> to vector<8x8xbf16>
    %cst_13 = arith.constant dense<0.000000e+00> : vector<8x8xf32>
    %31 = tpu.matmul %30, %18, %cst_13 {dimension_numbers = #tpu.dot_dimension_numbers<[1], [0], [0], [1], [0, 0, 1, 1], [], []>} : vector<8x8xbf16>, vector<8x8xbf16>, vector<8x8xf32> -> vector<8x8xf32>
    %32 = vector.extract_strided_slice %10 {offsets = [0, 8], sizes = [8, 8], strides = [1, 1]} : vector<8x96xf32> to vector<8x8xf32>
    %cst_14 = arith.constant 0.353553385 : f32
    %33 = vector.broadcast %cst_14 : f32 to vector<8x8xf32>
    %34 = arith.mulf %32, %33 : vector<8x8xf32>
    %35 = arith.truncf %34 : vector<8x8xf32> to vector<8x8xbf16>
    %36 = vector.extract_strided_slice %10 {offsets = [0, 40], sizes = [8, 8], strides = [1, 1]} : vector<8x96xf32> to vector<8x8xf32>
    %37 = arith.truncf %36 : vector<8x8xf32> to vector<8x8xbf16>
    %38 = vector.extract_strided_slice %10 {offsets = [0, 72], sizes = [8, 8], strides = [1, 1]} : vector<8x96xf32> to vector<8x8xf32>
    %39 = arith.truncf %38 : vector<8x8xf32> to vector<8x8xbf16>
    %cst_15 = arith.constant dense<0.000000e+00> : vector<8x8xf32>
    %40 = tpu.matmul %35, %37, %cst_15 {dimension_numbers = #tpu.dot_dimension_numbers<[1], [1], [0], [0], [0, 0, 1, 0], [], []>} : vector<8x8xbf16>, vector<8x8xbf16>, vector<8x8xf32> -> vector<8x8xf32>
    %cst_16 = arith.constant dense<0xFF800000> : vector<8xf32>
    %41 = vector.multi_reduction <maximumf>, %40, %cst_16 [1] : vector<8x8xf32> to vector<8xf32>
    %42 = vector.shape_cast %41 : vector<8xf32> to vector<8x1xf32>
    %43 = vector.broadcast %42 : vector<8x1xf32> to vector<8x8xf32>
    %44 = arith.subf %40, %43 : vector<8x8xf32>
    %45 = math.exp %44 : vector<8x8xf32>
    %cst_17 = arith.constant dense<0.000000e+00> : vector<8xf32>
    %46 = vector.multi_reduction <add>, %45, %cst_17 [1] : vector<8x8xf32> to vector<8xf32>
    %47 = vector.shape_cast %46 : vector<8xf32> to vector<8x1xf32>
    %48 = tpu.reciprocal %47 {approx = true} : vector<8x1xf32> -> vector<8x1xf32>
    %49 = vector.broadcast %48 : vector<8x1xf32> to vector<8x8xf32>
    %50 = arith.mulf %45, %49 : vector<8x8xf32>
    %51 = arith.truncf %50 : vector<8x8xf32> to vector<8x8xbf16>
    %cst_18 = arith.constant dense<0.000000e+00> : vector<8x8xf32>
    %52 = tpu.matmul %51, %39, %cst_18 {dimension_numbers = #tpu.dot_dimension_numbers<[1], [0], [0], [1], [0, 0, 1, 1], [], []>} : vector<8x8xbf16>, vector<8x8xbf16>, vector<8x8xf32> -> vector<8x8xf32>
    %53 = vector.extract_strided_slice %10 {offsets = [0, 16], sizes = [8, 8], strides = [1, 1]} : vector<8x96xf32> to vector<8x8xf32>
    %cst_19 = arith.constant 0.353553385 : f32
    %54 = vector.broadcast %cst_19 : f32 to vector<8x8xf32>
    %55 = arith.mulf %53, %54 : vector<8x8xf32>
    %56 = arith.truncf %55 : vector<8x8xf32> to vector<8x8xbf16>
    %57 = vector.extract_strided_slice %10 {offsets = [0, 48], sizes = [8, 8], strides = [1, 1]} : vector<8x96xf32> to vector<8x8xf32>
    %58 = arith.truncf %57 : vector<8x8xf32> to vector<8x8xbf16>
    %59 = vector.extract_strided_slice %10 {offsets = [0, 80], sizes = [8, 8], strides = [1, 1]} : vector<8x96xf32> to vector<8x8xf32>
    %60 = arith.truncf %59 : vector<8x8xf32> to vector<8x8xbf16>
    %cst_20 = arith.constant dense<0.000000e+00> : vector<8x8xf32>
    %61 = tpu.matmul %56, %58, %cst_20 {dimension_numbers = #tpu.dot_dimension_numbers<[1], [1], [0], [0], [0, 0, 1, 0], [], []>} : vector<8x8xbf16>, vector<8x8xbf16>, vector<8x8xf32> -> vector<8x8xf32>
    %cst_21 = arith.constant dense<0xFF800000> : vector<8xf32>
    %62 = vector.multi_reduction <maximumf>, %61, %cst_21 [1] : vector<8x8xf32> to vector<8xf32>
    %63 = vector.shape_cast %62 : vector<8xf32> to vector<8x1xf32>
    %64 = vector.broadcast %63 : vector<8x1xf32> to vector<8x8xf32>
    %65 = arith.subf %61, %64 : vector<8x8xf32>
    %66 = math.exp %65 : vector<8x8xf32>
    %cst_22 = arith.constant dense<0.000000e+00> : vector<8xf32>
    %67 = vector.multi_reduction <add>, %66, %cst_22 [1] : vector<8x8xf32> to vector<8xf32>
    %68 = vector.shape_cast %67 : vector<8xf32> to vector<8x1xf32>
    %69 = tpu.reciprocal %68 {approx = true} : vector<8x1xf32> -> vector<8x1xf32>
    %70 = vector.broadcast %69 : vector<8x1xf32> to vector<8x8xf32>
    %71 = arith.mulf %66, %70 : vector<8x8xf32>
    %72 = arith.truncf %71 : vector<8x8xf32> to vector<8x8xbf16>
    %cst_23 = arith.constant dense<0.000000e+00> : vector<8x8xf32>
    %73 = tpu.matmul %72, %60, %cst_23 {dimension_numbers = #tpu.dot_dimension_numbers<[1], [0], [0], [1], [0, 0, 1, 1], [], []>} : vector<8x8xbf16>, vector<8x8xbf16>, vector<8x8xf32> -> vector<8x8xf32>
    %74 = vector.extract_strided_slice %10 {offsets = [0, 24], sizes = [8, 8], strides = [1, 1]} : vector<8x96xf32> to vector<8x8xf32>
    %cst_24 = arith.constant 0.353553385 : f32
    %75 = vector.broadcast %cst_24 : f32 to vector<8x8xf32>
    %76 = arith.mulf %74, %75 : vector<8x8xf32>
    %77 = arith.truncf %76 : vector<8x8xf32> to vector<8x8xbf16>
    %78 = vector.extract_strided_slice %10 {offsets = [0, 56], sizes = [8, 8], strides = [1, 1]} : vector<8x96xf32> to vector<8x8xf32>
    %79 = arith.truncf %78 : vector<8x8xf32> to vector<8x8xbf16>
    %80 = vector.extract_strided_slice %10 {offsets = [0, 88], sizes = [8, 8], strides = [1, 1]} : vector<8x96xf32> to vector<8x8xf32>
    %81 = arith.truncf %80 : vector<8x8xf32> to vector<8x8xbf16>
    %cst_25 = arith.constant dense<0.000000e+00> : vector<8x8xf32>
    %82 = tpu.matmul %77, %79, %cst_25 {dimension_numbers = #tpu.dot_dimension_numbers<[1], [1], [0], [0], [0, 0, 1, 0], [], []>} : vector<8x8xbf16>, vector<8x8xbf16>, vector<8x8xf32> -> vector<8x8xf32>
    %cst_26 = arith.constant dense<0xFF800000> : vector<8xf32>
    %83 = vector.multi_reduction <maximumf>, %82, %cst_26 [1] : vector<8x8xf32> to vector<8xf32>
    %84 = vector.shape_cast %83 : vector<8xf32> to vector<8x1xf32>
    %85 = vector.broadcast %84 : vector<8x1xf32> to vector<8x8xf32>
    %86 = arith.subf %82, %85 : vector<8x8xf32>
    %87 = math.exp %86 : vector<8x8xf32>
    %cst_27 = arith.constant dense<0.000000e+00> : vector<8xf32>
    %88 = vector.multi_reduction <add>, %87, %cst_27 [1] : vector<8x8xf32> to vector<8xf32>
    %89 = vector.shape_cast %88 : vector<8xf32> to vector<8x1xf32>
    %90 = tpu.reciprocal %89 {approx = true} : vector<8x1xf32> -> vector<8x1xf32>
    %91 = vector.broadcast %90 : vector<8x1xf32> to vector<8x8xf32>
    %92 = arith.mulf %87, %91 : vector<8x8xf32>
    %93 = arith.truncf %92 : vector<8x8xf32> to vector<8x8xbf16>
    %cst_28 = arith.constant dense<0.000000e+00> : vector<8x8xf32>
    %94 = tpu.matmul %93, %81, %cst_28 {dimension_numbers = #tpu.dot_dimension_numbers<[1], [0], [0], [1], [0, 0, 1, 1], [], []>} : vector<8x8xbf16>, vector<8x8xbf16>, vector<8x8xf32> -> vector<8x8xf32>
    %95 = tpu.concatenate %31, %52, %73, %94 in 1 : vector<8x8xf32>, vector<8x8xf32>, vector<8x8xf32>, vector<8x8xf32> -> vector<8x32xf32>
    %c0_29 = arith.constant 0 : index
    %c0_30 = arith.constant 0 : index
    %96 = vector.load %arg4[%c0_29, %c0_30] : memref<32x32xbf16, #tpu.memory_space<vmem>>, vector<32x32xbf16>
    %97 = arith.truncf %95 : vector<8x32xf32> to vector<8x32xbf16>
    %cst_31 = arith.constant dense<0.000000e+00> : vector<8x32xf32>
    %98 = tpu.matmul %97, %96, %cst_31 {dimension_numbers = #tpu.dot_dimension_numbers<[1], [0], [0], [1], [0, 0, 1, 1], [], []>} : vector<8x32xbf16>, vector<32x32xbf16>, vector<8x32xf32> -> vector<8x32xf32>
    %99 = vector.broadcast %3 : vector<1x32xf32> to vector<8x32xf32>
    %100 = arith.addf %98, %99 : vector<8x32xf32>
    %101 = arith.addf %100, %1 : vector<8x32xf32>
    %cst_32 = arith.constant dense<0.000000e+00> : vector<8xf32>
    %102 = vector.multi_reduction <add>, %101, %cst_32 [1] : vector<8x32xf32> to vector<8xf32>
    %103 = vector.shape_cast %102 : vector<8xf32> to vector<8x1xf32>
    %cst_33 = arith.constant 3.200000e+01 : f32
    %104 = vector.broadcast %cst_33 : f32 to vector<8x1xf32>
    %105 = arith.divf %103, %104 : vector<8x1xf32>
    %106 = vector.broadcast %105 : vector<8x1xf32> to vector<8x32xf32>
    %107 = arith.subf %101, %106 : vector<8x32xf32>
    %108 = arith.mulf %107, %107 : vector<8x32xf32>
    %cst_34 = arith.constant dense<0.000000e+00> : vector<8xf32>
    %109 = vector.multi_reduction <add>, %108, %cst_34 [1] : vector<8x32xf32> to vector<8xf32>
    %110 = vector.shape_cast %109 : vector<8xf32> to vector<8x1xf32>
    %cst_35 = arith.constant 3.200000e+01 : f32
    %111 = vector.broadcast %cst_35 : f32 to vector<8x1xf32>
    %112 = arith.divf %110, %111 : vector<8x1xf32>
    %113 = vector.broadcast %105 : vector<8x1xf32> to vector<8x32xf32>
    %114 = arith.subf %101, %113 : vector<8x32xf32>
    %cst_36 = arith.constant 9.99999996E-13 : f32
    %115 = vector.broadcast %cst_36 : f32 to vector<8x1xf32>
    %116 = arith.addf %112, %115 : vector<8x1xf32>
    %117 = math.rsqrt %116 : vector<8x1xf32>
    %118 = vector.broadcast %117 : vector<8x1xf32> to vector<8x32xf32>
    %119 = arith.mulf %114, %118 : vector<8x32xf32>
    %120 = vector.broadcast %4 : vector<1x32xf32> to vector<8x32xf32>
    %121 = arith.mulf %119, %120 : vector<8x32xf32>
    %122 = vector.broadcast %5 : vector<1x32xf32> to vector<8x32xf32>
    %123 = arith.addf %121, %122 : vector<8x32xf32>
    %124 = arith.truncf %123 : vector<8x32xf32> to vector<8x32xbf16>
    %c4 = arith.constant 4 : index
    %c0_37 = arith.constant 0 : index
    %125 = vector.load %arg2[%c4, %c0_37] : memref<19x320xf32, #tpu.memory_space<vmem>>, vector<1x64xf32>
    %c5 = arith.constant 5 : index
    %c0_38 = arith.constant 0 : index
    %126 = vector.load %arg2[%c5, %c0_38] : memref<19x320xf32, #tpu.memory_space<vmem>>, vector<1x32xf32>
    %c6 = arith.constant 6 : index
    %c0_39 = arith.constant 0 : index
    %127 = vector.load %arg2[%c6, %c0_39] : memref<19x320xf32, #tpu.memory_space<vmem>>, vector<1x32xf32>
    %c7 = arith.constant 7 : index
    %c0_40 = arith.constant 0 : index
    %128 = vector.load %arg2[%c7, %c0_40] : memref<19x320xf32, #tpu.memory_space<vmem>>, vector<1x32xf32>
    %c0_41 = arith.constant 0 : index
    %c0_42 = arith.constant 0 : index
    %129 = vector.load %arg5[%c0_41, %c0_42] : memref<32x64xbf16, #tpu.memory_space<vmem>>, vector<32x64xbf16>
    %cst_43 = arith.constant dense<0.000000e+00> : vector<8x64xf32>
    %130 = tpu.matmul %124, %129, %cst_43 {dimension_numbers = #tpu.dot_dimension_numbers<[1], [0], [0], [1], [0, 0, 1, 1], [], []>} : vector<8x32xbf16>, vector<32x64xbf16>, vector<8x64xf32> -> vector<8x64xf32>
    %131 = vector.broadcast %125 : vector<1x64xf32> to vector<8x64xf32>
    %132 = arith.addf %130, %131 : vector<8x64xf32>
    %cst_44 = arith.constant 5.000000e-01 : f32
    %133 = vector.broadcast %cst_44 : f32 to vector<8x64xf32>
    %134 = arith.mulf %133, %132 : vector<8x64xf32>
    %cst_45 = arith.constant 4.471500e-02 : f32
    %135 = vector.broadcast %cst_45 : f32 to vector<8x64xf32>
    %136 = arith.mulf %135, %132 : vector<8x64xf32>
    %137 = arith.mulf %136, %132 : vector<8x64xf32>
    %138 = arith.mulf %137, %132 : vector<8x64xf32>
    %139 = arith.addf %132, %138 : vector<8x64xf32>
    %cst_46 = arith.constant 0.797884583 : f32
    %140 = vector.broadcast %cst_46 : f32 to vector<8x64xf32>
    %141 = arith.mulf %140, %139 : vector<8x64xf32>
    %142 = math.tanh %141 : vector<8x64xf32>
    %cst_47 = arith.constant 1.000000e+00 : f32
    %143 = vector.broadcast %cst_47 : f32 to vector<8x64xf32>
    %144 = arith.addf %143, %142 : vector<8x64xf32>
    %145 = arith.mulf %134, %144 : vector<8x64xf32>
    %c0_48 = arith.constant 0 : index
    %c0_49 = arith.constant 0 : index
    %146 = vector.load %arg6[%c0_48, %c0_49] : memref<64x32xbf16, #tpu.memory_space<vmem>>, vector<64x32xbf16>
    %147 = arith.truncf %145 : vector<8x64xf32> to vector<8x64xbf16>
    %cst_50 = arith.constant dense<0.000000e+00> : vector<8x32xf32>
    %148 = tpu.matmul %147, %146, %cst_50 {dimension_numbers = #tpu.dot_dimension_numbers<[1], [0], [0], [1], [0, 0, 1, 1], [], []>} : vector<8x64xbf16>, vector<64x32xbf16>, vector<8x32xf32> -> vector<8x32xf32>
    %149 = vector.broadcast %126 : vector<1x32xf32> to vector<8x32xf32>
    %150 = arith.addf %148, %149 : vector<8x32xf32>
    %151 = arith.addf %150, %123 : vector<8x32xf32>
    %cst_51 = arith.constant dense<0.000000e+00> : vector<8xf32>
    %152 = vector.multi_reduction <add>, %151, %cst_51 [1] : vector<8x32xf32> to vector<8xf32>
    %153 = vector.shape_cast %152 : vector<8xf32> to vector<8x1xf32>
    %cst_52 = arith.constant 3.200000e+01 : f32
    %154 = vector.broadcast %cst_52 : f32 to vector<8x1xf32>
    %155 = arith.divf %153, %154 : vector<8x1xf32>
    %156 = vector.broadcast %155 : vector<8x1xf32> to vector<8x32xf32>
    %157 = arith.subf %151, %156 : vector<8x32xf32>
    %158 = arith.mulf %157, %157 : vector<8x32xf32>
    %cst_53 = arith.constant dense<0.000000e+00> : vector<8xf32>
    %159 = vector.multi_reduction <add>, %158, %cst_53 [1] : vector<8x32xf32> to vector<8xf32>
    %160 = vector.shape_cast %159 : vector<8xf32> to vector<8x1xf32>
    %cst_54 = arith.constant 3.200000e+01 : f32
    %161 = vector.broadcast %cst_54 : f32 to vector<8x1xf32>
    %162 = arith.divf %160, %161 : vector<8x1xf32>
    %163 = vector.broadcast %155 : vector<8x1xf32> to vector<8x32xf32>
    %164 = arith.subf %151, %163 : vector<8x32xf32>
    %cst_55 = arith.constant 9.99999996E-13 : f32
    %165 = vector.broadcast %cst_55 : f32 to vector<8x1xf32>
    %166 = arith.addf %162, %165 : vector<8x1xf32>
    %167 = math.rsqrt %166 : vector<8x1xf32>
    %168 = vector.broadcast %167 : vector<8x1xf32> to vector<8x32xf32>
    %169 = arith.mulf %164, %168 : vector<8x32xf32>
    %170 = vector.broadcast %127 : vector<1x32xf32> to vector<8x32xf32>
    %171 = arith.mulf %169, %170 : vector<8x32xf32>
    %172 = vector.broadcast %128 : vector<1x32xf32> to vector<8x32xf32>
    %173 = arith.addf %171, %172 : vector<8x32xf32>
    %c8 = arith.constant 8 : index
    %c0_56 = arith.constant 0 : index
    %174 = vector.load %arg2[%c8, %c0_56] : memref<19x320xf32, #tpu.memory_space<vmem>>, vector<1x96xf32>
    %c9 = arith.constant 9 : index
    %c0_57 = arith.constant 0 : index
    %175 = vector.load %arg2[%c9, %c0_57] : memref<19x320xf32, #tpu.memory_space<vmem>>, vector<1x32xf32>
    %c10 = arith.constant 10 : index
    %c0_58 = arith.constant 0 : index
    %176 = vector.load %arg2[%c10, %c0_58] : memref<19x320xf32, #tpu.memory_space<vmem>>, vector<1x32xf32>
    %c11 = arith.constant 11 : index
    %c0_59 = arith.constant 0 : index
    %177 = vector.load %arg2[%c11, %c0_59] : memref<19x320xf32, #tpu.memory_space<vmem>>, vector<1x32xf32>
    %178 = arith.truncf %173 : vector<8x32xf32> to vector<8x32xbf16>
    %c0_60 = arith.constant 0 : index
    %c0_61 = arith.constant 0 : index
    %179 = vector.load %arg7[%c0_60, %c0_61] : memref<32x96xbf16, #tpu.memory_space<vmem>>, vector<32x96xbf16>
    %cst_62 = arith.constant dense<0.000000e+00> : vector<8x96xf32>
    %180 = tpu.matmul %178, %179, %cst_62 {dimension_numbers = #tpu.dot_dimension_numbers<[1], [0], [0], [1], [0, 0, 1, 1], [], []>} : vector<8x32xbf16>, vector<32x96xbf16>, vector<8x96xf32> -> vector<8x96xf32>
    %181 = vector.broadcast %174 : vector<1x96xf32> to vector<8x96xf32>
    %182 = arith.addf %180, %181 : vector<8x96xf32>
    %183 = vector.extract_strided_slice %182 {offsets = [0, 0], sizes = [8, 8], strides = [1, 1]} : vector<8x96xf32> to vector<8x8xf32>
    %cst_63 = arith.constant 0.353553385 : f32
    %184 = vector.broadcast %cst_63 : f32 to vector<8x8xf32>
    %185 = arith.mulf %183, %184 : vector<8x8xf32>
    %186 = arith.truncf %185 : vector<8x8xf32> to vector<8x8xbf16>
    %187 = vector.extract_strided_slice %182 {offsets = [0, 32], sizes = [8, 8], strides = [1, 1]} : vector<8x96xf32> to vector<8x8xf32>
    %188 = arith.truncf %187 : vector<8x8xf32> to vector<8x8xbf16>
    %189 = vector.extract_strided_slice %182 {offsets = [0, 64], sizes = [8, 8], strides = [1, 1]} : vector<8x96xf32> to vector<8x8xf32>
    %190 = arith.truncf %189 : vector<8x8xf32> to vector<8x8xbf16>
    %cst_64 = arith.constant dense<0.000000e+00> : vector<8x8xf32>
    %191 = tpu.matmul %186, %188, %cst_64 {dimension_numbers = #tpu.dot_dimension_numbers<[1], [1], [0], [0], [0, 0, 1, 0], [], []>} : vector<8x8xbf16>, vector<8x8xbf16>, vector<8x8xf32> -> vector<8x8xf32>
    %cst_65 = arith.constant dense<0xFF800000> : vector<8xf32>
    %192 = vector.multi_reduction <maximumf>, %191, %cst_65 [1] : vector<8x8xf32> to vector<8xf32>
    %193 = vector.shape_cast %192 : vector<8xf32> to vector<8x1xf32>
    %194 = vector.broadcast %193 : vector<8x1xf32> to vector<8x8xf32>
    %195 = arith.subf %191, %194 : vector<8x8xf32>
    %196 = math.exp %195 : vector<8x8xf32>
    %cst_66 = arith.constant dense<0.000000e+00> : vector<8xf32>
    %197 = vector.multi_reduction <add>, %196, %cst_66 [1] : vector<8x8xf32> to vector<8xf32>
    %198 = vector.shape_cast %197 : vector<8xf32> to vector<8x1xf32>
    %199 = tpu.reciprocal %198 {approx = true} : vector<8x1xf32> -> vector<8x1xf32>
    %200 = vector.broadcast %199 : vector<8x1xf32> to vector<8x8xf32>
    %201 = arith.mulf %196, %200 : vector<8x8xf32>
    %202 = arith.truncf %201 : vector<8x8xf32> to vector<8x8xbf16>
    %cst_67 = arith.constant dense<0.000000e+00> : vector<8x8xf32>
    %203 = tpu.matmul %202, %190, %cst_67 {dimension_numbers = #tpu.dot_dimension_numbers<[1], [0], [0], [1], [0, 0, 1, 1], [], []>} : vector<8x8xbf16>, vector<8x8xbf16>, vector<8x8xf32> -> vector<8x8xf32>
    %204 = vector.extract_strided_slice %182 {offsets = [0, 8], sizes = [8, 8], strides = [1, 1]} : vector<8x96xf32> to vector<8x8xf32>
    %cst_68 = arith.constant 0.353553385 : f32
    %205 = vector.broadcast %cst_68 : f32 to vector<8x8xf32>
    %206 = arith.mulf %204, %205 : vector<8x8xf32>
    %207 = arith.truncf %206 : vector<8x8xf32> to vector<8x8xbf16>
    %208 = vector.extract_strided_slice %182 {offsets = [0, 40], sizes = [8, 8], strides = [1, 1]} : vector<8x96xf32> to vector<8x8xf32>
    %209 = arith.truncf %208 : vector<8x8xf32> to vector<8x8xbf16>
    %210 = vector.extract_strided_slice %182 {offsets = [0, 72], sizes = [8, 8], strides = [1, 1]} : vector<8x96xf32> to vector<8x8xf32>
    %211 = arith.truncf %210 : vector<8x8xf32> to vector<8x8xbf16>
    %cst_69 = arith.constant dense<0.000000e+00> : vector<8x8xf32>
    %212 = tpu.matmul %207, %209, %cst_69 {dimension_numbers = #tpu.dot_dimension_numbers<[1], [1], [0], [0], [0, 0, 1, 0], [], []>} : vector<8x8xbf16>, vector<8x8xbf16>, vector<8x8xf32> -> vector<8x8xf32>
    %cst_70 = arith.constant dense<0xFF800000> : vector<8xf32>
    %213 = vector.multi_reduction <maximumf>, %212, %cst_70 [1] : vector<8x8xf32> to vector<8xf32>
    %214 = vector.shape_cast %213 : vector<8xf32> to vector<8x1xf32>
    %215 = vector.broadcast %214 : vector<8x1xf32> to vector<8x8xf32>
    %216 = arith.subf %212, %215 : vector<8x8xf32>
    %217 = math.exp %216 : vector<8x8xf32>
    %cst_71 = arith.constant dense<0.000000e+00> : vector<8xf32>
    %218 = vector.multi_reduction <add>, %217, %cst_71 [1] : vector<8x8xf32> to vector<8xf32>
    %219 = vector.shape_cast %218 : vector<8xf32> to vector<8x1xf32>
    %220 = tpu.reciprocal %219 {approx = true} : vector<8x1xf32> -> vector<8x1xf32>
    %221 = vector.broadcast %220 : vector<8x1xf32> to vector<8x8xf32>
    %222 = arith.mulf %217, %221 : vector<8x8xf32>
    %223 = arith.truncf %222 : vector<8x8xf32> to vector<8x8xbf16>
    %cst_72 = arith.constant dense<0.000000e+00> : vector<8x8xf32>
    %224 = tpu.matmul %223, %211, %cst_72 {dimension_numbers = #tpu.dot_dimension_numbers<[1], [0], [0], [1], [0, 0, 1, 1], [], []>} : vector<8x8xbf16>, vector<8x8xbf16>, vector<8x8xf32> -> vector<8x8xf32>
    %225 = vector.extract_strided_slice %182 {offsets = [0, 16], sizes = [8, 8], strides = [1, 1]} : vector<8x96xf32> to vector<8x8xf32>
    %cst_73 = arith.constant 0.353553385 : f32
    %226 = vector.broadcast %cst_73 : f32 to vector<8x8xf32>
    %227 = arith.mulf %225, %226 : vector<8x8xf32>
    %228 = arith.truncf %227 : vector<8x8xf32> to vector<8x8xbf16>
    %229 = vector.extract_strided_slice %182 {offsets = [0, 48], sizes = [8, 8], strides = [1, 1]} : vector<8x96xf32> to vector<8x8xf32>
    %230 = arith.truncf %229 : vector<8x8xf32> to vector<8x8xbf16>
    %231 = vector.extract_strided_slice %182 {offsets = [0, 80], sizes = [8, 8], strides = [1, 1]} : vector<8x96xf32> to vector<8x8xf32>
    %232 = arith.truncf %231 : vector<8x8xf32> to vector<8x8xbf16>
    %cst_74 = arith.constant dense<0.000000e+00> : vector<8x8xf32>
    %233 = tpu.matmul %228, %230, %cst_74 {dimension_numbers = #tpu.dot_dimension_numbers<[1], [1], [0], [0], [0, 0, 1, 0], [], []>} : vector<8x8xbf16>, vector<8x8xbf16>, vector<8x8xf32> -> vector<8x8xf32>
    %cst_75 = arith.constant dense<0xFF800000> : vector<8xf32>
    %234 = vector.multi_reduction <maximumf>, %233, %cst_75 [1] : vector<8x8xf32> to vector<8xf32>
    %235 = vector.shape_cast %234 : vector<8xf32> to vector<8x1xf32>
    %236 = vector.broadcast %235 : vector<8x1xf32> to vector<8x8xf32>
    %237 = arith.subf %233, %236 : vector<8x8xf32>
    %238 = math.exp %237 : vector<8x8xf32>
    %cst_76 = arith.constant dense<0.000000e+00> : vector<8xf32>
    %239 = vector.multi_reduction <add>, %238, %cst_76 [1] : vector<8x8xf32> to vector<8xf32>
    %240 = vector.shape_cast %239 : vector<8xf32> to vector<8x1xf32>
    %241 = tpu.reciprocal %240 {approx = true} : vector<8x1xf32> -> vector<8x1xf32>
    %242 = vector.broadcast %241 : vector<8x1xf32> to vector<8x8xf32>
    %243 = arith.mulf %238, %242 : vector<8x8xf32>
    %244 = arith.truncf %243 : vector<8x8xf32> to vector<8x8xbf16>
    %cst_77 = arith.constant dense<0.000000e+00> : vector<8x8xf32>
    %245 = tpu.matmul %244, %232, %cst_77 {dimension_numbers = #tpu.dot_dimension_numbers<[1], [0], [0], [1], [0, 0, 1, 1], [], []>} : vector<8x8xbf16>, vector<8x8xbf16>, vector<8x8xf32> -> vector<8x8xf32>
    %246 = vector.extract_strided_slice %182 {offsets = [0, 24], sizes = [8, 8], strides = [1, 1]} : vector<8x96xf32> to vector<8x8xf32>
    %cst_78 = arith.constant 0.353553385 : f32
    %247 = vector.broadcast %cst_78 : f32 to vector<8x8xf32>
    %248 = arith.mulf %246, %247 : vector<8x8xf32>
    %249 = arith.truncf %248 : vector<8x8xf32> to vector<8x8xbf16>
    %250 = vector.extract_strided_slice %182 {offsets = [0, 56], sizes = [8, 8], strides = [1, 1]} : vector<8x96xf32> to vector<8x8xf32>
    %251 = arith.truncf %250 : vector<8x8xf32> to vector<8x8xbf16>
    %252 = vector.extract_strided_slice %182 {offsets = [0, 88], sizes = [8, 8], strides = [1, 1]} : vector<8x96xf32> to vector<8x8xf32>
    %253 = arith.truncf %252 : vector<8x8xf32> to vector<8x8xbf16>
    %cst_79 = arith.constant dense<0.000000e+00> : vector<8x8xf32>
    %254 = tpu.matmul %249, %251, %cst_79 {dimension_numbers = #tpu.dot_dimension_numbers<[1], [1], [0], [0], [0, 0, 1, 0], [], []>} : vector<8x8xbf16>, vector<8x8xbf16>, vector<8x8xf32> -> vector<8x8xf32>
    %cst_80 = arith.constant dense<0xFF800000> : vector<8xf32>
    %255 = vector.multi_reduction <maximumf>, %254, %cst_80 [1] : vector<8x8xf32> to vector<8xf32>
    %256 = vector.shape_cast %255 : vector<8xf32> to vector<8x1xf32>
    %257 = vector.broadcast %256 : vector<8x1xf32> to vector<8x8xf32>
    %258 = arith.subf %254, %257 : vector<8x8xf32>
    %259 = math.exp %258 : vector<8x8xf32>
    %cst_81 = arith.constant dense<0.000000e+00> : vector<8xf32>
    %260 = vector.multi_reduction <add>, %259, %cst_81 [1] : vector<8x8xf32> to vector<8xf32>
    %261 = vector.shape_cast %260 : vector<8xf32> to vector<8x1xf32>
    %262 = tpu.reciprocal %261 {approx = true} : vector<8x1xf32> -> vector<8x1xf32>
    %263 = vector.broadcast %262 : vector<8x1xf32> to vector<8x8xf32>
    %264 = arith.mulf %259, %263 : vector<8x8xf32>
    %265 = arith.truncf %264 : vector<8x8xf32> to vector<8x8xbf16>
    %cst_82 = arith.constant dense<0.000000e+00> : vector<8x8xf32>
    %266 = tpu.matmul %265, %253, %cst_82 {dimension_numbers = #tpu.dot_dimension_numbers<[1], [0], [0], [1], [0, 0, 1, 1], [], []>} : vector<8x8xbf16>, vector<8x8xbf16>, vector<8x8xf32> -> vector<8x8xf32>
    %267 = tpu.concatenate %203, %224, %245, %266 in 1 : vector<8x8xf32>, vector<8x8xf32>, vector<8x8xf32>, vector<8x8xf32> -> vector<8x32xf32>
    %c0_83 = arith.constant 0 : index
    %c0_84 = arith.constant 0 : index
    %268 = vector.load %arg8[%c0_83, %c0_84] : memref<32x32xbf16, #tpu.memory_space<vmem>>, vector<32x32xbf16>
    %269 = arith.truncf %267 : vector<8x32xf32> to vector<8x32xbf16>
    %cst_85 = arith.constant dense<0.000000e+00> : vector<8x32xf32>
    %270 = tpu.matmul %269, %268, %cst_85 {dimension_numbers = #tpu.dot_dimension_numbers<[1], [0], [0], [1], [0, 0, 1, 1], [], []>} : vector<8x32xbf16>, vector<32x32xbf16>, vector<8x32xf32> -> vector<8x32xf32>
    %271 = vector.broadcast %175 : vector<1x32xf32> to vector<8x32xf32>
    %272 = arith.addf %270, %271 : vector<8x32xf32>
    %273 = arith.addf %272, %173 : vector<8x32xf32>
    %cst_86 = arith.constant dense<0.000000e+00> : vector<8xf32>
    %274 = vector.multi_reduction <add>, %273, %cst_86 [1] : vector<8x32xf32> to vector<8xf32>
    %275 = vector.shape_cast %274 : vector<8xf32> to vector<8x1xf32>
    %cst_87 = arith.constant 3.200000e+01 : f32
    %276 = vector.broadcast %cst_87 : f32 to vector<8x1xf32>
    %277 = arith.divf %275, %276 : vector<8x1xf32>
    %278 = vector.broadcast %277 : vector<8x1xf32> to vector<8x32xf32>
    %279 = arith.subf %273, %278 : vector<8x32xf32>
    %280 = arith.mulf %279, %279 : vector<8x32xf32>
    %cst_88 = arith.constant dense<0.000000e+00> : vector<8xf32>
    %281 = vector.multi_reduction <add>, %280, %cst_88 [1] : vector<8x32xf32> to vector<8xf32>
    %282 = vector.shape_cast %281 : vector<8xf32> to vector<8x1xf32>
    %cst_89 = arith.constant 3.200000e+01 : f32
    %283 = vector.broadcast %cst_89 : f32 to vector<8x1xf32>
    %284 = arith.divf %282, %283 : vector<8x1xf32>
    %285 = vector.broadcast %277 : vector<8x1xf32> to vector<8x32xf32>
    %286 = arith.subf %273, %285 : vector<8x32xf32>
    %cst_90 = arith.constant 9.99999996E-13 : f32
    %287 = vector.broadcast %cst_90 : f32 to vector<8x1xf32>
    %288 = arith.addf %284, %287 : vector<8x1xf32>
    %289 = math.rsqrt %288 : vector<8x1xf32>
    %290 = vector.broadcast %289 : vector<8x1xf32> to vector<8x32xf32>
    %291 = arith.mulf %286, %290 : vector<8x32xf32>
    %292 = vector.broadcast %176 : vector<1x32xf32> to vector<8x32xf32>
    %293 = arith.mulf %291, %292 : vector<8x32xf32>
    %294 = vector.broadcast %177 : vector<1x32xf32> to vector<8x32xf32>
    %295 = arith.addf %293, %294 : vector<8x32xf32>
    %296 = arith.truncf %295 : vector<8x32xf32> to vector<8x32xbf16>
    %c12 = arith.constant 12 : index
    %c0_91 = arith.constant 0 : index
    %297 = vector.load %arg2[%c12, %c0_91] : memref<19x320xf32, #tpu.memory_space<vmem>>, vector<1x4xf32>
    %c13 = arith.constant 13 : index
    %c0_92 = arith.constant 0 : index
    %298 = vector.load %arg2[%c13, %c0_92] : memref<19x320xf32, #tpu.memory_space<vmem>>, vector<1x320xf32>
    %c14 = arith.constant 14 : index
    %c0_93 = arith.constant 0 : index
    %299 = vector.load %arg2[%c14, %c0_93] : memref<19x320xf32, #tpu.memory_space<vmem>>, vector<1x32xf32>
    %c15 = arith.constant 15 : index
    %c0_94 = arith.constant 0 : index
    %300 = vector.load %arg2[%c15, %c0_94] : memref<19x320xf32, #tpu.memory_space<vmem>>, vector<1x32xf32>
    %c16 = arith.constant 16 : index
    %c0_95 = arith.constant 0 : index
    %301 = vector.load %arg2[%c16, %c0_95] : memref<19x320xf32, #tpu.memory_space<vmem>>, vector<1x32xf32>
    %c0_96 = arith.constant 0 : index
    %c0_97 = arith.constant 0 : index
    %302 = vector.load %arg9[%c0_96, %c0_97] : memref<32x4xbf16, #tpu.memory_space<vmem>>, vector<32x4xbf16>
    %cst_98 = arith.constant dense<0.000000e+00> : vector<8x4xf32>
    %303 = tpu.matmul %296, %302, %cst_98 {dimension_numbers = #tpu.dot_dimension_numbers<[1], [0], [0], [1], [0, 0, 1, 1], [], []>} : vector<8x32xbf16>, vector<32x4xbf16>, vector<8x4xf32> -> vector<8x4xf32>
    %304 = vector.broadcast %297 : vector<1x4xf32> to vector<8x4xf32>
    %305 = arith.addf %303, %304 : vector<8x4xf32>
    %cst_99 = arith.constant dense<0xFF800000> : vector<8xf32>
    %306 = vector.multi_reduction <maximumf>, %305, %cst_99 [1] : vector<8x4xf32> to vector<8xf32>
    %307 = vector.shape_cast %306 : vector<8xf32> to vector<8x1xf32>
    %308 = vector.broadcast %307 : vector<8x1xf32> to vector<8x4xf32>
    %309 = arith.subf %305, %308 : vector<8x4xf32>
    %310 = math.exp %309 : vector<8x4xf32>
    %cst_100 = arith.constant dense<0.000000e+00> : vector<8xf32>
    %311 = vector.multi_reduction <add>, %310, %cst_100 [1] : vector<8x4xf32> to vector<8xf32>
    %312 = vector.shape_cast %311 : vector<8xf32> to vector<8x1xf32>
    %313 = tpu.reciprocal %312 {approx = true} : vector<8x1xf32> -> vector<8x1xf32>
    %314 = vector.broadcast %313 : vector<8x1xf32> to vector<8x4xf32>
    %315 = arith.mulf %310, %314 : vector<8x4xf32>
    %false = arith.constant false
    %316 = vector.broadcast %false : i1 to vector<8x4xi1>
    %cst_101 = arith.constant dense<0xFF800000> : vector<8xf32>
    %317 = vector.multi_reduction <maximumf>, %305, %cst_101 [1] : vector<8x4xf32> to vector<8xf32>
    %318 = vector.shape_cast %317 : vector<8xf32> to vector<8x1xf32>
    %319 = vector.broadcast %318 : vector<8x1xf32> to vector<8x4xf32>
    %320 = arith.cmpf oge, %305, %319 : vector<8x4xf32>
    %321 = arith.ori %316, %320 : vector<8x4xi1>
    %cst_102 = arith.constant -1.000000e+30 : f32
    %322 = vector.broadcast %cst_102 : f32 to vector<8x4xf32>
    %323 = arith.select %320, %322, %305 : vector<8x4xi1>, vector<8x4xf32>
    %cst_103 = arith.constant dense<0xFF800000> : vector<8xf32>
    %324 = vector.multi_reduction <maximumf>, %323, %cst_103 [1] : vector<8x4xf32> to vector<8xf32>
    %325 = vector.shape_cast %324 : vector<8xf32> to vector<8x1xf32>
    %326 = vector.broadcast %325 : vector<8x1xf32> to vector<8x4xf32>
    %327 = arith.cmpf oge, %323, %326 : vector<8x4xf32>
    %328 = arith.ori %321, %327 : vector<8x4xi1>
    %cst_104 = arith.constant 0.000000e+00 : f32
    %329 = vector.broadcast %cst_104 : f32 to vector<8x4xf32>
    %330 = arith.select %328, %315, %329 : vector<8x4xi1>, vector<8x4xf32>
    %cst_105 = arith.constant dense<0.000000e+00> : vector<8xf32>
    %331 = vector.multi_reduction <add>, %330, %cst_105 [1] : vector<8x4xf32> to vector<8xf32>
    %332 = vector.shape_cast %331 : vector<8xf32> to vector<8x1xf32>
    %333 = tpu.reciprocal %332 {approx = true} : vector<8x1xf32> -> vector<8x1xf32>
    %334 = vector.broadcast %333 : vector<8x1xf32> to vector<8x4xf32>
    %335 = arith.mulf %330, %334 : vector<8x4xf32>
    %c0_106 = arith.constant 0 : index
    %c0_107 = arith.constant 0 : index
    %336 = vector.load %arg10[%c0_106, %c0_107] : memref<32x320xbf16, #tpu.memory_space<vmem>>, vector<32x320xbf16>
    %cst_108 = arith.constant dense<0.000000e+00> : vector<8x320xf32>
    %337 = tpu.matmul %296, %336, %cst_108 {dimension_numbers = #tpu.dot_dimension_numbers<[1], [0], [0], [1], [0, 0, 1, 1], [], []>} : vector<8x32xbf16>, vector<32x320xbf16>, vector<8x320xf32> -> vector<8x320xf32>
    %338 = vector.broadcast %298 : vector<1x320xf32> to vector<8x320xf32>
    %339 = arith.addf %337, %338 : vector<8x320xf32>
    %cst_109 = arith.constant 0.000000e+00 : f32
    %340 = vector.broadcast %cst_109 : f32 to vector<8x64xf32>
    %341 = vector.extract_strided_slice %335 {offsets = [0, 0], sizes = [8, 1], strides = [1, 1]} : vector<8x4xf32> to vector<8x1xf32>
    %342 = vector.extract_strided_slice %339 {offsets = [0, 0], sizes = [8, 64], strides = [1, 1]} : vector<8x320xf32> to vector<8x64xf32>
    %343 = vector.broadcast %341 : vector<8x1xf32> to vector<8x64xf32>
    %344 = arith.mulf %343, %342 : vector<8x64xf32>
    %345 = arith.addf %340, %344 : vector<8x64xf32>
    %346 = vector.extract_strided_slice %335 {offsets = [0, 1], sizes = [8, 1], strides = [1, 1]} : vector<8x4xf32> to vector<8x1xf32>
    %347 = vector.extract_strided_slice %339 {offsets = [0, 64], sizes = [8, 64], strides = [1, 1]} : vector<8x320xf32> to vector<8x64xf32>
    %348 = vector.broadcast %346 : vector<8x1xf32> to vector<8x64xf32>
    %349 = arith.mulf %348, %347 : vector<8x64xf32>
    %350 = arith.addf %345, %349 : vector<8x64xf32>
    %351 = vector.extract_strided_slice %335 {offsets = [0, 2], sizes = [8, 1], strides = [1, 1]} : vector<8x4xf32> to vector<8x1xf32>
    %352 = vector.extract_strided_slice %339 {offsets = [0, 128], sizes = [8, 64], strides = [1, 1]} : vector<8x320xf32> to vector<8x64xf32>
    %353 = vector.broadcast %351 : vector<8x1xf32> to vector<8x64xf32>
    %354 = arith.mulf %353, %352 : vector<8x64xf32>
    %355 = arith.addf %350, %354 : vector<8x64xf32>
    %356 = vector.extract_strided_slice %335 {offsets = [0, 3], sizes = [8, 1], strides = [1, 1]} : vector<8x4xf32> to vector<8x1xf32>
    %357 = vector.extract_strided_slice %339 {offsets = [0, 192], sizes = [8, 64], strides = [1, 1]} : vector<8x320xf32> to vector<8x64xf32>
    %358 = vector.broadcast %356 : vector<8x1xf32> to vector<8x64xf32>
    %359 = arith.mulf %358, %357 : vector<8x64xf32>
    %360 = arith.addf %355, %359 : vector<8x64xf32>
    %361 = vector.extract_strided_slice %339 {offsets = [0, 256], sizes = [8, 64], strides = [1, 1]} : vector<8x320xf32> to vector<8x64xf32>
    %362 = arith.addf %360, %361 : vector<8x64xf32>
    %cst_110 = arith.constant 5.000000e-01 : f32
    %363 = vector.broadcast %cst_110 : f32 to vector<8x64xf32>
    %364 = arith.mulf %363, %362 : vector<8x64xf32>
    %cst_111 = arith.constant 4.471500e-02 : f32
    %365 = vector.broadcast %cst_111 : f32 to vector<8x64xf32>
    %366 = arith.mulf %365, %362 : vector<8x64xf32>
    %367 = arith.mulf %366, %362 : vector<8x64xf32>
    %368 = arith.mulf %367, %362 : vector<8x64xf32>
    %369 = arith.addf %362, %368 : vector<8x64xf32>
    %cst_112 = arith.constant 0.797884583 : f32
    %370 = vector.broadcast %cst_112 : f32 to vector<8x64xf32>
    %371 = arith.mulf %370, %369 : vector<8x64xf32>
    %372 = math.tanh %371 : vector<8x64xf32>
    %cst_113 = arith.constant 1.000000e+00 : f32
    %373 = vector.broadcast %cst_113 : f32 to vector<8x64xf32>
    %374 = arith.addf %373, %372 : vector<8x64xf32>
    %375 = arith.mulf %364, %374 : vector<8x64xf32>
    %c0_114 = arith.constant 0 : index
    %c0_115 = arith.constant 0 : index
    %376 = vector.load %arg11[%c0_114, %c0_115] : memref<64x32xbf16, #tpu.memory_space<vmem>>, vector<64x32xbf16>
    %377 = arith.truncf %375 : vector<8x64xf32> to vector<8x64xbf16>
    %cst_116 = arith.constant dense<0.000000e+00> : vector<8x32xf32>
    %378 = tpu.matmul %377, %376, %cst_116 {dimension_numbers = #tpu.dot_dimension_numbers<[1], [0], [0], [1], [0, 0, 1, 1], [], []>} : vector<8x64xbf16>, vector<64x32xbf16>, vector<8x32xf32> -> vector<8x32xf32>
    %379 = vector.broadcast %299 : vector<1x32xf32> to vector<8x32xf32>
    %380 = arith.addf %378, %379 : vector<8x32xf32>
    %381 = arith.addf %380, %295 : vector<8x32xf32>
    %cst_117 = arith.constant dense<0.000000e+00> : vector<8xf32>
    %382 = vector.multi_reduction <add>, %381, %cst_117 [1] : vector<8x32xf32> to vector<8xf32>
    %383 = vector.shape_cast %382 : vector<8xf32> to vector<8x1xf32>
    %cst_118 = arith.constant 3.200000e+01 : f32
    %384 = vector.broadcast %cst_118 : f32 to vector<8x1xf32>
    %385 = arith.divf %383, %384 : vector<8x1xf32>
    %386 = vector.broadcast %385 : vector<8x1xf32> to vector<8x32xf32>
    %387 = arith.subf %381, %386 : vector<8x32xf32>
    %388 = arith.mulf %387, %387 : vector<8x32xf32>
    %cst_119 = arith.constant dense<0.000000e+00> : vector<8xf32>
    %389 = vector.multi_reduction <add>, %388, %cst_119 [1] : vector<8x32xf32> to vector<8xf32>
    %390 = vector.shape_cast %389 : vector<8xf32> to vector<8x1xf32>
    %cst_120 = arith.constant 3.200000e+01 : f32
    %391 = vector.broadcast %cst_120 : f32 to vector<8x1xf32>
    %392 = arith.divf %390, %391 : vector<8x1xf32>
    %393 = vector.broadcast %385 : vector<8x1xf32> to vector<8x32xf32>
    %394 = arith.subf %381, %393 : vector<8x32xf32>
    %cst_121 = arith.constant 9.99999996E-13 : f32
    %395 = vector.broadcast %cst_121 : f32 to vector<8x1xf32>
    %396 = arith.addf %392, %395 : vector<8x1xf32>
    %397 = math.rsqrt %396 : vector<8x1xf32>
    %398 = vector.broadcast %397 : vector<8x1xf32> to vector<8x32xf32>
    %399 = arith.mulf %394, %398 : vector<8x32xf32>
    %400 = vector.broadcast %300 : vector<1x32xf32> to vector<8x32xf32>
    %401 = arith.mulf %399, %400 : vector<8x32xf32>
    %402 = vector.broadcast %301 : vector<1x32xf32> to vector<8x32xf32>
    %403 = arith.addf %401, %402 : vector<8x32xf32>
    %c17 = arith.constant 17 : index
    %c0_122 = arith.constant 0 : index
    %404 = vector.load %arg2[%c17, %c0_122] : memref<19x320xf32, #tpu.memory_space<vmem>>, vector<1x32xf32>
    %c18 = arith.constant 18 : index
    %c0_123 = arith.constant 0 : index
    %405 = vector.load %arg2[%c18, %c0_123] : memref<19x320xf32, #tpu.memory_space<vmem>>, vector<1x2xf32>
    %406 = vector.extract_strided_slice %403 {offsets = [0, 0], sizes = [1, 32], strides = [1, 1]} : vector<8x32xf32> to vector<1x32xf32>
    %c0_124 = arith.constant 0 : index
    %c0_125 = arith.constant 0 : index
    %407 = vector.load %arg12[%c0_124, %c0_125] : memref<32x32xbf16, #tpu.memory_space<vmem>>, vector<32x32xbf16>
    %408 = arith.truncf %406 : vector<1x32xf32> to vector<1x32xbf16>
    %cst_126 = arith.constant dense<0.000000e+00> : vector<1x32xf32>
    %409 = tpu.matmul %408, %407, %cst_126 {dimension_numbers = #tpu.dot_dimension_numbers<[1], [0], [0], [1], [0, 0, 1, 1], [], []>} : vector<1x32xbf16>, vector<32x32xbf16>, vector<1x32xf32> -> vector<1x32xf32>
    %410 = arith.addf %409, %404 : vector<1x32xf32>
    %411 = math.tanh %410 : vector<1x32xf32>
    %c0_127 = arith.constant 0 : index
    %c0_128 = arith.constant 0 : index
    %412 = vector.load %arg13[%c0_127, %c0_128] : memref<32x2xbf16, #tpu.memory_space<vmem>>, vector<32x2xbf16>
    %413 = arith.truncf %411 : vector<1x32xf32> to vector<1x32xbf16>
    %cst_129 = arith.constant dense<0.000000e+00> : vector<1x2xf32>
    %414 = tpu.matmul %413, %412, %cst_129 {dimension_numbers = #tpu.dot_dimension_numbers<[1], [0], [0], [1], [0, 0, 1, 1], [], []>} : vector<1x32xbf16>, vector<32x2xbf16>, vector<1x2xf32> -> vector<1x2xf32>
    %415 = arith.addf %414, %405 : vector<1x2xf32>
    %c0_130 = arith.constant 0 : index
    %c0_131 = arith.constant 0 : index
    %c0_132 = arith.constant 0 : index
    %416 = vector.load %arg14[%c0_130, %c0_131, %c0_132] : memref<1x1x2xf32, #tpu.memory_space<vmem>>, vector<1x1x2xf32>
    %417 = vector.shape_cast %416 : vector<1x1x2xf32> to vector<1x2xf32>
    %418 = vector.shape_cast %415 : vector<1x2xf32> to vector<1x1x2xf32>
    tpu.vector_store %arg14[%c0_130, %c0_131, %c0_132], %418 {strides = array<i32>} : memref<1x1x2xf32, #tpu.memory_space<vmem>>, vector<1x1x2xf32>,
    return
  }
  func.func @transform_0(%arg0: i32) -> (i32, i32, i32) {
    %c0_i32 = arith.constant 0 : i32
    %c0_i32_0 = arith.constant 0 : i32
    %c0_i32_1 = arith.constant 0 : i32
    return %arg0, %c0_i32, %c0_i32_0 : i32, i32, i32
  }
  func.func @transform_1(%arg0: i32) -> (i32, i32) {
    %c0_i32 = arith.constant 0 : i32
    %c0_i32_0 = arith.constant 0 : i32
    %c0_i32_1 = arith.constant 0 : i32
    return %c0_i32, %c0_i32_0 : i32, i32
  }
  func.func @transform_2(%arg0: i32) -> (i32, i32) {
    %c0_i32 = arith.constant 0 : i32
    %c0_i32_0 = arith.constant 0 : i32
    %c0_i32_1 = arith.constant 0 : i32
    return %c0_i32, %c0_i32_0 : i32, i32
  }
  func.func @transform_3(%arg0: i32) -> (i32, i32) {
    %c0_i32 = arith.constant 0 : i32
    %c0_i32_0 = arith.constant 0 : i32
    %c0_i32_1 = arith.constant 0 : i32
    return %c0_i32, %c0_i32_0 : i32, i32
  }
  func.func @transform_4(%arg0: i32) -> (i32, i32) {
    %c0_i32 = arith.constant 0 : i32
    %c0_i32_0 = arith.constant 0 : i32
    %c0_i32_1 = arith.constant 0 : i32
    return %c0_i32, %c0_i32_0 : i32, i32
  }
  func.func @transform_5(%arg0: i32) -> (i32, i32) {
    %c0_i32 = arith.constant 0 : i32
    %c0_i32_0 = arith.constant 0 : i32
    %c0_i32_1 = arith.constant 0 : i32
    return %c0_i32, %c0_i32_0 : i32, i32
  }
  func.func @transform_6(%arg0: i32) -> (i32, i32) {
    %c0_i32 = arith.constant 0 : i32
    %c0_i32_0 = arith.constant 0 : i32
    %c0_i32_1 = arith.constant 0 : i32
    return %c0_i32, %c0_i32_0 : i32, i32
  }
  func.func @transform_7(%arg0: i32) -> (i32, i32) {
    %c0_i32 = arith.constant 0 : i32
    %c0_i32_0 = arith.constant 0 : i32
    %c0_i32_1 = arith.constant 0 : i32
    return %c0_i32, %c0_i32_0 : i32, i32
  }
  func.func @transform_8(%arg0: i32) -> (i32, i32) {
    %c0_i32 = arith.constant 0 : i32
    %c0_i32_0 = arith.constant 0 : i32
    %c0_i32_1 = arith.constant 0 : i32
    return %c0_i32, %c0_i32_0 : i32, i32
  }
  func.func @transform_9(%arg0: i32) -> (i32, i32) {
    %c0_i32 = arith.constant 0 : i32
    %c0_i32_0 = arith.constant 0 : i32
    %c0_i32_1 = arith.constant 0 : i32
    return %c0_i32, %c0_i32_0 : i32, i32
  }
  func.func @transform_10(%arg0: i32) -> (i32, i32) {
    %c0_i32 = arith.constant 0 : i32
    %c0_i32_0 = arith.constant 0 : i32
    %c0_i32_1 = arith.constant 0 : i32
    return %c0_i32, %c0_i32_0 : i32, i32
  }
  func.func @transform_11(%arg0: i32) -> (i32, i32) {
    %c0_i32 = arith.constant 0 : i32
    %c0_i32_0 = arith.constant 0 : i32
    %c0_i32_1 = arith.constant 0 : i32
    return %c0_i32, %c0_i32_0 : i32, i32
  }
  func.func @transform_12(%arg0: i32) -> (i32, i32) {
    %c0_i32 = arith.constant 0 : i32
    %c0_i32_0 = arith.constant 0 : i32
    %c0_i32_1 = arith.constant 0 : i32
    return %c0_i32, %c0_i32_0 : i32, i32
  }
  func.func @transform_13(%arg0: i32) -> (i32, i32, i32) {
    %c0_i32 = arith.constant 0 : i32
    %c0_i32_0 = arith.constant 0 : i32
    %c0_i32_1 = arith.constant 0 : i32
    return %arg0, %c0_i32, %c0_i32_0 : i32, i32, i32
  }
}

</mosaic_0001>

<llo_original>
// kernel: tpu_custom_call.1
$region0: #{tpu_custom_call.1}
  #allocation0 [shape = 'u32[]', space=smem, size = 0x4, offset = 0x4, fixed_abs, tag = 'smem constant byte address 0x4 - core index']
  #allocation1 [shape = 'u32[144,128]{1,0:T(1,128)}', space=vmem, size = 0x12000, scoped, tag = 'internal scratch']
  %s0 = inlined_call_operand.hbm [shape: f32[2,8,32], index: 0, kind: input, shape index: {}]
  %s1 = inlined_call_operand.vmem [shape: f32[19,320], index: 1, kind: input, shape index: {}]
  %s2 = inlined_call_operand.hbm [shape: bf16[32,96], index: 2, kind: input, shape index: {}]
  %s3 = inlined_call_operand.vmem [shape: bf16[32,32], index: 3, kind: input, shape index: {}]
  %s4 = inlined_call_operand.hbm [shape: bf16[32,64], index: 4, kind: input, shape index: {}]
  %s5 = inlined_call_operand.vmem [shape: bf16[64,32], index: 5, kind: input, shape index: {}]
  %s6 = inlined_call_operand.hbm [shape: bf16[32,96], index: 6, kind: input, shape index: {}]
  %s7 = inlined_call_operand.hbm [shape: bf16[32,32], index: 7, kind: input, shape index: {}]
  %s8 = inlined_call_operand.vmem [shape: bf16[32,4], index: 8, kind: input, shape index: {}]
  %s9 = inlined_call_operand.vmem [shape: bf16[32,320], index: 9, kind: input, shape index: {}]
  %s10 = inlined_call_operand.vmem [shape: bf16[64,32], index: 10, kind: input, shape index: {}]
  %s11 = inlined_call_operand.hbm [shape: bf16[32,32], index: 11, kind: input, shape index: {}]
  %s12 = inlined_call_operand.vmem [shape: bf16[32,2], index: 12, kind: input, shape index: {}]
  %s13 = inlined_call_operand.hbm [shape: f32[2,1,2], index: 13, kind: output, shape index: {}]
  %s14 = sld [smem:[#allocation0]]
  $region109: #{tpu_custom_call.1} parent=0
    _
  %s16 = ssub.s32 1, %s14
  %s17 = scalar_select 0, %s16, %s14
  $region1: #{tpu_custom_call.1} parent=0
    #allocation2 [shape = 'u8[8192]{0}', space=vmem, size = 0x2000, scoped, tag = 'input window, operand 0']
    #allocation3 [shape = 's32[2]{0}', space=sflag, size = 0x8, scoped, tag = 'scoped memory for tpu_custom_call.1']
    #allocation4 [shape = 's32[2]{0}', space=sflag, size = 0x8, scoped, tag = 'scoped memory for tpu_custom_call.1']
    #allocation5 [shape = 'u8[8192]{0}', space=vmem, size = 0x2000, scoped, tag = 'input window, operand 2, single buffered']
    #allocation6 [shape = 's32[1]{0}', space=sflag, size = 0x4, scoped, tag = 'scoped memory for tpu_custom_call.1']
    #allocation7 [shape = 'u8[8192]{0}', space=vmem, size = 0x2000, scoped, tag = 'input window, operand 4, single buffered']
    #allocation8 [shape = 'u8[8192]{0}', space=vmem, size = 0x2000, scoped, tag = 'input window, operand 6, single buffered']
    #allocation9 [shape = 's32[1]{0}', space=sflag, size = 0x4, scoped, tag = 'scoped memory for tpu_custom_call.1']
    #allocation10 [shape = 'u8[8192]{0}', space=vmem, size = 0x2000, scoped, tag = 'input window, operand 7, single buffered']
    #allocation11 [shape = 'u8[8192]{0}', space=vmem, size = 0x2000, scoped, tag = 'input window, operand 11, single buffered']
    #allocation12 [shape = 's32[1]{0}', space=sflag, size = 0x4, scoped, tag = 'scoped memory for tpu_custom_call.1']
    #allocation13 [shape = 'u8[1024]{0}', space=vmem, size = 0x400, scoped, tag = 'output window, operand 0']
    %18 = vsyncpa [#allocation3], 0
    %s19 = scalar_lea.sflag [#allocation3], 1
    %20 = vsyncpa %s19, 0
    %21 = vsyncpa [#allocation6], 0
    %22 = vsyncpa [#allocation9], 0
    %23 = vsyncpa [#allocation12], 0
    %24 = vsyncpa [#allocation4], 0
    %s25 = scalar_lea.sflag [#allocation4], 1
    %26 = vsyncpa %s25, 0
    loop: start=0, step=1, limit=4
    $region2: #{tpu_custom_call.1} parent=1 // loop_pre_header
      _
    $region3: #{tpu_custom_call.1} parent=1 // loop_header
      %s28 = sphi 0, %s32
      %p29 = scmp.ge.s32.totalorder %s28, 4
      %s38 = sphi 0, %s40
      %s41 = sphi 0, %s38
      %s42 = sphi 0, %s41
      %s58 = sphi 0, %s42
      %s62 = sphi 0, %s62
      %s64 = sphi 0, %s62
      %s65 = sphi 0, %s64
      %s79 = sphi 0, %s65
      %s83 = sphi 0, %s83
      %s85 = sphi 0, %s83
      %s86 = sphi 0, %s85
      %s100 = sphi 0, %s86
      %s104 = sphi 0, %s104
      %s106 = sphi 0, %s104
      %s107 = sphi 0, %s106
      %s121 = sphi 0, %s107
      %s125 = sphi 0, %s125
      %s127 = sphi 0, %s125
      %s128 = sphi 0, %s127
      %s142 = sphi 0, %s128
      %s146 = sphi 0, %s146
      %s148 = sphi 0, %s146
      %s149 = sphi 0, %s148
      %s163 = sphi 0, %s149
      %s167 = sphi 0, %s167
      %s169 = sphi 0, %s167
      %s170 = sphi 0, %s169
      %s184 = sphi 0, %s170
      %s188 = sphi 0, %s188
      %s190 = sphi 0, %s188
      %s191 = sphi 0, %s190
      %s205 = sphi 0, %s191
      %s209 = sphi 0, %s209
      %s211 = sphi 0, %s209
      %s212 = sphi 0, %s211
      %s226 = sphi 0, %s212
      %s230 = sphi 0, %s230
      %s232 = sphi 0, %s230
      %s233 = sphi 0, %s232
      %s247 = sphi 0, %s233
      %s251 = sphi 0, %s251
      %s253 = sphi 0, %s251
      %s254 = sphi 0, %s253
      %s268 = sphi 0, %s254
      %s272 = sphi 0, %s272
      %s274 = sphi 0, %s272
      %s275 = sphi 0, %s274
      %s289 = sphi 0, %s275
      %s293 = sphi 0, %s293
      %s295 = sphi 0, %s293
      %s296 = sphi 0, %s295
      %s310 = sphi 0, %s296
      %s316 = sphi 0, %s318
      %s319 = sphi 0, %s316
      %s320 = sphi 0, %s319
      %s336 = sphi 0, %s320
    $region4: #{tpu_custom_call.1} parent=1 // loop_header_branch
      %31 = sbr.rel (%p29) target = $region8
    $region5: #{tpu_custom_call.1} parent=1 // loop_body
      %s33 = ssub.s32 %s28, 1
      %s34 = ssub.s32 %s28, 2
      %s35 = sadd.s32 %s28, 1
      %s36 = ssub.s32 %s28, %s35
      %p37 = scmp.eq.s32.totalorder %s36, 0
      %s39 = sadd.s32 %s38, 1
      %s40 = scalar_select %p37, %s38, %s39
      %p43 = pneg %p37
      %p44 = scmp.eq.s32.totalorder %s28, 1
      %p45 = por %p43, %p44
      %p46 = scmp.ne.s32.totalorder %s38, %s41
      %p47 = scmp.eq.s32.totalorder %s28, 0
      %p48 = por %p46, %p47
      %p49 = scmp.ne.s32.totalorder %s38, %s41
      %p50 = scmp.eq.s32.totalorder %s33, 1
      %p51 = por %p49, %p50
      %p52 = scmp.ne.s32.totalorder %s41, %s42
      %p53 = scmp.eq.s32.totalorder %s33, 0
      %p54 = por %p52, %p53
      %p55 = scmp.ne.s32.totalorder %s41, %s42
      %p56 = scmp.eq.s32.totalorder %s34, 1
      %p57 = por %p55, %p56
      %p59 = scmp.ne.s32.totalorder %s42, %s58
      %p60 = scmp.eq.s32.totalorder %s34, 0
      %p61 = por %p59, %p60
      %s63 = sadd.s32 %s62, 1
      %p66 = scmp.eq.s32.totalorder %s28, 1
      %p67 = scmp.ne.s32.totalorder %s62, %s64
      %p68 = scmp.eq.s32.totalorder %s28, 0
      %p69 = por %p67, %p68
      %p70 = scmp.ne.s32.totalorder %s62, %s64
      %p71 = scmp.eq.s32.totalorder %s33, 1
      %p72 = por %p70, %p71
      %p73 = scmp.ne.s32.totalorder %s64, %s65
      %p74 = scmp.eq.s32.totalorder %s33, 0
      %p75 = por %p73, %p74
      %p76 = scmp.ne.s32.totalorder %s64, %s65
      %p77 = scmp.eq.s32.totalorder %s34, 1
      %p78 = por %p76, %p77
      %p80 = scmp.ne.s32.totalorder %s65, %s79
      %p81 = scmp.eq.s32.totalorder %s34, 0
      %p82 = por %p80, %p81
      %s84 = sadd.s32 %s83, 1
      %p87 = scmp.eq.s32.totalorder %s28, 1
      %p88 = scmp.ne.s32.totalorder %s83, %s85
      %p89 = scmp.eq.s32.totalorder %s28, 0
      %p90 = por %p88, %p89
      %p91 = scmp.ne.s32.totalorder %s83, %s85
      %p92 = scmp.eq.s32.totalorder %s33, 1
      %p93 = por %p91, %p92
      %p94 = scmp.ne.s32.totalorder %s85, %s86
      %p95 = scmp.eq.s32.totalorder %s33, 0
      %p96 = por %p94, %p95
      %p97 = scmp.ne.s32.totalorder %s85, %s86
      %p98 = scmp.eq.s32.totalorder %s34, 1
      %p99 = por %p97, %p98
      %p101 = scmp.ne.s32.totalorder %s86, %s100
      %p102 = scmp.eq.s32.totalorder %s34, 0
      %p103 = por %p101, %p102
      %s105 = sadd.s32 %s104, 1
      %p108 = scmp.eq.s32.totalorder %s28, 1
      %p109 = scmp.ne.s32.totalorder %s104, %s106
      %p110 = scmp.eq.s32.totalorder %s28, 0
      %p111 = por %p109, %p110
      %p112 = scmp.ne.s32.totalorder %s104, %s106
      %p113 = scmp.eq.s32.totalorder %s33, 1
      %p114 = por %p112, %p113
      %p115 = scmp.ne.s32.totalorder %s106, %s107
      %p116 = scmp.eq.s32.totalorder %s33, 0
      %p117 = por %p115, %p116
      %p118 = scmp.ne.s32.totalorder %s106, %s107
      %p119 = scmp.eq.s32.totalorder %s34, 1
      %p120 = por %p118, %p119
      %p122 = scmp.ne.s32.totalorder %s107, %s121
      %p123 = scmp.eq.s32.totalorder %s34, 0
      %p124 = por %p122, %p123
      %s126 = sadd.s32 %s125, 1
      %p129 = scmp.eq.s32.totalorder %s28, 1
      %p130 = scmp.ne.s32.totalorder %s125, %s127
      %p131 = scmp.eq.s32.totalorder %s28, 0
      %p132 = por %p130, %p131
      %p133 = scmp.ne.s32.totalorder %s125, %s127
      %p134 = scmp.eq.s32.totalorder %s33, 1
      %p135 = por %p133, %p134
      %p136 = scmp.ne.s32.totalorder %s127, %s128
      %p137 = scmp.eq.s32.totalorder %s33, 0
      %p138 = por %p136, %p137
      %p139 = scmp.ne.s32.totalorder %s127, %s128
      %p140 = scmp.eq.s32.totalorder %s34, 1
      %p141 = por %p139, %p140
      %p143 = scmp.ne.s32.totalorder %s128, %s142
      %p144 = scmp.eq.s32.totalorder %s34, 0
      %p145 = por %p143, %p144
      %s147 = sadd.s32 %s146, 1
      %p150 = scmp.eq.s32.totalorder %s28, 1
      %p151 = scmp.ne.s32.totalorder %s146, %s148
      %p152 = scmp.eq.s32.totalorder %s28, 0
      %p153 = por %p151, %p152
      %p154 = scmp.ne.s32.totalorder %s146, %s148
      %p155 = scmp.eq.s32.totalorder %s33, 1
      %p156 = por %p154, %p155
      %p157 = scmp.ne.s32.totalorder %s148, %s149
      %p158 = scmp.eq.s32.totalorder %s33, 0
      %p159 = por %p157, %p158
      %p160 = scmp.ne.s32.totalorder %s148, %s149
      %p161 = scmp.eq.s32.totalorder %s34, 1
      %p162 = por %p160, %p161
      %p164 = scmp.ne.s32.totalorder %s149, %s163
      %p165 = scmp.eq.s32.totalorder %s34, 0
      %p166 = por %p164, %p165
      %s168 = sadd.s32 %s167, 1
      %p171 = scmp.eq.s32.totalorder %s28, 1
      %p172 = scmp.ne.s32.totalorder %s167, %s169
      %p173 = scmp.eq.s32.totalorder %s28, 0
      %p174 = por %p172, %p173
      %p175 = scmp.ne.s32.totalorder %s167, %s169
      %p176 = scmp.eq.s32.totalorder %s33, 1
      %p177 = por %p175, %p176
      %p178 = scmp.ne.s32.totalorder %s169, %s170
      %p179 = scmp.eq.s32.totalorder %s33, 0
      %p180 = por %p178, %p179
      %p181 = scmp.ne.s32.totalorder %s169, %s170
      %p182 = scmp.eq.s32.totalorder %s34, 1
      %p183 = por %p181, %p182
      %p185 = scmp.ne.s32.totalorder %s170, %s184
      %p186 = scmp.eq.s32.totalorder %s34, 0
      %p187 = por %p185, %p186
      %s189 = sadd.s32 %s188, 1
      %p192 = scmp.eq.s32.totalorder %s28, 1
      %p193 = scmp.ne.s32.totalorder %s188, %s190
      %p194 = scmp.eq.s32.totalorder %s28, 0
      %p195 = por %p193, %p194
      %p196 = scmp.ne.s32.totalorder %s188, %s190
      %p197 = scmp.eq.s32.totalorder %s33, 1
      %p198 = por %p196, %p197
      %p199 = scmp.ne.s32.totalorder %s190, %s191
      %p200 = scmp.eq.s32.totalorder %s33, 0
      %p201 = por %p199, %p200
      %p202 = scmp.ne.s32.totalorder %s190, %s191
      %p203 = scmp.eq.s32.totalorder %s34, 1
      %p204 = por %p202, %p203
      %p206 = scmp.ne.s32.totalorder %s191, %s205
      %p207 = scmp.eq.s32.totalorder %s34, 0
      %p208 = por %p206, %p207
      %s210 = sadd.s32 %s209, 1
      %p213 = scmp.eq.s32.totalorder %s28, 1
      %p214 = scmp.ne.s32.totalorder %s209, %s211
      %p215 = scmp.eq.s32.totalorder %s28, 0
      %p216 = por %p214, %p215
      %p217 = scmp.ne.s32.totalorder %s209, %s211
      %p218 = scmp.eq.s32.totalorder %s33, 1
      %p219 = por %p217, %p218
      %p220 = scmp.ne.s32.totalorder %s211, %s212
      %p221 = scmp.eq.s32.totalorder %s33, 0
      %p222 = por %p220, %p221
      %p223 = scmp.ne.s32.totalorder %s211, %s212
      %p224 = scmp.eq.s32.totalorder %s34, 1
      %p225 = por %p223, %p224
      %p227 = scmp.ne.s32.totalorder %s212, %s226
      %p228 = scmp.eq.s32.totalorder %s34, 0
      %p229 = por %p227, %p228
      %s231 = sadd.s32 %s230, 1
      %p234 = scmp.eq.s32.totalorder %s28, 1
      %p235 = scmp.ne.s32.totalorder %s230, %s232
      %p236 = scmp.eq.s32.totalorder %s28, 0
      %p237 = por %p235, %p236
      %p238 = scmp.ne.s32.totalorder %s230, %s232
      %p239 = scmp.eq.s32.totalorder %s33, 1
      %p240 = por %p238, %p239
      %p241 = scmp.ne.s32.totalorder %s232, %s233
      %p242 = scmp.eq.s32.totalorder %s33, 0
      %p243 = por %p241, %p242
      %p244 = scmp.ne.s32.totalorder %s232, %s233
      %p245 = scmp.eq.s32.totalorder %s34, 1
      %p246 = por %p244, %p245
      %p248 = scmp.ne.s32.totalorder %s233, %s247
      %p249 = scmp.eq.s32.totalorder %s34, 0
      %p250 = por %p248, %p249
      %s252 = sadd.s32 %s251, 1
      %p255 = scmp.eq.s32.totalorder %s28, 1
      %p256 = scmp.ne.s32.totalorder %s251, %s253
      %p257 = scmp.eq.s32.totalorder %s28, 0
      %p258 = por %p256, %p257
      %p259 = scmp.ne.s32.totalorder %s251, %s253
      %p260 = scmp.eq.s32.totalorder %s33, 1
      %p261 = por %p259, %p260
      %p262 = scmp.ne.s32.totalorder %s253, %s254
      %p263 = scmp.eq.s32.totalorder %s33, 0
      %p264 = por %p262, %p263
      %p265 = scmp.ne.s32.totalorder %s253, %s254
      %p266 = scmp.eq.s32.totalorder %s34, 1
      %p267 = por %p265, %p266
      %p269 = scmp.ne.s32.totalorder %s254, %s268
      %p270 = scmp.eq.s32.totalorder %s34, 0
      %p271 = por %p269, %p270
      %s273 = sadd.s32 %s272, 1
      %p276 = scmp.eq.s32.totalorder %s28, 1
      %p277 = scmp.ne.s32.totalorder %s272, %s274
      %p278 = scmp.eq.s32.totalorder %s28, 0
      %p279 = por %p277, %p278
      %p280 = scmp.ne.s32.totalorder %s272, %s274
      %p281 = scmp.eq.s32.totalorder %s33, 1
      %p282 = por %p280, %p281
      %p283 = scmp.ne.s32.totalorder %s274, %s275
      %p284 = scmp.eq.s32.totalorder %s33, 0
      %p285 = por %p283, %p284
      %p286 = scmp.ne.s32.totalorder %s274, %s275
      %p287 = scmp.eq.s32.totalorder %s34, 1
      %p288 = por %p286, %p287
      %p290 = scmp.ne.s32.totalorder %s275, %s289
      %p291 = scmp.eq.s32.totalorder %s34, 0
      %p292 = por %p290, %p291
      %s294 = sadd.s32 %s293, 1
      %p297 = scmp.eq.s32.totalorder %s28, 1
      %p298 = scmp.ne.s32.totalorder %s293, %s295
      %p299 = scmp.eq.s32.totalorder %s28, 0
      %p300 = por %p298, %p299
      %p301 = scmp.ne.s32.totalorder %s293, %s295
      %p302 = scmp.eq.s32.totalorder %s33, 1
      %p303 = por %p301, %p302
      %p304 = scmp.ne.s32.totalorder %s295, %s296
      %p305 = scmp.eq.s32.totalorder %s33, 0
      %p306 = por %p304, %p305
      %p307 = scmp.ne.s32.totalorder %s295, %s296
      %p308 = scmp.eq.s32.totalorder %s34, 1
      %p309 = por %p307, %p308
      %p311 = scmp.ne.s32.totalorder %s296, %s310
      %p312 = scmp.eq.s32.totalorder %s34, 0
      %p313 = por %p311, %p312
      %s314 = ssub.s32 %s28, %s35
      %p315 = scmp.eq.s32.totalorder %s314, 0
      %s317 = sadd.s32 %s316, 1
      %s318 = scalar_select %p315, %s316, %s317
      %p321 = pneg %p315
      %p322 = scmp.eq.s32.totalorder %s28, 1
      %p323 = por %p321, %p322
      %p324 = scmp.ne.s32.totalorder %s316, %s319
      %p325 = scmp.eq.s32.totalorder %s28, 0
      %p326 = por %p324, %p325
      %p327 = scmp.ne.s32.totalorder %s316, %s319
      %p328 = scmp.eq.s32.totalorder %s33, 1
      %p329 = por %p327, %p328
      %p330 = scmp.ne.s32.totalorder %s319, %s320
      %p331 = scmp.eq.s32.totalorder %s33, 0
      %p332 = por %p330, %p331
      %p333 = scmp.ne.s32.totalorder %s319, %s320
      %p334 = scmp.eq.s32.totalorder %s34, 1
      %p335 = por %p333, %p334
      %p337 = scmp.ne.s32.totalorder %s320, %s336
      %p338 = scmp.eq.s32.totalorder %s34, 0
      %p339 = por %p337, %p338
      %p340 = scmp.le.s32.totalorder 1, %s28
      %p341 = scmp.lt.s32.totalorder %s28, 3
      %p342 = pnand %p340, %p341
      %p343 = pneg %p342
      // Predicated region
      $region9: #{tpu_custom_call.1} parent=5 // pred_check
        _
      $region10: #{tpu_custom_call.1} parent=5 // pred_check_branch
        %345 = sbr.rel (%p342) target = $region12
      $region11: #{tpu_custom_call.1} parent=5 // pred_region
        %s346 = ssub.s32 %s28, 1
        // Predicated region
        $region13: #{tpu_custom_call.1} parent=11 // pred_check
          %p347 = pneg %p75
        $region14: #{tpu_custom_call.1} parent=11 // pred_check_branch
          %349 = sbr.rel (%p347) target = $region16
        $region15: #{tpu_custom_call.1} parent=11 // pred_region
          _
        $region16: #{tpu_custom_call.1} parent=11 // pred_fallthru
          _
        // Predicated region
        $region17: #{tpu_custom_call.1} parent=11 // pred_check
          %p350 = pneg %p96
        $region18: #{tpu_custom_call.1} parent=11 // pred_check_branch
          %352 = sbr.rel (%p350) target = $region20
        $region19: #{tpu_custom_call.1} parent=11 // pred_region
          %s354 = ssub.s32 256, 256
          %355 = vsyncadd [#allocation6], %s354
          %s356 = sshll.u32 [#allocation5], 4
          %s357 = int_to_ptr.vmem [resolvable:$true] %s356
          %362 = dma.hbm_to_vmem [thread:$0]  %s2, 256, %s357, [#allocation6], 64, 64, 4
        $region20: #{tpu_custom_call.1} parent=11 // pred_fallthru
          _
        // Predicated region
        $region21: #{tpu_custom_call.1} parent=11 // pred_check
          %p363 = pneg %p117
        $region22: #{tpu_custom_call.1} parent=11 // pred_check_branch
          %365 = sbr.rel (%p363) target = $region24
        $region23: #{tpu_custom_call.1} parent=11 // pred_region
          _
        $region24: #{tpu_custom_call.1} parent=11 // pred_fallthru
          _
        // Predicated region
        $region25: #{tpu_custom_call.1} parent=11 // pred_check
          %p366 = pneg %p138
        $region26: #{tpu_custom_call.1} parent=11 // pred_check_branch
          %368 = sbr.rel (%p366) target = $region28
        $region27: #{tpu_custom_call.1} parent=11 // pred_region
          %s370 = ssub.s32 256, 256
          %371 = vsyncadd [#allocation6], %s370
          %s372 = sshll.u32 [#allocation7], 4
          %s373 = int_to_ptr.vmem [resolvable:$true] %s372
          %378 = dma.hbm_to_vmem [thread:$0]  %s4, 256, %s373, [#allocation6], 64, 64, 4
        $region28: #{tpu_custom_call.1} parent=11 // pred_fallthru
          _
        // Predicated region
        $region29: #{tpu_custom_call.1} parent=11 // pred_check
          %p379 = pneg %p159
        $region30: #{tpu_custom_call.1} parent=11 // pred_check_branch
          %381 = sbr.rel (%p379) target = $region32
        $region31: #{tpu_custom_call.1} parent=11 // pred_region
          _
        $region32: #{tpu_custom_call.1} parent=11 // pred_fallthru
          _
        // Predicated region
        $region33: #{tpu_custom_call.1} parent=11 // pred_check
          %p382 = pneg %p180
        $region34: #{tpu_custom_call.1} parent=11 // pred_check_branch
          %384 = sbr.rel (%p382) target = $region36
        $region35: #{tpu_custom_call.1} parent=11 // pred_region
          %s386 = ssub.s32 256, 256
          %387 = vsyncadd [#allocation9], %s386
          %s388 = sshll.u32 [#allocation8], 4
          %s389 = int_to_ptr.vmem [resolvable:$true] %s388
          %394 = dma.hbm_to_vmem [thread:$0]  %s6, 256, %s389, [#allocation9], 64, 64, 4
        $region36: #{tpu_custom_call.1} parent=11 // pred_fallthru
          _
        // Predicated region
        $region37: #{tpu_custom_call.1} parent=11 // pred_check
          %p395 = pneg %p201
        $region38: #{tpu_custom_call.1} parent=11 // pred_check_branch
          %397 = sbr.rel (%p395) target = $region40
        $region39: #{tpu_custom_call.1} parent=11 // pred_region
          %s399 = ssub.s32 256, 256
          %400 = vsyncadd [#allocation9], %s399
          %s401 = sshll.u32 [#allocation10], 4
          %s402 = int_to_ptr.vmem [resolvable:$true] %s401
          %407 = dma.hbm_to_vmem [thread:$0]  %s7, 256, %s402, [#allocation9], 64, 64, 4
        $region40: #{tpu_custom_call.1} parent=11 // pred_fallthru
          _
        // Predicated region
        $region41: #{tpu_custom_call.1} parent=11 // pred_check
          %p408 = pneg %p222
        $region42: #{tpu_custom_call.1} parent=11 // pred_check_branch
          %410 = sbr.rel (%p408) target = $region44
        $region43: #{tpu_custom_call.1} parent=11 // pred_region
          _
        $region44: #{tpu_custom_call.1} parent=11 // pred_fallthru
          _
        // Predicated region
        $region45: #{tpu_custom_call.1} parent=11 // pred_check
          %p411 = pneg %p243
        $region46: #{tpu_custom_call.1} parent=11 // pred_check_branch
          %413 = sbr.rel (%p411) target = $region48
        $region47: #{tpu_custom_call.1} parent=11 // pred_region
          _
        $region48: #{tpu_custom_call.1} parent=11 // pred_fallthru
          _
        // Predicated region
        $region49: #{tpu_custom_call.1} parent=11 // pred_check
          %p414 = pneg %p264
        $region50: #{tpu_custom_call.1} parent=11 // pred_check_branch
          %416 = sbr.rel (%p414) target = $region52
        $region51: #{tpu_custom_call.1} parent=11 // pred_region
          _
        $region52: #{tpu_custom_call.1} parent=11 // pred_fallthru
          _
        // Predicated region
        $region53: #{tpu_custom_call.1} parent=11 // pred_check
          %p417 = pneg %p285
        $region54: #{tpu_custom_call.1} parent=11 // pred_check_branch
          %419 = sbr.rel (%p417) target = $region56
        $region55: #{tpu_custom_call.1} parent=11 // pred_region
          %s421 = ssub.s32 256, 256
          %422 = vsyncadd [#allocation12], %s421
          %s423 = sshll.u32 [#allocation11], 4
          %s424 = int_to_ptr.vmem [resolvable:$true] %s423
          %429 = dma.hbm_to_vmem [thread:$0]  %s11, 256, %s424, [#allocation12], 64, 64, 4
        $region56: #{tpu_custom_call.1} parent=11 // pred_fallthru
          _
        // Predicated region
        $region57: #{tpu_custom_call.1} parent=11 // pred_check
          %p430 = pneg %p306
        $region58: #{tpu_custom_call.1} parent=11 // pred_check_branch
          %432 = sbr.rel (%p430) target = $region60
        $region59: #{tpu_custom_call.1} parent=11 // pred_region
          _
        $region60: #{tpu_custom_call.1} parent=11 // pred_fallthru
          _
      $region12: #{tpu_custom_call.1} parent=5 // pred_fallthru
        _
      %p433 = scmp.lt.s32.totalorder %s28, 2
      // Predicated region
      $region61: #{tpu_custom_call.1} parent=5 // pred_check
        %p434 = pneg %p433
      $region62: #{tpu_custom_call.1} parent=5 // pred_check_branch
        %436 = sbr.rel (%p434) target = $region64
      $region63: #{tpu_custom_call.1} parent=5 // pred_region
        // Predicated region
        $region65: #{tpu_custom_call.1} parent=63 // pred_check
          %p437 = pneg %p48
        $region66: #{tpu_custom_call.1} parent=63 // pred_check_branch
          %439 = sbr.rel (%p437) target = $region68
        $region67: #{tpu_custom_call.1} parent=63 // pred_region
          %s440 = sand.u32 %s38, 1
          %s441 = scalar_lea.sflag [#allocation3], %s440
          %s442 = sand.u32 %s38, 1
          %s443 = smul.addr %s442, 8
          %s444 = scalar_lea.vmem [#allocation2], %s443
          %s446 = ssub.s32 128, 128
          %447 = vsyncadd %s441, %s446
          %s448 = smul.addr %s28, 128
          %s449 = scalar_lea.hbm %s0, %s448
          %s451 = sshll.u32 %s444, 4
          %s452 = int_to_ptr.vmem [resolvable:$true] %s451
          %454 = dma.hbm_to_vmem [thread:$0]  %s449, 128, %s452, %s441
        $region68: #{tpu_custom_call.1} parent=63 // pred_fallthru
          _
      $region64: #{tpu_custom_call.1} parent=5 // pred_fallthru
        _
      %p455 = scmp.le.s32.totalorder 1, %s28
      %p456 = scmp.lt.s32.totalorder %s28, 3
      %p457 = pnand %p455, %p456
      %p458 = pneg %p457
      // Predicated region
      $region69: #{tpu_custom_call.1} parent=5 // pred_check
        _
      $region70: #{tpu_custom_call.1} parent=5 // pred_check_branch
        %460 = sbr.rel (%p457) target = $region72
      $region71: #{tpu_custom_call.1} parent=5 // pred_region
        %s461 = ssub.s32 %s28, 1
        %s462 = sand.u32 %s41, 1
        %s463 = scalar_lea.sflag [#allocation3], %s462
        %s464 = sand.u32 %s41, 1
        %s465 = smul.addr %s464, 8
        %s466 = scalar_lea.vmem [#allocation2], %s465
        // Predicated region
        $region73: #{tpu_custom_call.1} parent=71 // pred_check
          %p467 = pneg %p54
        $region74: #{tpu_custom_call.1} parent=71 // pred_check_branch
          %469 = sbr.rel (%p467) target = $region76
        $region75: #{tpu_custom_call.1} parent=71 // pred_region
          %470 = dma.done %s463, 128
        $region76: #{tpu_custom_call.1} parent=71 // pred_fallthru
          _
        // Predicated region
        $region77: #{tpu_custom_call.1} parent=71 // pred_check
          %p471 = pneg %p96
        $region78: #{tpu_custom_call.1} parent=71 // pred_check_branch
          %473 = sbr.rel (%p471) target = $region80
        $region79: #{tpu_custom_call.1} parent=71 // pred_region
          %474 = dma.done [#allocation6], 256
        $region80: #{tpu_custom_call.1} parent=71 // pred_fallthru
          _
        // Predicated region
        $region81: #{tpu_custom_call.1} parent=71 // pred_check
          %p475 = pneg %p138
        $region82: #{tpu_custom_call.1} parent=71 // pred_check_branch
          %477 = sbr.rel (%p475) target = $region84
        $region83: #{tpu_custom_call.1} parent=71 // pred_region
          %478 = dma.done [#allocation6], 256
        $region84: #{tpu_custom_call.1} parent=71 // pred_fallthru
          _
        // Predicated region
        $region85: #{tpu_custom_call.1} parent=71 // pred_check
          %p479 = pneg %p180
        $region86: #{tpu_custom_call.1} parent=71 // pred_check_branch
          %481 = sbr.rel (%p479) target = $region88
        $region87: #{tpu_custom_call.1} parent=71 // pred_region
          %482 = dma.done [#allocation9], 256
        $region88: #{tpu_custom_call.1} parent=71 // pred_fallthru
          _
        // Predicated region
        $region89: #{tpu_custom_call.1} parent=71 // pred_check
          %p483 = pneg %p201
        $region90: #{tpu_custom_call.1} parent=71 // pred_check_branch
          %485 = sbr.rel (%p483) target = $region92
        $region91: #{tpu_custom_call.1} parent=71 // pred_region
          %486 = dma.done [#allocation9], 256
        $region92: #{tpu_custom_call.1} parent=71 // pred_fallthru
          _
        // Predicated region
        $region93: #{tpu_custom_call.1} parent=71 // pred_check
          %p487 = pneg %p285
        $region94: #{tpu_custom_call.1} parent=71 // pred_check_branch
          %489 = sbr.rel (%p487) target = $region96
        $region95: #{tpu_custom_call.1} parent=71 // pred_region
          %490 = dma.done [#allocation12], 256
        $region96: #{tpu_custom_call.1} parent=71 // pred_fallthru
          _
        %s491 = sand.u32 %s41, 1
        %s492 = scalar_lea.sflag [#allocation3], %s491
        %s493 = sand.u32 %s41, 1
        %s494 = smul.addr %s493, 8
        %s495 = scalar_lea.vmem [#allocation2], %s494
        %p496 = pneg %p54
        %p497 = pneg %p51
        %p498 = pneg %p75
        %p499 = pneg %p72
        %p500 = pneg %p96
        %p501 = pneg %p93
        %p502 = pneg %p117
        %p503 = pneg %p114
        %p504 = pneg %p138
        %p505 = pneg %p135
        %p506 = pneg %p159
        %p507 = pneg %p156
        %p508 = pneg %p180
        %p509 = pneg %p177
        %p510 = pneg %p201
        %p511 = pneg %p198
        %p512 = pneg %p222
        %p513 = pneg %p219
        %p514 = pneg %p243
        %p515 = pneg %p240
        %p516 = pneg %p264
        %p517 = pneg %p261
        %p518 = pneg %p285
        %p519 = pneg %p282
        %p520 = pneg %p306
        %p521 = pneg %p303
        %p522 = pneg %p332
        %p523 = pneg %p329
        %s524 = sand.u32 %s319, 1
        %s525 = scalar_lea.sflag [#allocation4], %s524
        %s526 = sand.u32 %s319, 1
        %s527 = scalar_lea.vmem [#allocation13], %s526
        %v529 = vld [vmem:[%s466] sm:$0xff]
        %v530 = vld [vmem:[%s1] ss:$0 sm:$0xff]
        %v531 = vld [vmem:[%s1 + $0x1] ss:$0 sm:$0xff]
        %v532 = vld [vmem:[%s1 + $0x2] ss:$0 sm:$0xff]
        %v533 = vld [vmem:[%s1 + $0x3] ss:$0 sm:$0xff]
        %v534 = vpack.c.bf16 %v529, %v529
        %v535 = vld [vmem:[#allocation5] sm:$0xf]
        %v536 = vld [vmem:[#allocation5 + $0x4] sm:$0xf]
        %v537 = vld [vmem:[#allocation5 + $0x8] sm:$0xf]
        %v538 = vld [vmem:[#allocation5 + $0xc] sm:$0xf]
        %v543 = vunpack.c.l.b16 %v535
        %v544 = vunpack.c.l.b16 %v536
        %v545 = vunpack.c.l.b16 %v537
        %v546 = vunpack.c.l.b16 %v538
        %v547 = vpack.c.b16 %v544, %v543
        %v548 = vpack.c.b16 %v546, %v545
        %vm551 = vcmask 261120
        %v553 = vsel %vm551, %v534, 0
        %555 = vmatprep.subr.bf16.mxu0 0
        %556 = vmatpush1.bf16.msra.mxu0 0
        %557 = vmatprep.subr.bf16.mxu0 0
        %558 = vmatpush1.bf16.msra.mxu0 0
        %559 = vmatprep.subr.bf16.mxu0 0
        %560 = vmatpush1.bf16.msra.mxu0 0
        %561 = vmatprep.subr.bf16.mxu0 0
        %562 = vmatpush1.bf16.msra.mxu0 0
        %563 = vmatprep.subr.bf16.mxu0 0
        %564 = vmatpush1.bf16.msra.mxu0 0
        %565 = vmatprep.subr.bf16.mxu0 0
        %566 = vmatpush1.bf16.msra.mxu0 0
        %567 = vmatprep.subr.bf16.mxu0 0
        %568 = vmatpush1.bf16.msra.mxu0 %v548
        %569 = vmatprep.subr.bf16.mxu0 0
        %570 = vmatpush1.bf16.msra.mxu0 %v547
        %571 = vmatprep.subr.bf16.mxu0 0
        %572 = vmatpush2.bf16.msra.mxu0 0
        %573 = vmatprep.subr.bf16.mxu0 0
        %574 = vmatpush2.bf16.msra.mxu0 0
        %575 = vmatprep.subr.bf16.mxu0 0
        %576 = vmatpush2.bf16.msra.mxu0 0
        %577 = vmatprep.subr.bf16.mxu0 0
        %578 = vmatpush2.bf16.msra.mxu0 0
        %579 = vmatprep.subr.bf16.mxu0 0
        %580 = vmatpush2.bf16.msra.mxu0 0
        %581 = vmatprep.subr.bf16.mxu0 0
        %582 = vmatpush2.bf16.msra.mxu0 0
        %583 = vmatprep.subr.bf16.mxu0 0
        %584 = vmatpush2.bf16.msra.mxu0 0
        %585 = vmatprep.subr.bf16.mxu0 0
        %586 = vmatpush2.bf16.msra.mxu0 0
        %587 = vmatprep.mubr.bf16.mxu0 0
        %588 = vmatmul.mubr.bf16.gmra.mxu0 %v553
        %v589 = vpop.f32.mrf.mxu0
        %v590 = vadd.f32 %v530, %v589
        %v591 = vpop.f32.mrf.mxu0
        %v592 = vpop.f32.mrf.mxu0
        %v593 = vpop.f32.mrf.mxu0
        %594 = vdwg.mxu0
        %v595 = vmul.f32 %v590, 0.35355338
        %v596 = vpack.c.bf16 %v595, %v595
        %v597 = vpack.c.bf16 %v590, %v590
        %599 = vrot.lane.b32.xlu0 %v597, 96
        %v600 = vpop.permute.xlu0 %599
        %vm601 = vcmask 64512
        %v603 = vsel %vm601, %v596, 0
        %v606 = vsel %vm601, %v600, 0
        %608 = vmatprep.subr.bf16.mxu0 0
        %609 = vmatpush1.bf16.xpose.msra.mxu0 0
        %610 = vmatprep.subr.bf16.mxu0 0
        %611 = vmatpush1.bf16.xpose.msra.mxu0 0
        %612 = vmatprep.subr.bf16.mxu0 0
        %613 = vmatpush1.bf16.xpose.msra.mxu0 0
        %614 = vmatprep.subr.bf16.mxu0 0
        %615 = vmatpush1.bf16.xpose.msra.mxu0 0
        %616 = vmatprep.subr.bf16.mxu0 0
        %617 = vmatpush1.bf16.xpose.msra.mxu0 0
        %618 = vmatprep.subr.bf16.mxu0 0
        %619 = vmatpush1.bf16.xpose.msra.mxu0 0
        %620 = vmatprep.subr.bf16.mxu0 0
        %621 = vmatpush1.bf16.xpose.msra.mxu0 0
        %622 = vmatprep.subr.bf16.mxu0 0
        %623 = vmatpush1.bf16.xpose.msra.mxu0 %v606
        %624 = vmatprep.subr.bf16.mxu0 0
        %625 = vmatpush2.bf16.xpose.msra.mxu0 0
        %626 = vmatprep.subr.bf16.mxu0 0
        %627 = vmatpush2.bf16.xpose.msra.mxu0 0
        %628 = vmatprep.subr.bf16.mxu0 0
        %629 = vmatpush2.bf16.xpose.msra.mxu0 0
        %630 = vmatprep.subr.bf16.mxu0 0
        %631 = vmatpush2.bf16.xpose.msra.mxu0 0
        %632 = vmatprep.subr.bf16.mxu0 0
        %633 = vmatpush2.bf16.xpose.msra.mxu0 0
        %634 = vmatprep.subr.bf16.mxu0 0
        %635 = vmatpush2.bf16.xpose.msra.mxu0 0
        %636 = vmatprep.subr.bf16.mxu0 0
        %637 = vmatpush2.bf16.xpose.msra.mxu0 0
        %638 = vmatprep.subr.bf16.mxu0 0
        %639 = vmatpush2.bf16.xpose.msra.mxu0 0
        %640 = vmatprep.mubr.bf16.mxu0 0
        %641 = vmatmul.mubr.bf16.gmra.mxu0 %v603
        %v642 = vpop.f32.mrf.mxu0
        %v643 = vadd.f32 0.0, %v642
        %v644 = vpop.f32.mrf.mxu0
        %v645 = vpop.f32.mrf.mxu0
        %v646 = vpop.f32.mrf.mxu0
        %647 = vdwg.mxu0
        %v648 = vsel %vm601, %v643, -inf
        %649 = vmax.xlane.f32.xlu0 %v648
        %v650 = vpop.xlane.xlu0 %649
        %v651 = vsub.f32 %v643, %v650
        %v652 = vmul.f32 %v651, 1.442695
        %v653 = vpow.pop %v652
        %v654 = vsel %vm601, %v653, 0.0
        %655 = vadd.xlane.f32.xlu0 %v654
        %v656 = vpop.xlane.xlu0 %655
        %v657 = vrcp.pop %v656
        %v658 = vmul.f32 %v653, %v657
        %v659 = vpack.c.bf16 %v658, %v658
        %660 = vrot.lane.b32.xlu0 %v597, 64
        %v661 = vpop.permute.xlu0 %660
        %v663 = vsel %vm601, %v659, 0
        %vm665 = vcmask 1043456
        %v667 = vsel %vm665, %v661, 0
        %669 = vmatprep.subr.bf16.mxu0 0
        %670 = vmatpush1.bf16.msra.mxu0 0
        %671 = vmatprep.subr.bf16.mxu0 0
        %672 = vmatpush1.bf16.msra.mxu0 0
        %673 = vmatprep.subr.bf16.mxu0 0
        %674 = vmatpush1.bf16.msra.mxu0 0
        %675 = vmatprep.subr.bf16.mxu0 0
        %676 = vmatpush1.bf16.msra.mxu0 0
        %677 = vmatprep.subr.bf16.mxu0 0
        %678 = vmatpush1.bf16.msra.mxu0 0
        %679 = vmatprep.subr.bf16.mxu0 0
        %680 = vmatpush1.bf16.msra.mxu0 0
        %681 = vmatprep.subr.bf16.mxu0 0
        %682 = vmatpush1.bf16.msra.mxu0 0
        %683 = vmatprep.subr.bf16.mxu0 0
        %684 = vmatpush1.bf16.msra.mxu0 %v667
        %685 = vmatprep.subr.bf16.mxu0 0
        %686 = vmatpush2.bf16.msra.mxu0 0
        %687 = vmatprep.subr.bf16.mxu0 0
        %688 = vmatpush2.bf16.msra.mxu0 0
        %689 = vmatprep.subr.bf16.mxu0 0
        %690 = vmatpush2.bf16.msra.mxu0 0
        %691 = vmatprep.subr.bf16.mxu0 0
        %692 = vmatpush2.bf16.msra.mxu0 0
        %693 = vmatprep.subr.bf16.mxu0 0
        %694 = vmatpush2.bf16.msra.mxu0 0
        %695 = vmatprep.subr.bf16.mxu0 0
        %696 = vmatpush2.bf16.msra.mxu0 0
        %697 = vmatprep.subr.bf16.mxu0 0
        %698 = vmatpush2.bf16.msra.mxu0 0
        %699 = vmatprep.subr.bf16.mxu0 0
        %700 = vmatpush2.bf16.msra.mxu0 0
        %701 = vmatprep.mubr.bf16.mxu0 0
        %702 = vmatmul.mubr.bf16.gmra.mxu0 %v663
        %v703 = vpop.f32.mrf.mxu0
        %v704 = vadd.f32 0.0, %v703
        %v705 = vpop.f32.mrf.mxu0
        %v706 = vpop.f32.mrf.mxu0
        %v707 = vpop.f32.mrf.mxu0
        %708 = vdwg.mxu0
        %710 = vrot.lane.b32.xlu0 %v596, 120
        %v711 = vpop.permute.xlu0 %710
        %712 = vrot.lane.b32.xlu0 %v597, 88
        %v713 = vpop.permute.xlu0 %712
        %v715 = vsel %vm601, %v711, 0
        %v718 = vsel %vm601, %v713, 0
        %720 = vmatprep.subr.bf16.mxu0 0
        %721 = vmatpush1.bf16.xpose.msra.mxu0 0
        %722 = vmatprep.subr.bf16.mxu0 0
        %723 = vmatpush1.bf16.xpose.msra.mxu0 0
        %724 = vmatprep.subr.bf16.mxu0 0
        %725 = vmatpush1.bf16.xpose.msra.mxu0 0
        %726 = vmatprep.subr.bf16.mxu0 0
        %727 = vmatpush1.bf16.xpose.msra.mxu0 0
        %728 = vmatprep.subr.bf16.mxu0 0
        %729 = vmatpush1.bf16.xpose.msra.mxu0 0
        %730 = vmatprep.subr.bf16.mxu0 0
        %731 = vmatpush1.bf16.xpose.msra.mxu0 0
        %732 = vmatprep.subr.bf16.mxu0 0
        %733 = vmatpush1.bf16.xpose.msra.mxu0 0
        %734 = vmatprep.subr.bf16.mxu0 0
        %735 = vmatpush1.bf16.xpose.msra.mxu0 %v718
        %736 = vmatprep.subr.bf16.mxu0 0
        %737 = vmatpush2.bf16.xpose.msra.mxu0 0
        %738 = vmatprep.subr.bf16.mxu0 0
        %739 = vmatpush2.bf16.xpose.msra.mxu0 0
        %740 = vmatprep.subr.bf16.mxu0 0
        %741 = vmatpush2.bf16.xpose.msra.mxu0 0
        %742 = vmatprep.subr.bf16.mxu0 0
        %743 = vmatpush2.bf16.xpose.msra.mxu0 0
        %744 = vmatprep.subr.bf16.mxu0 0
        %745 = vmatpush2.bf16.xpose.msra.mxu0 0
        %746 = vmatprep.subr.bf16.mxu0 0
        %747 = vmatpush2.bf16.xpose.msra.mxu0 0
        %748 = vmatprep.subr.bf16.mxu0 0
        %749 = vmatpush2.bf16.xpose.msra.mxu0 0
        %750 = vmatprep.subr.bf16.mxu0 0
        %751 = vmatpush2.bf16.xpose.msra.mxu0 0
        %752 = vmatprep.mubr.bf16.mxu0 0
        %753 = vmatmul.mubr.bf16.gmra.mxu0 %v715
        %v754 = vpop.f32.mrf.mxu0
        %v755 = vadd.f32 0.0, %v754
        %v756 = vpop.f32.mrf.mxu0
        %v757 = vpop.f32.mrf.mxu0
        %v758 = vpop.f32.mrf.mxu0
        %759 = vdwg.mxu0
        %v760 = vsel %vm601, %v755, -inf
        %761 = vmax.xlane.f32.xlu0 %v760
        %v762 = vpop.xlane.xlu0 %761
        %v763 = vsub.f32 %v755, %v762
        %v764 = vmul.f32 %v763, 1.442695
        %v765 = vpow.pop %v764
        %v766 = vsel %vm601, %v765, 0.0
        %767 = vadd.xlane.f32.xlu0 %v766
        %v768 = vpop.xlane.xlu0 %767
        %v769 = vrcp.pop %v768
        %v770 = vmul.f32 %v765, %v769
        %v771 = vpack.c.bf16 %v770, %v770
        %772 = vrot.lane.b32.xlu0 %v597, 56
        %v773 = vpop.permute.xlu0 %772
        %v775 = vsel %vm601, %v771, 0
        %v778 = vsel %vm665, %v773, 0
        %780 = vmatprep.subr.bf16.mxu0 0
        %781 = vmatpush1.bf16.msra.mxu0 0
        %782 = vmatprep.subr.bf16.mxu0 0
        %783 = vmatpush1.bf16.msra.mxu0 0
        %784 = vmatprep.subr.bf16.mxu0 0
        %785 = vmatpush1.bf16.msra.mxu0 0
        %786 = vmatprep.subr.bf16.mxu0 0
        %787 = vmatpush1.bf16.msra.mxu0 0
        %788 = vmatprep.subr.bf16.mxu0 0
        %789 = vmatpush1.bf16.msra.mxu0 0
        %790 = vmatprep.subr.bf16.mxu0 0
        %791 = vmatpush1.bf16.msra.mxu0 0
        %792 = vmatprep.subr.bf16.mxu0 0
        %793 = vmatpush1.bf16.msra.mxu0 0
        %794 = vmatprep.subr.bf16.mxu0 0
        %795 = vmatpush1.bf16.msra.mxu0 %v778
        %796 = vmatprep.subr.bf16.mxu0 0
        %797 = vmatpush2.bf16.msra.mxu0 0
        %798 = vmatprep.subr.bf16.mxu0 0
        %799 = vmatpush2.bf16.msra.mxu0 0
        %800 = vmatprep.subr.bf16.mxu0 0
        %801 = vmatpush2.bf16.msra.mxu0 0
        %802 = vmatprep.subr.bf16.mxu0 0
        %803 = vmatpush2.bf16.msra.mxu0 0
        %804 = vmatprep.subr.bf16.mxu0 0
        %805 = vmatpush2.bf16.msra.mxu0 0
        %806 = vmatprep.subr.bf16.mxu0 0
        %807 = vmatpush2.bf16.msra.mxu0 0
        %808 = vmatprep.subr.bf16.mxu0 0
        %809 = vmatpush2.bf16.msra.mxu0 0
        %810 = vmatprep.subr.bf16.mxu0 0
        %811 = vmatpush2.bf16.msra.mxu0 0
        %812 = vmatprep.mubr.bf16.mxu0 0
        %813 = vmatmul.mubr.bf16.gmra.mxu0 %v775
        %v814 = vpop.f32.mrf.mxu0
        %v815 = vadd.f32 0.0, %v814
        %v816 = vpop.f32.mrf.mxu0
        %v817 = vpop.f32.mrf.mxu0
        %v818 = vpop.f32.mrf.mxu0
        %819 = vdwg.mxu0
        %820 = vrot.lane.b32.xlu0 %v596, 112
        %v821 = vpop.permute.xlu0 %820
        %822 = vrot.lane.b32.xlu0 %v597, 80
        %v823 = vpop.permute.xlu0 %822
        %v825 = vsel %vm601, %v821, 0
        %v828 = vsel %vm601, %v823, 0
        %830 = vmatprep.subr.bf16.mxu0 0
        %831 = vmatpush1.bf16.xpose.msra.mxu0 0
        %832 = vmatprep.subr.bf16.mxu0 0
        %833 = vmatpush1.bf16.xpose.msra.mxu0 0
        %834 = vmatprep.subr.bf16.mxu0 0
        %835 = vmatpush1.bf16.xpose.msra.mxu0 0
        %836 = vmatprep.subr.bf16.mxu0 0
        %837 = vmatpush1.bf16.xpose.msra.mxu0 0
        %838 = vmatprep.subr.bf16.mxu0 0
        %839 = vmatpush1.bf16.xpose.msra.mxu0 0
        %840 = vmatprep.subr.bf16.mxu0 0
        %841 = vmatpush1.bf16.xpose.msra.mxu0 0
        %842 = vmatprep.subr.bf16.mxu0 0
        %843 = vmatpush1.bf16.xpose.msra.mxu0 0
        %844 = vmatprep.subr.bf16.mxu0 0
        %845 = vmatpush1.bf16.xpose.msra.mxu0 %v828
        %846 = vmatprep.subr.bf16.mxu0 0
        %847 = vmatpush2.bf16.xpose.msra.mxu0 0
        %848 = vmatprep.subr.bf16.mxu0 0
        %849 = vmatpush2.bf16.xpose.msra.mxu0 0
        %850 = vmatprep.subr.bf16.mxu0 0
        %851 = vmatpush2.bf16.xpose.msra.mxu0 0
        %852 = vmatprep.subr.bf16.mxu0 0
        %853 = vmatpush2.bf16.xpose.msra.mxu0 0
        %854 = vmatprep.subr.bf16.mxu0 0
        %855 = vmatpush2.bf16.xpose.msra.mxu0 0
        %856 = vmatprep.subr.bf16.mxu0 0
        %857 = vmatpush2.bf16.xpose.msra.mxu0 0
        %858 = vmatprep.subr.bf16.mxu0 0
        %859 = vmatpush2.bf16.xpose.msra.mxu0 0
        %860 = vmatprep.subr.bf16.mxu0 0
        %861 = vmatpush2.bf16.xpose.msra.mxu0 0
        %862 = vmatprep.mubr.bf16.mxu0 0
        %863 = vmatmul.mubr.bf16.gmra.mxu0 %v825
        %v864 = vpop.f32.mrf.mxu0
        %v865 = vadd.f32 0.0, %v864
        %v866 = vpop.f32.mrf.mxu0
        %v867 = vpop.f32.mrf.mxu0
        %v868 = vpop.f32.mrf.mxu0
        %869 = vdwg.mxu0
        %v870 = vsel %vm601, %v865, -inf
        %871 = vmax.xlane.f32.xlu0 %v870
        %v872 = vpop.xlane.xlu0 %871
        %v873 = vsub.f32 %v865, %v872
        %v874 = vmul.f32 %v873, 1.442695
        %v875 = vpow.pop %v874
        %v876 = vsel %vm601, %v875, 0.0
        %877 = vadd.xlane.f32.xlu0 %v876
        %v878 = vpop.xlane.xlu0 %877
        %v879 = vrcp.pop %v878
        %v880 = vmul.f32 %v875, %v879
        %v881 = vpack.c.bf16 %v880, %v880
        %882 = vrot.lane.b32.xlu0 %v597, 48
        %v883 = vpop.permute.xlu0 %882
        %v885 = vsel %vm601, %v881, 0
        %v888 = vsel %vm665, %v883, 0
        %890 = vmatprep.subr.bf16.mxu0 0
        %891 = vmatpush1.bf16.msra.mxu0 0
        %892 = vmatprep.subr.bf16.mxu0 0
        %893 = vmatpush1.bf16.msra.mxu0 0
        %894 = vmatprep.subr.bf16.mxu0 0
        %895 = vmatpush1.bf16.msra.mxu0 0
        %896 = vmatprep.subr.bf16.mxu0 0
        %897 = vmatpush1.bf16.msra.mxu0 0
        %898 = vmatprep.subr.bf16.mxu0 0
        %899 = vmatpush1.bf16.msra.mxu0 0
        %900 = vmatprep.subr.bf16.mxu0 0
        %901 = vmatpush1.bf16.msra.mxu0 0
        %902 = vmatprep.subr.bf16.mxu0 0
        %903 = vmatpush1.bf16.msra.mxu0 0
        %904 = vmatprep.subr.bf16.mxu0 0
        %905 = vmatpush1.bf16.msra.mxu0 %v888
        %906 = vmatprep.subr.bf16.mxu0 0
        %907 = vmatpush2.bf16.msra.mxu0 0
        %908 = vmatprep.subr.bf16.mxu0 0
        %909 = vmatpush2.bf16.msra.mxu0 0
        %910 = vmatprep.subr.bf16.mxu0 0
        %911 = vmatpush2.bf16.msra.mxu0 0
        %912 = vmatprep.subr.bf16.mxu0 0
        %913 = vmatpush2.bf16.msra.mxu0 0
        %914 = vmatprep.subr.bf16.mxu0 0
        %915 = vmatpush2.bf16.msra.mxu0 0
        %916 = vmatprep.subr.bf16.mxu0 0
        %917 = vmatpush2.bf16.msra.mxu0 0
        %918 = vmatprep.subr.bf16.mxu0 0
        %919 = vmatpush2.bf16.msra.mxu0 0
        %920 = vmatprep.subr.bf16.mxu0 0
        %921 = vmatpush2.bf16.msra.mxu0 0
        %922 = vmatprep.mubr.bf16.mxu0 0
        %923 = vmatmul.mubr.bf16.gmra.mxu0 %v885
        %v924 = vpop.f32.mrf.mxu0
        %v925 = vadd.f32 0.0, %v924
        %v926 = vpop.f32.mrf.mxu0
        %v927 = vpop.f32.mrf.mxu0
        %v928 = vpop.f32.mrf.mxu0
        %929 = vdwg.mxu0
        %930 = vrot.lane.b32.xlu0 %v596, 104
        %v931 = vpop.permute.xlu0 %930
        %932 = vrot.lane.b32.xlu0 %v597, 72
        %v933 = vpop.permute.xlu0 %932
        %v935 = vsel %vm601, %v931, 0
        %v938 = vsel %vm601, %v933, 0
        %940 = vmatprep.subr.bf16.mxu0 0
        %941 = vmatpush1.bf16.xpose.msra.mxu0 0
        %942 = vmatprep.subr.bf16.mxu0 0
        %943 = vmatpush1.bf16.xpose.msra.mxu0 0
        %944 = vmatprep.subr.bf16.mxu0 0
        %945 = vmatpush1.bf16.xpose.msra.mxu0 0
        %946 = vmatprep.subr.bf16.mxu0 0
        %947 = vmatpush1.bf16.xpose.msra.mxu0 0
        %948 = vmatprep.subr.bf16.mxu0 0
        %949 = vmatpush1.bf16.xpose.msra.mxu0 0
        %950 = vmatprep.subr.bf16.mxu0 0
        %951 = vmatpush1.bf16.xpose.msra.mxu0 0
        %952 = vmatprep.subr.bf16.mxu0 0
        %953 = vmatpush1.bf16.xpose.msra.mxu0 0
        %954 = vmatprep.subr.bf16.mxu0 0
        %955 = vmatpush1.bf16.xpose.msra.mxu0 %v938
        %956 = vmatprep.subr.bf16.mxu0 0
        %957 = vmatpush2.bf16.xpose.msra.mxu0 0
        %958 = vmatprep.subr.bf16.mxu0 0
        %959 = vmatpush2.bf16.xpose.msra.mxu0 0
        %960 = vmatprep.subr.bf16.mxu0 0
        %961 = vmatpush2.bf16.xpose.msra.mxu0 0
        %962 = vmatprep.subr.bf16.mxu0 0
        %963 = vmatpush2.bf16.xpose.msra.mxu0 0
        %964 = vmatprep.subr.bf16.mxu0 0
        %965 = vmatpush2.bf16.xpose.msra.mxu0 0
        %966 = vmatprep.subr.bf16.mxu0 0
        %967 = vmatpush2.bf16.xpose.msra.mxu0 0
        %968 = vmatprep.subr.bf16.mxu0 0
        %969 = vmatpush2.bf16.xpose.msra.mxu0 0
        %970 = vmatprep.subr.bf16.mxu0 0
        %971 = vmatpush2.bf16.xpose.msra.mxu0 0
        %972 = vmatprep.mubr.bf16.mxu0 0
        %973 = vmatmul.mubr.bf16.gmra.mxu0 %v935
        %v974 = vpop.f32.mrf.mxu0
        %v975 = vadd.f32 0.0, %v974
        %v976 = vpop.f32.mrf.mxu0
        %v977 = vpop.f32.mrf.mxu0
        %v978 = vpop.f32.mrf.mxu0
        %979 = vdwg.mxu0
        %v980 = vsel %vm601, %v975, -inf
        %981 = vmax.xlane.f32.xlu0 %v980
        %v982 = vpop.xlane.xlu0 %981
        %v983 = vsub.f32 %v975, %v982
        %v984 = vmul.f32 %v983, 1.442695
        %v985 = vpow.pop %v984
        %v986 = vsel %vm601, %v985, 0.0
        %987 = vadd.xlane.f32.xlu0 %v986
        %v988 = vpop.xlane.xlu0 %987
        %v989 = vrcp.pop %v988
        %v990 = vmul.f32 %v985, %v989
        %v991 = vpack.c.bf16 %v990, %v990
        %992 = vrot.lane.b32.xlu0 %v597, 40
        %v993 = vpop.permute.xlu0 %992
        %v995 = vsel %vm601, %v991, 0
        %v998 = vsel %vm665, %v993, 0
        %1000 = vmatprep.subr.bf16.mxu0 0
        %1001 = vmatpush1.bf16.msra.mxu0 0
        %1002 = vmatprep.subr.bf16.mxu0 0
        %1003 = vmatpush1.bf16.msra.mxu0 0
        %1004 = vmatprep.subr.bf16.mxu0 0
        %1005 = vmatpush1.bf16.msra.mxu0 0
        %1006 = vmatprep.subr.bf16.mxu0 0
        %1007 = vmatpush1.bf16.msra.mxu0 0
        %1008 = vmatprep.subr.bf16.mxu0 0
        %1009 = vmatpush1.bf16.msra.mxu0 0
        %1010 = vmatprep.subr.bf16.mxu0 0
        %1011 = vmatpush1.bf16.msra.mxu0 0
        %1012 = vmatprep.subr.bf16.mxu0 0
        %1013 = vmatpush1.bf16.msra.mxu0 0
        %1014 = vmatprep.subr.bf16.mxu0 0
        %1015 = vmatpush1.bf16.msra.mxu0 %v998
        %1016 = vmatprep.subr.bf16.mxu0 0
        %1017 = vmatpush2.bf16.msra.mxu0 0
        %1018 = vmatprep.subr.bf16.mxu0 0
        %1019 = vmatpush2.bf16.msra.mxu0 0
        %1020 = vmatprep.subr.bf16.mxu0 0
        %1021 = vmatpush2.bf16.msra.mxu0 0
        %1022 = vmatprep.subr.bf16.mxu0 0
        %1023 = vmatpush2.bf16.msra.mxu0 0
        %1024 = vmatprep.subr.bf16.mxu0 0
        %1025 = vmatpush2.bf16.msra.mxu0 0
        %1026 = vmatprep.subr.bf16.mxu0 0
        %1027 = vmatpush2.bf16.msra.mxu0 0
        %1028 = vmatprep.subr.bf16.mxu0 0
        %1029 = vmatpush2.bf16.msra.mxu0 0
        %1030 = vmatprep.subr.bf16.mxu0 0
        %1031 = vmatpush2.bf16.msra.mxu0 0
        %1032 = vmatprep.mubr.bf16.mxu0 0
        %1033 = vmatmul.mubr.bf16.gmra.mxu0 %v995
        %v1034 = vpop.f32.mrf.mxu0
        %v1035 = vadd.f32 0.0, %v1034
        %v1036 = vpop.f32.mrf.mxu0
        %v1037 = vpop.f32.mrf.mxu0
        %v1038 = vpop.f32.mrf.mxu0
        %1039 = vdwg.mxu0
        %1041 = vrot.lane.b32.xlu0 %v815, 8
        %v1042 = vpop.permute.xlu0 %1041
        %1045 = vrot.lane.b32.xlu0 %v925, 16
        %v1046 = vpop.permute.xlu0 %1045
        %1049 = vrot.lane.b32.xlu0 %v1035, 24
        %v1050 = vpop.permute.xlu0 %1049
        %v1052 = vsel %vm601, %v704, %v1042
        %vm1053 = vcmask 130048
        %v1054 = vsel %vm1053, %v1052, %v1046
        %vm1055 = vcmask 195584
        %v1056 = vsel %vm1055, %v1054, %v1050
        %v1057 = vld [vmem:[%s3] sm:$0xf]
        %v1058 = vld [vmem:[%s3 + $0x4] sm:$0xf]
        %v1059 = vld [vmem:[%s3 + $0x8] sm:$0xf]
        %v1060 = vld [vmem:[%s3 + $0xc] sm:$0xf]
        %v1061 = vpack.c.bf16 %v1056, %v1056
        %v1066 = vunpack.c.l.b16 %v1057
        %v1067 = vunpack.c.l.b16 %v1058
        %v1068 = vunpack.c.l.b16 %v1059
        %v1069 = vunpack.c.l.b16 %v1060
        %v1070 = vpack.c.b16 %v1067, %v1066
        %v1071 = vpack.c.b16 %v1069, %v1068
        %v1075 = vsel %vm551, %v1061, 0
        %1077 = vmatprep.subr.bf16.mxu0 0
        %1078 = vmatpush1.bf16.msra.mxu0 0
        %1079 = vmatprep.subr.bf16.mxu0 0
        %1080 = vmatpush1.bf16.msra.mxu0 0
        %1081 = vmatprep.subr.bf16.mxu0 0
        %1082 = vmatpush1.bf16.msra.mxu0 0
        %1083 = vmatprep.subr.bf16.mxu0 0
        %1084 = vmatpush1.bf16.msra.mxu0 0
        %1085 = vmatprep.subr.bf16.mxu0 0
        %1086 = vmatpush1.bf16.msra.mxu0 0
        %1087 = vmatprep.subr.bf16.mxu0 0
        %1088 = vmatpush1.bf16.msra.mxu0 0
        %1089 = vmatprep.subr.bf16.mxu0 0
        %1090 = vmatpush1.bf16.msra.mxu0 %v1071
        %1091 = vmatprep.subr.bf16.mxu0 0
        %1092 = vmatpush1.bf16.msra.mxu0 %v1070
        %1093 = vmatprep.subr.bf16.mxu0 0
        %1094 = vmatpush2.bf16.msra.mxu0 0
        %1095 = vmatprep.subr.bf16.mxu0 0
        %1096 = vmatpush2.bf16.msra.mxu0 0
        %1097 = vmatprep.subr.bf16.mxu0 0
        %1098 = vmatpush2.bf16.msra.mxu0 0
        %1099 = vmatprep.subr.bf16.mxu0 0
        %1100 = vmatpush2.bf16.msra.mxu0 0
        %1101 = vmatprep.subr.bf16.mxu0 0
        %1102 = vmatpush2.bf16.msra.mxu0 0
        %1103 = vmatprep.subr.bf16.mxu0 0
        %1104 = vmatpush2.bf16.msra.mxu0 0
        %1105 = vmatprep.subr.bf16.mxu0 0
        %1106 = vmatpush2.bf16.msra.mxu0 0
        %1107 = vmatprep.subr.bf16.mxu0 0
        %1108 = vmatpush2.bf16.msra.mxu0 0
        %1109 = vmatprep.mubr.bf16.mxu0 0
        %1110 = vmatmul.mubr.bf16.gmra.mxu0 %v1075
        %v1111 = vpop.f32.mrf.mxu0
        %v1112 = vadd.f32 %v531, %v1111
        %v1113 = vpop.f32.mrf.mxu0
        %v1114 = vpop.f32.mrf.mxu0
        %v1115 = vpop.f32.mrf.mxu0
        %1116 = vdwg.mxu0
        %v1117 = vadd.f32 %v1112, %v529
        %v1118 = vsel %vm551, %v1117, 0.0
        %1119 = vadd.xlane.f32.xlu0 %v1118
        %v1120 = vpop.xlane.xlu0 %1119
        %v1121 = vrcp.pop 32.0
        %v1122 = vmul.f32 %v1120, %v1121
        %v1123 = vsub.f32 %v1117, %v1122
        %v1124 = vmul.f32 %v1123, %v1123
        %v1125 = vsel %vm551, %v1124, 0.0
        %1126 = vadd.xlane.f32.xlu0 %v1125
        %v1127 = vpop.xlane.xlu0 %1126
        %v1128 = vmul.f32 %v1127, %v1121
        %v1129 = vadd.f32 %v1128, 1e-12
        %v1130 = vrsqrt.pop %v1129
        %v1131 = vmul.f32 %v1123, %v1130
        %v1132 = vmul.f32 %v1131, %v532
        %v1133 = vadd.f32 %v1132, %v533
        %v1134 = vpack.c.bf16 %v1133, %v1133
        %v1135 = vld [vmem:[%s1 + $0x4] ss:$0 sm:$0xff]
        %v1136 = vld [vmem:[%s1 + $0x5] ss:$0 sm:$0xff]
        %v1137 = vld [vmem:[%s1 + $0x6] ss:$0 sm:$0xff]
        %v1138 = vld [vmem:[%s1 + $0x7] ss:$0 sm:$0xff]
        %v1139 = vld [vmem:[#allocation7] sm:$0xf]
        %v1140 = vld [vmem:[#allocation7 + $0x4] sm:$0xf]
        %v1141 = vld [vmem:[#allocation7 + $0x8] sm:$0xf]
        %v1142 = vld [vmem:[#allocation7 + $0xc] sm:$0xf]
        %v1147 = vunpack.c.l.b16 %v1139
        %v1148 = vunpack.c.l.b16 %v1140
        %v1149 = vunpack.c.l.b16 %v1141
        %v1150 = vunpack.c.l.b16 %v1142
        %v1151 = vpack.c.b16 %v1148, %v1147
        %v1152 = vpack.c.b16 %v1150, %v1149
        %v1156 = vsel %vm551, %v1134, 0
        %1158 = vmatprep.subr.bf16.mxu0 0
        %1159 = vmatpush1.bf16.msra.mxu0 0
        %1160 = vmatprep.subr.bf16.mxu0 0
        %1161 = vmatpush1.bf16.msra.mxu0 0
        %1162 = vmatprep.subr.bf16.mxu0 0
        %1163 = vmatpush1.bf16.msra.mxu0 0
        %1164 = vmatprep.subr.bf16.mxu0 0
        %1165 = vmatpush1.bf16.msra.mxu0 0
        %1166 = vmatprep.subr.bf16.mxu0 0
        %1167 = vmatpush1.bf16.msra.mxu0 0
        %1168 = vmatprep.subr.bf16.mxu0 0
        %1169 = vmatpush1.bf16.msra.mxu0 0
        %1170 = vmatprep.subr.bf16.mxu0 0
        %1171 = vmatpush1.bf16.msra.mxu0 %v1152
        %1172 = vmatprep.subr.bf16.mxu0 0
        %1173 = vmatpush1.bf16.msra.mxu0 %v1151
        %1174 = vmatprep.subr.bf16.mxu0 0
        %1175 = vmatpush2.bf16.msra.mxu0 0
        %1176 = vmatprep.subr.bf16.mxu0 0
        %1177 = vmatpush2.bf16.msra.mxu0 0
        %1178 = vmatprep.subr.bf16.mxu0 0
        %1179 = vmatpush2.bf16.msra.mxu0 0
        %1180 = vmatprep.subr.bf16.mxu0 0
        %1181 = vmatpush2.bf16.msra.mxu0 0
        %1182 = vmatprep.subr.bf16.mxu0 0
        %1183 = vmatpush2.bf16.msra.mxu0 0
        %1184 = vmatprep.subr.bf16.mxu0 0
        %1185 = vmatpush2.bf16.msra.mxu0 0
        %1186 = vmatprep.subr.bf16.mxu0 0
        %1187 = vmatpush2.bf16.msra.mxu0 0
        %1188 = vmatprep.subr.bf16.mxu0 0
        %1189 = vmatpush2.bf16.msra.mxu0 0
        %1190 = vmatprep.mubr.bf16.mxu0 0
        %1191 = vmatmul.mubr.bf16.gmra.mxu0 %v1156
        %v1192 = vpop.f32.mrf.mxu0
        %v1193 = vadd.f32 %v1135, %v1192
        %v1194 = vpop.f32.mrf.mxu0
        %v1195 = vpop.f32.mrf.mxu0
        %v1196 = vpop.f32.mrf.mxu0
        %1197 = vdwg.mxu0
        %v1198 = vmul.f32 %v1193, 0.5
        %v1199 = vmul.f32 %v1193, 0.044715
        %v1200 = vmul.f32 %v1199, %v1193
        %v1201 = vmul.f32 %v1200, %v1193
        %v1202 = vadd.f32 %v1193, %v1201
        %v1203 = vmul.f32 %v1202, 0.7978846
        %v1204 = vtanh.pop %v1203
        %v1205 = vadd.f32 %v1204, 1.0
        %v1206 = vmul.f32 %v1198, %v1205
        %v1207 = vld [vmem:[%s5] sm:$0xf]
        %v1208 = vld [vmem:[%s5 + $0x4] sm:$0xf]
        %v1209 = vld [vmem:[%s5 + $0x8] sm:$0xf]
        %v1210 = vld [vmem:[%s5 + $0xc] sm:$0xf]
        %v1211 = vld [vmem:[%s5 + $0x10] sm:$0xf]
        %v1212 = vld [vmem:[%s5 + $0x14] sm:$0xf]
        %v1213 = vld [vmem:[%s5 + $0x18] sm:$0xf]
        %v1214 = vld [vmem:[%s5 + $0x1c] sm:$0xf]
        %v1215 = vpack.c.bf16 %v1206, %v1206
        %v1224 = vunpack.c.l.b16 %v1207
        %v1225 = vunpack.c.l.b16 %v1208
        %v1226 = vunpack.c.l.b16 %v1209
        %v1227 = vunpack.c.l.b16 %v1210
        %v1228 = vunpack.c.l.b16 %v1211
        %v1229 = vunpack.c.l.b16 %v1212
        %v1230 = vunpack.c.l.b16 %v1213
        %v1231 = vunpack.c.l.b16 %v1214
        %v1232 = vpack.c.b16 %v1225, %v1224
        %v1233 = vpack.c.b16 %v1227, %v1226
        %v1234 = vpack.c.b16 %v1229, %v1228
        %v1235 = vpack.c.b16 %v1231, %v1230
        %vm1240 = vcmask 523264
        %v1242 = vsel %vm1240, %v1215, 0
        %1244 = vmatprep.subr.bf16.mxu0 0
        %1245 = vmatpush1.bf16.msra.mxu0 0
        %1246 = vmatprep.subr.bf16.mxu0 0
        %1247 = vmatpush1.bf16.msra.mxu0 0
        %1248 = vmatprep.subr.bf16.mxu0 0
        %1249 = vmatpush1.bf16.msra.mxu0 0
        %1250 = vmatprep.subr.bf16.mxu0 0
        %1251 = vmatpush1.bf16.msra.mxu0 0
        %1252 = vmatprep.subr.bf16.mxu0 0
        %1253 = vmatpush1.bf16.msra.mxu0 %v1235
        %1254 = vmatprep.subr.bf16.mxu0 0
        %1255 = vmatpush1.bf16.msra.mxu0 %v1234
        %1256 = vmatprep.subr.bf16.mxu0 0
        %1257 = vmatpush1.bf16.msra.mxu0 %v1233
        %1258 = vmatprep.subr.bf16.mxu0 0
        %1259 = vmatpush1.bf16.msra.mxu0 %v1232
        %1260 = vmatprep.subr.bf16.mxu0 0
        %1261 = vmatpush2.bf16.msra.mxu0 0
        %1262 = vmatprep.subr.bf16.mxu0 0
        %1263 = vmatpush2.bf16.msra.mxu0 0
        %1264 = vmatprep.subr.bf16.mxu0 0
        %1265 = vmatpush2.bf16.msra.mxu0 0
        %1266 = vmatprep.subr.bf16.mxu0 0
        %1267 = vmatpush2.bf16.msra.mxu0 0
        %1268 = vmatprep.subr.bf16.mxu0 0
        %1269 = vmatpush2.bf16.msra.mxu0 0
        %1270 = vmatprep.subr.bf16.mxu0 0
        %1271 = vmatpush2.bf16.msra.mxu0 0
        %1272 = vmatprep.subr.bf16.mxu0 0
        %1273 = vmatpush2.bf16.msra.mxu0 0
        %1274 = vmatprep.subr.bf16.mxu0 0
        %1275 = vmatpush2.bf16.msra.mxu0 0
        %1276 = vmatprep.mubr.bf16.mxu0 0
        %1277 = vmatmul.mubr.bf16.gmra.mxu0 %v1242
        %v1278 = vpop.f32.mrf.mxu0
        %v1279 = vadd.f32 %v1136, %v1278
        %v1280 = vpop.f32.mrf.mxu0
        %v1281 = vpop.f32.mrf.mxu0
        %v1282 = vpop.f32.mrf.mxu0
        %1283 = vdwg.mxu0
        %v1284 = vadd.f32 %v1279, %v1133
        %v1285 = vsel %vm551, %v1284, 0.0
        %1286 = vadd.xlane.f32.xlu0 %v1285
        %v1287 = vpop.xlane.xlu0 %1286
        %v1288 = vmul.f32 %v1287, %v1121
        %v1289 = vsub.f32 %v1284, %v1288
        %v1290 = vmul.f32 %v1289, %v1289
        %v1291 = vsel %vm551, %v1290, 0.0
        %1292 = vadd.xlane.f32.xlu0 %v1291
        %v1293 = vpop.xlane.xlu0 %1292
        %v1294 = vmul.f32 %v1293, %v1121
        %v1295 = vadd.f32 %v1294, 1e-12
        %v1296 = vrsqrt.pop %v1295
        %v1297 = vmul.f32 %v1289, %v1296
        %v1298 = vmul.f32 %v1297, %v1137
        %v1299 = vadd.f32 %v1298, %v1138
        %v1300 = vld [vmem:[%s1 + $0x18] ss:$0 sm:$0xff]
        %v1301 = vld [vmem:[%s1 + $0x19] ss:$0 sm:$0xff]
        %v1302 = vld [vmem:[%s1 + $0x1a] ss:$0 sm:$0xff]
        %v1303 = vld [vmem:[%s1 + $0x1b] ss:$0 sm:$0xff]
        %v1304 = vpack.c.bf16 %v1299, %v1299
        %v1305 = vld [vmem:[#allocation8] sm:$0xf]
        %v1306 = vld [vmem:[#allocation8 + $0x4] sm:$0xf]
        %v1307 = vld [vmem:[#allocation8 + $0x8] sm:$0xf]
        %v1308 = vld [vmem:[#allocation8 + $0xc] sm:$0xf]
        %v1313 = vunpack.c.l.b16 %v1305
        %v1314 = vunpack.c.l.b16 %v1306
        %v1315 = vunpack.c.l.b16 %v1307
        %v1316 = vunpack.c.l.b16 %v1308
        %v1317 = vpack.c.b16 %v1314, %v1313
        %v1318 = vpack.c.b16 %v1316, %v1315
        %v1322 = vsel %vm551, %v1304, 0
        %1324 = vmatprep.subr.bf16.mxu0 0
        %1325 = vmatpush1.bf16.msra.mxu0 0
        %1326 = vmatprep.subr.bf16.mxu0 0
        %1327 = vmatpush1.bf16.msra.mxu0 0
        %1328 = vmatprep.subr.bf16.mxu0 0
        %1329 = vmatpush1.bf16.msra.mxu0 0
        %1330 = vmatprep.subr.bf16.mxu0 0
        %1331 = vmatpush1.bf16.msra.mxu0 0
        %1332 = vmatprep.subr.bf16.mxu0 0
        %1333 = vmatpush1.bf16.msra.mxu0 0
        %1334 = vmatprep.subr.bf16.mxu0 0
        %1335 = vmatpush1.bf16.msra.mxu0 0
        %1336 = vmatprep.subr.bf16.mxu0 0
        %1337 = vmatpush1.bf16.msra.mxu0 %v1318
        %1338 = vmatprep.subr.bf16.mxu0 0
        %1339 = vmatpush1.bf16.msra.mxu0 %v1317
        %1340 = vmatprep.subr.bf16.mxu0 0
        %1341 = vmatpush2.bf16.msra.mxu0 0
        %1342 = vmatprep.subr.bf16.mxu0 0
        %1343 = vmatpush2.bf16.msra.mxu0 0
        %1344 = vmatprep.subr.bf16.mxu0 0
        %1345 = vmatpush2.bf16.msra.mxu0 0
        %1346 = vmatprep.subr.bf16.mxu0 0
        %1347 = vmatpush2.bf16.msra.mxu0 0
        %1348 = vmatprep.subr.bf16.mxu0 0
        %1349 = vmatpush2.bf16.msra.mxu0 0
        %1350 = vmatprep.subr.bf16.mxu0 0
        %1351 = vmatpush2.bf16.msra.mxu0 0
        %1352 = vmatprep.subr.bf16.mxu0 0
        %1353 = vmatpush2.bf16.msra.mxu0 0
        %1354 = vmatprep.subr.bf16.mxu0 0
        %1355 = vmatpush2.bf16.msra.mxu0 0
        %1356 = vmatprep.mubr.bf16.mxu0 0
        %1357 = vmatmul.mubr.bf16.gmra.mxu0 %v1322
        %v1358 = vpop.f32.mrf.mxu0
        %v1359 = vadd.f32 %v1300, %v1358
        %v1360 = vpop.f32.mrf.mxu0
        %v1361 = vpop.f32.mrf.mxu0
        %v1362 = vpop.f32.mrf.mxu0
        %1363 = vdwg.mxu0
        %v1364 = vmul.f32 %v1359, 0.35355338
        %v1365 = vpack.c.bf16 %v1364, %v1364
        %v1366 = vpack.c.bf16 %v1359, %v1359
        %1368 = vrot.lane.b32.xlu0 %v1366, 96
        %v1369 = vpop.permute.xlu0 %1368
        %v1371 = vsel %vm601, %v1365, 0
        %v1374 = vsel %vm601, %v1369, 0
        %1376 = vmatprep.subr.bf16.mxu0 0
        %1377 = vmatpush1.bf16.xpose.msra.mxu0 0
        %1378 = vmatprep.subr.bf16.mxu0 0
        %1379 = vmatpush1.bf16.xpose.msra.mxu0 0
        %1380 = vmatprep.subr.bf16.mxu0 0
        %1381 = vmatpush1.bf16.xpose.msra.mxu0 0
        %1382 = vmatprep.subr.bf16.mxu0 0
        %1383 = vmatpush1.bf16.xpose.msra.mxu0 0
        %1384 = vmatprep.subr.bf16.mxu0 0
        %1385 = vmatpush1.bf16.xpose.msra.mxu0 0
        %1386 = vmatprep.subr.bf16.mxu0 0
        %1387 = vmatpush1.bf16.xpose.msra.mxu0 0
        %1388 = vmatprep.subr.bf16.mxu0 0
        %1389 = vmatpush1.bf16.xpose.msra.mxu0 0
        %1390 = vmatprep.subr.bf16.mxu0 0
        %1391 = vmatpush1.bf16.xpose.msra.mxu0 %v1374
        %1392 = vmatprep.subr.bf16.mxu0 0
        %1393 = vmatpush2.bf16.xpose.msra.mxu0 0
        %1394 = vmatprep.subr.bf16.mxu0 0
        %1395 = vmatpush2.bf16.xpose.msra.mxu0 0
        %1396 = vmatprep.subr.bf16.mxu0 0
        %1397 = vmatpush2.bf16.xpose.msra.mxu0 0
        %1398 = vmatprep.subr.bf16.mxu0 0
        %1399 = vmatpush2.bf16.xpose.msra.mxu0 0
        %1400 = vmatprep.subr.bf16.mxu0 0
        %1401 = vmatpush2.bf16.xpose.msra.mxu0 0
        %1402 = vmatprep.subr.bf16.mxu0 0
        %1403 = vmatpush2.bf16.xpose.msra.mxu0 0
        %1404 = vmatprep.subr.bf16.mxu0 0
        %1405 = vmatpush2.bf16.xpose.msra.mxu0 0
        %1406 = vmatprep.subr.bf16.mxu0 0
        %1407 = vmatpush2.bf16.xpose.msra.mxu0 0
        %1408 = vmatprep.mubr.bf16.mxu0 0
        %1409 = vmatmul.mubr.bf16.gmra.mxu0 %v1371
        %v1410 = vpop.f32.mrf.mxu0
        %v1411 = vadd.f32 0.0, %v1410
        %v1412 = vpop.f32.mrf.mxu0
        %v1413 = vpop.f32.mrf.mxu0
        %v1414 = vpop.f32.mrf.mxu0
        %1415 = vdwg.mxu0
        %v1416 = vsel %vm601, %v1411, -inf
        %1417 = vmax.xlane.f32.xlu0 %v1416
        %v1418 = vpop.xlane.xlu0 %1417
        %v1419 = vsub.f32 %v1411, %v1418
        %v1420 = vmul.f32 %v1419, 1.442695
        %v1421 = vpow.pop %v1420
        %v1422 = vsel %vm601, %v1421, 0.0
        %1423 = vadd.xlane.f32.xlu0 %v1422
        %v1424 = vpop.xlane.xlu0 %1423
        %v1425 = vrcp.pop %v1424
        %v1426 = vmul.f32 %v1421, %v1425
        %v1427 = vpack.c.bf16 %v1426, %v1426
        %1428 = vrot.lane.b32.xlu0 %v1366, 64
        %v1429 = vpop.permute.xlu0 %1428
        %v1431 = vsel %vm601, %v1427, 0
        %v1434 = vsel %vm665, %v1429, 0
        %1436 = vmatprep.subr.bf16.mxu0 0
        %1437 = vmatpush1.bf16.msra.mxu0 0
        %1438 = vmatprep.subr.bf16.mxu0 0
        %1439 = vmatpush1.bf16.msra.mxu0 0
        %1440 = vmatprep.subr.bf16.mxu0 0
        %1441 = vmatpush1.bf16.msra.mxu0 0
        %1442 = vmatprep.subr.bf16.mxu0 0
        %1443 = vmatpush1.bf16.msra.mxu0 0
        %1444 = vmatprep.subr.bf16.mxu0 0
        %1445 = vmatpush1.bf16.msra.mxu0 0
        %1446 = vmatprep.subr.bf16.mxu0 0
        %1447 = vmatpush1.bf16.msra.mxu0 0
        %1448 = vmatprep.subr.bf16.mxu0 0
        %1449 = vmatpush1.bf16.msra.mxu0 0
        %1450 = vmatprep.subr.bf16.mxu0 0
        %1451 = vmatpush1.bf16.msra.mxu0 %v1434
        %1452 = vmatprep.subr.bf16.mxu0 0
        %1453 = vmatpush2.bf16.msra.mxu0 0
        %1454 = vmatprep.subr.bf16.mxu0 0
        %1455 = vmatpush2.bf16.msra.mxu0 0
        %1456 = vmatprep.subr.bf16.mxu0 0
        %1457 = vmatpush2.bf16.msra.mxu0 0
        %1458 = vmatprep.subr.bf16.mxu0 0
        %1459 = vmatpush2.bf16.msra.mxu0 0
        %1460 = vmatprep.subr.bf16.mxu0 0
        %1461 = vmatpush2.bf16.msra.mxu0 0
        %1462 = vmatprep.subr.bf16.mxu0 0
        %1463 = vmatpush2.bf16.msra.mxu0 0
        %1464 = vmatprep.subr.bf16.mxu0 0
        %1465 = vmatpush2.bf16.msra.mxu0 0
        %1466 = vmatprep.subr.bf16.mxu0 0
        %1467 = vmatpush2.bf16.msra.mxu0 0
        %1468 = vmatprep.mubr.bf16.mxu0 0
        %1469 = vmatmul.mubr.bf16.gmra.mxu0 %v1431
        %v1470 = vpop.f32.mrf.mxu0
        %v1471 = vadd.f32 0.0, %v1470
        %v1472 = vpop.f32.mrf.mxu0
        %v1473 = vpop.f32.mrf.mxu0
        %v1474 = vpop.f32.mrf.mxu0
        %1475 = vdwg.mxu0
        %1477 = vrot.lane.b32.xlu0 %v1365, 120
        %v1478 = vpop.permute.xlu0 %1477
        %1479 = vrot.lane.b32.xlu0 %v1366, 88
        %v1480 = vpop.permute.xlu0 %1479
        %v1482 = vsel %vm601, %v1478, 0
        %v1485 = vsel %vm601, %v1480, 0
        %1487 = vmatprep.subr.bf16.mxu0 0
        %1488 = vmatpush1.bf16.xpose.msra.mxu0 0
        %1489 = vmatprep.subr.bf16.mxu0 0
        %1490 = vmatpush1.bf16.xpose.msra.mxu0 0
        %1491 = vmatprep.subr.bf16.mxu0 0
        %1492 = vmatpush1.bf16.xpose.msra.mxu0 0
        %1493 = vmatprep.subr.bf16.mxu0 0
        %1494 = vmatpush1.bf16.xpose.msra.mxu0 0
        %1495 = vmatprep.subr.bf16.mxu0 0
        %1496 = vmatpush1.bf16.xpose.msra.mxu0 0
        %1497 = vmatprep.subr.bf16.mxu0 0
        %1498 = vmatpush1.bf16.xpose.msra.mxu0 0
        %1499 = vmatprep.subr.bf16.mxu0 0
        %1500 = vmatpush1.bf16.xpose.msra.mxu0 0
        %1501 = vmatprep.subr.bf16.mxu0 0
        %1502 = vmatpush1.bf16.xpose.msra.mxu0 %v1485
        %1503 = vmatprep.subr.bf16.mxu0 0
        %1504 = vmatpush2.bf16.xpose.msra.mxu0 0
        %1505 = vmatprep.subr.bf16.mxu0 0
        %1506 = vmatpush2.bf16.xpose.msra.mxu0 0
        %1507 = vmatprep.subr.bf16.mxu0 0
        %1508 = vmatpush2.bf16.xpose.msra.mxu0 0
        %1509 = vmatprep.subr.bf16.mxu0 0
        %1510 = vmatpush2.bf16.xpose.msra.mxu0 0
        %1511 = vmatprep.subr.bf16.mxu0 0
        %1512 = vmatpush2.bf16.xpose.msra.mxu0 0
        %1513 = vmatprep.subr.bf16.mxu0 0
        %1514 = vmatpush2.bf16.xpose.msra.mxu0 0
        %1515 = vmatprep.subr.bf16.mxu0 0
        %1516 = vmatpush2.bf16.xpose.msra.mxu0 0
        %1517 = vmatprep.subr.bf16.mxu0 0
        %1518 = vmatpush2.bf16.xpose.msra.mxu0 0
        %1519 = vmatprep.mubr.bf16.mxu0 0
        %1520 = vmatmul.mubr.bf16.gmra.mxu0 %v1482
        %v1521 = vpop.f32.mrf.mxu0
        %v1522 = vadd.f32 0.0, %v1521
        %v1523 = vpop.f32.mrf.mxu0
        %v1524 = vpop.f32.mrf.mxu0
        %v1525 = vpop.f32.mrf.mxu0
        %1526 = vdwg.mxu0
        %v1527 = vsel %vm601, %v1522, -inf
        %1528 = vmax.xlane.f32.xlu0 %v1527
        %v1529 = vpop.xlane.xlu0 %1528
        %v1530 = vsub.f32 %v1522, %v1529
        %v1531 = vmul.f32 %v1530, 1.442695
        %v1532 = vpow.pop %v1531
        %v1533 = vsel %vm601, %v1532, 0.0
        %1534 = vadd.xlane.f32.xlu0 %v1533
        %v1535 = vpop.xlane.xlu0 %1534
        %v1536 = vrcp.pop %v1535
        %v1537 = vmul.f32 %v1532, %v1536
        %v1538 = vpack.c.bf16 %v1537, %v1537
        %1539 = vrot.lane.b32.xlu0 %v1366, 56
        %v1540 = vpop.permute.xlu0 %1539
        %v1542 = vsel %vm601, %v1538, 0
        %v1545 = vsel %vm665, %v1540, 0
        %1547 = vmatprep.subr.bf16.mxu0 0
        %1548 = vmatpush1.bf16.msra.mxu0 0
        %1549 = vmatprep.subr.bf16.mxu0 0
        %1550 = vmatpush1.bf16.msra.mxu0 0
        %1551 = vmatprep.subr.bf16.mxu0 0
        %1552 = vmatpush1.bf16.msra.mxu0 0
        %1553 = vmatprep.subr.bf16.mxu0 0
        %1554 = vmatpush1.bf16.msra.mxu0 0
        %1555 = vmatprep.subr.bf16.mxu0 0
        %1556 = vmatpush1.bf16.msra.mxu0 0
        %1557 = vmatprep.subr.bf16.mxu0 0
        %1558 = vmatpush1.bf16.msra.mxu0 0
        %1559 = vmatprep.subr.bf16.mxu0 0
        %1560 = vmatpush1.bf16.msra.mxu0 0
        %1561 = vmatprep.subr.bf16.mxu0 0
        %1562 = vmatpush1.bf16.msra.mxu0 %v1545
        %1563 = vmatprep.subr.bf16.mxu0 0
        %1564 = vmatpush2.bf16.msra.mxu0 0
        %1565 = vmatprep.subr.bf16.mxu0 0
        %1566 = vmatpush2.bf16.msra.mxu0 0
        %1567 = vmatprep.subr.bf16.mxu0 0
        %1568 = vmatpush2.bf16.msra.mxu0 0
        %1569 = vmatprep.subr.bf16.mxu0 0
        %1570 = vmatpush2.bf16.msra.mxu0 0
        %1571 = vmatprep.subr.bf16.mxu0 0
        %1572 = vmatpush2.bf16.msra.mxu0 0
        %1573 = vmatprep.subr.bf16.mxu0 0
        %1574 = vmatpush2.bf16.msra.mxu0 0
        %1575 = vmatprep.subr.bf16.mxu0 0
        %1576 = vmatpush2.bf16.msra.mxu0 0
        %1577 = vmatprep.subr.bf16.mxu0 0
        %1578 = vmatpush2.bf16.msra.mxu0 0
        %1579 = vmatprep.mubr.bf16.mxu0 0
        %1580 = vmatmul.mubr.bf16.gmra.mxu0 %v1542
        %v1581 = vpop.f32.mrf.mxu0
        %v1582 = vadd.f32 0.0, %v1581
        %v1583 = vpop.f32.mrf.mxu0
        %v1584 = vpop.f32.mrf.mxu0
        %v1585 = vpop.f32.mrf.mxu0
        %1586 = vdwg.mxu0
        %1587 = vrot.lane.b32.xlu0 %v1365, 112
        %v1588 = vpop.permute.xlu0 %1587
        %1589 = vrot.lane.b32.xlu0 %v1366, 80
        %v1590 = vpop.permute.xlu0 %1589
        %v1592 = vsel %vm601, %v1588, 0
        %v1595 = vsel %vm601, %v1590, 0
        %1597 = vmatprep.subr.bf16.mxu0 0
        %1598 = vmatpush1.bf16.xpose.msra.mxu0 0
        %1599 = vmatprep.subr.bf16.mxu0 0
        %1600 = vmatpush1.bf16.xpose.msra.mxu0 0
        %1601 = vmatprep.subr.bf16.mxu0 0
        %1602 = vmatpush1.bf16.xpose.msra.mxu0 0
        %1603 = vmatprep.subr.bf16.mxu0 0
        %1604 = vmatpush1.bf16.xpose.msra.mxu0 0
        %1605 = vmatprep.subr.bf16.mxu0 0
        %1606 = vmatpush1.bf16.xpose.msra.mxu0 0
        %1607 = vmatprep.subr.bf16.mxu0 0
        %1608 = vmatpush1.bf16.xpose.msra.mxu0 0
        %1609 = vmatprep.subr.bf16.mxu0 0
        %1610 = vmatpush1.bf16.xpose.msra.mxu0 0
        %1611 = vmatprep.subr.bf16.mxu0 0
        %1612 = vmatpush1.bf16.xpose.msra.mxu0 %v1595
        %1613 = vmatprep.subr.bf16.mxu0 0
        %1614 = vmatpush2.bf16.xpose.msra.mxu0 0
        %1615 = vmatprep.subr.bf16.mxu0 0
        %1616 = vmatpush2.bf16.xpose.msra.mxu0 0
        %1617 = vmatprep.subr.bf16.mxu0 0
        %1618 = vmatpush2.bf16.xpose.msra.mxu0 0
        %1619 = vmatprep.subr.bf16.mxu0 0
        %1620 = vmatpush2.bf16.xpose.msra.mxu0 0
        %1621 = vmatprep.subr.bf16.mxu0 0
        %1622 = vmatpush2.bf16.xpose.msra.mxu0 0
        %1623 = vmatprep.subr.bf16.mxu0 0
        %1624 = vmatpush2.bf16.xpose.msra.mxu0 0
        %1625 = vmatprep.subr.bf16.mxu0 0
        %1626 = vmatpush2.bf16.xpose.msra.mxu0 0
        %1627 = vmatprep.subr.bf16.mxu0 0
        %1628 = vmatpush2.bf16.xpose.msra.mxu0 0
        %1629 = vmatprep.mubr.bf16.mxu0 0
        %1630 = vmatmul.mubr.bf16.gmra.mxu0 %v1592
        %v1631 = vpop.f32.mrf.mxu0
        %v1632 = vadd.f32 0.0, %v1631
        %v1633 = vpop.f32.mrf.mxu0
        %v1634 = vpop.f32.mrf.mxu0
        %v1635 = vpop.f32.mrf.mxu0
        %1636 = vdwg.mxu0
        %v1637 = vsel %vm601, %v1632, -inf
        %1638 = vmax.xlane.f32.xlu0 %v1637
        %v1639 = vpop.xlane.xlu0 %1638
        %v1640 = vsub.f32 %v1632, %v1639
        %v1641 = vmul.f32 %v1640, 1.442695
        %v1642 = vpow.pop %v1641
        %v1643 = vsel %vm601, %v1642, 0.0
        %1644 = vadd.xlane.f32.xlu0 %v1643
        %v1645 = vpop.xlane.xlu0 %1644
        %v1646 = vrcp.pop %v1645
        %v1647 = vmul.f32 %v1642, %v1646
        %v1648 = vpack.c.bf16 %v1647, %v1647
        %1649 = vrot.lane.b32.xlu0 %v1366, 48
        %v1650 = vpop.permute.xlu0 %1649
        %v1652 = vsel %vm601, %v1648, 0
        %v1655 = vsel %vm665, %v1650, 0
        %1657 = vmatprep.subr.bf16.mxu0 0
        %1658 = vmatpush1.bf16.msra.mxu0 0
        %1659 = vmatprep.subr.bf16.mxu0 0
        %1660 = vmatpush1.bf16.msra.mxu0 0
        %1661 = vmatprep.subr.bf16.mxu0 0
        %1662 = vmatpush1.bf16.msra.mxu0 0
        %1663 = vmatprep.subr.bf16.mxu0 0
        %1664 = vmatpush1.bf16.msra.mxu0 0
        %1665 = vmatprep.subr.bf16.mxu0 0
        %1666 = vmatpush1.bf16.msra.mxu0 0
        %1667 = vmatprep.subr.bf16.mxu0 0
        %1668 = vmatpush1.bf16.msra.mxu0 0
        %1669 = vmatprep.subr.bf16.mxu0 0
        %1670 = vmatpush1.bf16.msra.mxu0 0
        %1671 = vmatprep.subr.bf16.mxu0 0
        %1672 = vmatpush1.bf16.msra.mxu0 %v1655
        %1673 = vmatprep.subr.bf16.mxu0 0
        %1674 = vmatpush2.bf16.msra.mxu0 0
        %1675 = vmatprep.subr.bf16.mxu0 0
        %1676 = vmatpush2.bf16.msra.mxu0 0
        %1677 = vmatprep.subr.bf16.mxu0 0
        %1678 = vmatpush2.bf16.msra.mxu0 0
        %1679 = vmatprep.subr.bf16.mxu0 0
        %1680 = vmatpush2.bf16.msra.mxu0 0
        %1681 = vmatprep.subr.bf16.mxu0 0
        %1682 = vmatpush2.bf16.msra.mxu0 0
        %1683 = vmatprep.subr.bf16.mxu0 0
        %1684 = vmatpush2.bf16.msra.mxu0 0
        %1685 = vmatprep.subr.bf16.mxu0 0
        %1686 = vmatpush2.bf16.msra.mxu0 0
        %1687 = vmatprep.subr.bf16.mxu0 0
        %1688 = vmatpush2.bf16.msra.mxu0 0
        %1689 = vmatprep.mubr.bf16.mxu0 0
        %1690 = vmatmul.mubr.bf16.gmra.mxu0 %v1652
        %v1691 = vpop.f32.mrf.mxu0
        %v1692 = vadd.f32 0.0, %v1691
        %v1693 = vpop.f32.mrf.mxu0
        %v1694 = vpop.f32.mrf.mxu0
        %v1695 = vpop.f32.mrf.mxu0
        %1696 = vdwg.mxu0
        %1697 = vrot.lane.b32.xlu0 %v1365, 104
        %v1698 = vpop.permute.xlu0 %1697
        %1699 = vrot.lane.b32.xlu0 %v1366, 72
        %v1700 = vpop.permute.xlu0 %1699
        %v1702 = vsel %vm601, %v1698, 0
        %v1705 = vsel %vm601, %v1700, 0
        %1707 = vmatprep.subr.bf16.mxu0 0
        %1708 = vmatpush1.bf16.xpose.msra.mxu0 0
        %1709 = vmatprep.subr.bf16.mxu0 0
        %1710 = vmatpush1.bf16.xpose.msra.mxu0 0
        %1711 = vmatprep.subr.bf16.mxu0 0
        %1712 = vmatpush1.bf16.xpose.msra.mxu0 0
        %1713 = vmatprep.subr.bf16.mxu0 0
        %1714 = vmatpush1.bf16.xpose.msra.mxu0 0
        %1715 = vmatprep.subr.bf16.mxu0 0
        %1716 = vmatpush1.bf16.xpose.msra.mxu0 0
        %1717 = vmatprep.subr.bf16.mxu0 0
        %1718 = vmatpush1.bf16.xpose.msra.mxu0 0
        %1719 = vmatprep.subr.bf16.mxu0 0
        %1720 = vmatpush1.bf16.xpose.msra.mxu0 0
        %1721 = vmatprep.subr.bf16.mxu0 0
        %1722 = vmatpush1.bf16.xpose.msra.mxu0 %v1705
        %1723 = vmatprep.subr.bf16.mxu0 0
        %1724 = vmatpush2.bf16.xpose.msra.mxu0 0
        %1725 = vmatprep.subr.bf16.mxu0 0
        %1726 = vmatpush2.bf16.xpose.msra.mxu0 0
        %1727 = vmatprep.subr.bf16.mxu0 0
        %1728 = vmatpush2.bf16.xpose.msra.mxu0 0
        %1729 = vmatprep.subr.bf16.mxu0 0
        %1730 = vmatpush2.bf16.xpose.msra.mxu0 0
        %1731 = vmatprep.subr.bf16.mxu0 0
        %1732 = vmatpush2.bf16.xpose.msra.mxu0 0
        %1733 = vmatprep.subr.bf16.mxu0 0
        %1734 = vmatpush2.bf16.xpose.msra.mxu0 0
        %1735 = vmatprep.subr.bf16.mxu0 0
        %1736 = vmatpush2.bf16.xpose.msra.mxu0 0
        %1737 = vmatprep.subr.bf16.mxu0 0
        %1738 = vmatpush2.bf16.xpose.msra.mxu0 0
        %1739 = vmatprep.mubr.bf16.mxu0 0
        %1740 = vmatmul.mubr.bf16.gmra.mxu0 %v1702
        %v1741 = vpop.f32.mrf.mxu0
        %v1742 = vadd.f32 0.0, %v1741
        %v1743 = vpop.f32.mrf.mxu0
        %v1744 = vpop.f32.mrf.mxu0
        %v1745 = vpop.f32.mrf.mxu0
        %1746 = vdwg.mxu0
        %v1747 = vsel %vm601, %v1742, -inf
        %1748 = vmax.xlane.f32.xlu0 %v1747
        %v1749 = vpop.xlane.xlu0 %1748
        %v1750 = vsub.f32 %v1742, %v1749
        %v1751 = vmul.f32 %v1750, 1.442695
        %v1752 = vpow.pop %v1751
        %v1753 = vsel %vm601, %v1752, 0.0
        %1754 = vadd.xlane.f32.xlu0 %v1753
        %v1755 = vpop.xlane.xlu0 %1754
        %v1756 = vrcp.pop %v1755
        %v1757 = vmul.f32 %v1752, %v1756
        %v1758 = vpack.c.bf16 %v1757, %v1757
        %1759 = vrot.lane.b32.xlu0 %v1366, 40
        %v1760 = vpop.permute.xlu0 %1759
        %v1762 = vsel %vm601, %v1758, 0
        %v1765 = vsel %vm665, %v1760, 0
        %1767 = vmatprep.subr.bf16.mxu0 0
        %1768 = vmatpush1.bf16.msra.mxu0 0
        %1769 = vmatprep.subr.bf16.mxu0 0
        %1770 = vmatpush1.bf16.msra.mxu0 0
        %1771 = vmatprep.subr.bf16.mxu0 0
        %1772 = vmatpush1.bf16.msra.mxu0 0
        %1773 = vmatprep.subr.bf16.mxu0 0
        %1774 = vmatpush1.bf16.msra.mxu0 0
        %1775 = vmatprep.subr.bf16.mxu0 0
        %1776 = vmatpush1.bf16.msra.mxu0 0
        %1777 = vmatprep.subr.bf16.mxu0 0
        %1778 = vmatpush1.bf16.msra.mxu0 0
        %1779 = vmatprep.subr.bf16.mxu0 0
        %1780 = vmatpush1.bf16.msra.mxu0 0
        %1781 = vmatprep.subr.bf16.mxu0 0
        %1782 = vmatpush1.bf16.msra.mxu0 %v1765
        %1783 = vmatprep.subr.bf16.mxu0 0
        %1784 = vmatpush2.bf16.msra.mxu0 0
        %1785 = vmatprep.subr.bf16.mxu0 0
        %1786 = vmatpush2.bf16.msra.mxu0 0
        %1787 = vmatprep.subr.bf16.mxu0 0
        %1788 = vmatpush2.bf16.msra.mxu0 0
        %1789 = vmatprep.subr.bf16.mxu0 0
        %1790 = vmatpush2.bf16.msra.mxu0 0
        %1791 = vmatprep.subr.bf16.mxu0 0
        %1792 = vmatpush2.bf16.msra.mxu0 0
        %1793 = vmatprep.subr.bf16.mxu0 0
        %1794 = vmatpush2.bf16.msra.mxu0 0
        %1795 = vmatprep.subr.bf16.mxu0 0
        %1796 = vmatpush2.bf16.msra.mxu0 0
        %1797 = vmatprep.subr.bf16.mxu0 0
        %1798 = vmatpush2.bf16.msra.mxu0 0
        %1799 = vmatprep.mubr.bf16.mxu0 0
        %1800 = vmatmul.mubr.bf16.gmra.mxu0 %v1762
        %v1801 = vpop.f32.mrf.mxu0
        %v1802 = vadd.f32 0.0, %v1801
        %v1803 = vpop.f32.mrf.mxu0
        %v1804 = vpop.f32.mrf.mxu0
        %v1805 = vpop.f32.mrf.mxu0
        %1806 = vdwg.mxu0
        %1808 = vrot.lane.b32.xlu0 %v1582, 8
        %v1809 = vpop.permute.xlu0 %1808
        %1812 = vrot.lane.b32.xlu0 %v1692, 16
        %v1813 = vpop.permute.xlu0 %1812
        %1816 = vrot.lane.b32.xlu0 %v1802, 24
        %v1817 = vpop.permute.xlu0 %1816
        %v1819 = vsel %vm601, %v1471, %v1809
        %v1820 = vsel %vm1053, %v1819, %v1813
        %v1821 = vsel %vm1055, %v1820, %v1817
        %v1822 = vld [vmem:[#allocation10] sm:$0xf]
        %v1823 = vld [vmem:[#allocation10 + $0x4] sm:$0xf]
        %v1824 = vld [vmem:[#allocation10 + $0x8] sm:$0xf]
        %v1825 = vld [vmem:[#allocation10 + $0xc] sm:$0xf]
        %v1826 = vpack.c.bf16 %v1821, %v1821
        %v1831 = vunpack.c.l.b16 %v1822
        %v1832 = vunpack.c.l.b16 %v1823
        %v1833 = vunpack.c.l.b16 %v1824
        %v1834 = vunpack.c.l.b16 %v1825
        %v1835 = vpack.c.b16 %v1832, %v1831
        %v1836 = vpack.c.b16 %v1834, %v1833
        %v1840 = vsel %vm551, %v1826, 0
        %1842 = vmatprep.subr.bf16.mxu0 0
        %1843 = vmatpush1.bf16.msra.mxu0 0
        %1844 = vmatprep.subr.bf16.mxu0 0
        %1845 = vmatpush1.bf16.msra.mxu0 0
        %1846 = vmatprep.subr.bf16.mxu0 0
        %1847 = vmatpush1.bf16.msra.mxu0 0
        %1848 = vmatprep.subr.bf16.mxu0 0
        %1849 = vmatpush1.bf16.msra.mxu0 0
        %1850 = vmatprep.subr.bf16.mxu0 0
        %1851 = vmatpush1.bf16.msra.mxu0 0
        %1852 = vmatprep.subr.bf16.mxu0 0
        %1853 = vmatpush1.bf16.msra.mxu0 0
        %1854 = vmatprep.subr.bf16.mxu0 0
        %1855 = vmatpush1.bf16.msra.mxu0 %v1836
        %1856 = vmatprep.subr.bf16.mxu0 0
        %1857 = vmatpush1.bf16.msra.mxu0 %v1835
        %1858 = vmatprep.subr.bf16.mxu0 0
        %1859 = vmatpush2.bf16.msra.mxu0 0
        %1860 = vmatprep.subr.bf16.mxu0 0
        %1861 = vmatpush2.bf16.msra.mxu0 0
        %1862 = vmatprep.subr.bf16.mxu0 0
        %1863 = vmatpush2.bf16.msra.mxu0 0
        %1864 = vmatprep.subr.bf16.mxu0 0
        %1865 = vmatpush2.bf16.msra.mxu0 0
        %1866 = vmatprep.subr.bf16.mxu0 0
        %1867 = vmatpush2.bf16.msra.mxu0 0
        %1868 = vmatprep.subr.bf16.mxu0 0
        %1869 = vmatpush2.bf16.msra.mxu0 0
        %1870 = vmatprep.subr.bf16.mxu0 0
        %1871 = vmatpush2.bf16.msra.mxu0 0
        %1872 = vmatprep.subr.bf16.mxu0 0
        %1873 = vmatpush2.bf16.msra.mxu0 0
        %1874 = vmatprep.mubr.bf16.mxu0 0
        %1875 = vmatmul.mubr.bf16.gmra.mxu0 %v1840
        %v1876 = vpop.f32.mrf.mxu0
        %v1877 = vadd.f32 %v1301, %v1876
        %v1878 = vpop.f32.mrf.mxu0
        %v1879 = vpop.f32.mrf.mxu0
        %v1880 = vpop.f32.mrf.mxu0
        %1881 = vdwg.mxu0
        %v1882 = vadd.f32 %v1877, %v1299
        %v1883 = vsel %vm551, %v1882, 0.0
        %1884 = vadd.xlane.f32.xlu0 %v1883
        %v1885 = vpop.xlane.xlu0 %1884
        %v1886 = vmul.f32 %v1885, %v1121
        %v1887 = vsub.f32 %v1882, %v1886
        %v1888 = vmul.f32 %v1887, %v1887
        %v1889 = vsel %vm551, %v1888, 0.0
        %1890 = vadd.xlane.f32.xlu0 %v1889
        %v1891 = vpop.xlane.xlu0 %1890
        %v1892 = vmul.f32 %v1891, %v1121
        %v1893 = vadd.f32 %v1892, 1e-12
        %v1894 = vrsqrt.pop %v1893
        %v1895 = vmul.f32 %v1887, %v1894
        %v1896 = vmul.f32 %v1895, %v1302
        %v1897 = vadd.f32 %v1896, %v1303
        %v1898 = vpack.c.bf16 %v1897, %v1897
        %v1899 = vld [vmem:[%s1 + $0x1c] ss:$0 sm:$0xff]
        %s1900 = scalar_lea.vmem %s1, 29
        %v1901 = vld [vmem:[%s1900] ss:$8 sm:$0x7]
        %v1902 = vld [vmem:[%s1 + $0x1e] ss:$0 sm:$0xff]
        %v1903 = vld [vmem:[%s1 + $0x1f] ss:$0 sm:$0xff]
        %v1904 = vld [vmem:[%s1 + $0x30] ss:$0 sm:$0xff]
        %v1905 = vld [vmem:[%s8] sm:$0xf]
        %v1906 = vld [vmem:[%s8 + $0x4] sm:$0xf]
        %v1907 = vld [vmem:[%s8 + $0x8] sm:$0xf]
        %v1908 = vld [vmem:[%s8 + $0xc] sm:$0xf]
        %v1913 = vunpack.c.l.b16 %v1905
        %v1914 = vunpack.c.l.b16 %v1906
        %v1915 = vunpack.c.l.b16 %v1907
        %v1916 = vunpack.c.l.b16 %v1908
        %v1917 = vpack.c.b16 %v1914, %v1913
        %v1918 = vpack.c.b16 %v1916, %v1915
        %v1922 = vsel %vm551, %v1898, 0
        %1924 = vmatprep.subr.bf16.mxu0 0
        %1925 = vmatpush1.bf16.msra.mxu0 0
        %1926 = vmatprep.subr.bf16.mxu0 0
        %1927 = vmatpush1.bf16.msra.mxu0 0
        %1928 = vmatprep.subr.bf16.mxu0 0
        %1929 = vmatpush1.bf16.msra.mxu0 0
        %1930 = vmatprep.subr.bf16.mxu0 0
        %1931 = vmatpush1.bf16.msra.mxu0 0
        %1932 = vmatprep.subr.bf16.mxu0 0
        %1933 = vmatpush1.bf16.msra.mxu0 0
        %1934 = vmatprep.subr.bf16.mxu0 0
        %1935 = vmatpush1.bf16.msra.mxu0 0
        %1936 = vmatprep.subr.bf16.mxu0 0
        %1937 = vmatpush1.bf16.msra.mxu0 %v1918
        %1938 = vmatprep.subr.bf16.mxu0 0
        %1939 = vmatpush1.bf16.msra.mxu0 %v1917
        %1940 = vmatprep.subr.bf16.mxu0 0
        %1941 = vmatpush2.bf16.msra.mxu0 0
        %1942 = vmatprep.subr.bf16.mxu0 0
        %1943 = vmatpush2.bf16.msra.mxu0 0
        %1944 = vmatprep.subr.bf16.mxu0 0
        %1945 = vmatpush2.bf16.msra.mxu0 0
        %1946 = vmatprep.subr.bf16.mxu0 0
        %1947 = vmatpush2.bf16.msra.mxu0 0
        %1948 = vmatprep.subr.bf16.mxu0 0
        %1949 = vmatpush2.bf16.msra.mxu0 0
        %1950 = vmatprep.subr.bf16.mxu0 0
        %1951 = vmatpush2.bf16.msra.mxu0 0
        %1952 = vmatprep.subr.bf16.mxu0 0
        %1953 = vmatpush2.bf16.msra.mxu0 0
        %1954 = vmatprep.subr.bf16.mxu0 0
        %1955 = vmatpush2.bf16.msra.mxu0 0
        %1956 = vmatprep.mubr.bf16.mxu0 0
        %1957 = vmatmul.mubr.bf16.gmra.mxu0 %v1922
        %v1958 = vpop.f32.mrf.mxu0
        %v1959 = vadd.f32 %v1899, %v1958
        %v1960 = vpop.f32.mrf.mxu0
        %v1961 = vpop.f32.mrf.mxu0
        %v1962 = vpop.f32.mrf.mxu0
        %1963 = vdwg.mxu0
        %vm1964 = vcmask 31744
        %v1965 = vsel %vm1964, %v1959, -inf
        %1966 = vmax.xlane.f32.xlu0 %v1965
        %v1967 = vpop.xlane.xlu0 %1966
        %v1968 = vsub.f32 %v1959, %v1967
        %v1969 = vmul.f32 %v1968, 1.442695
        %v1970 = vpow.pop %v1969
        %v1971 = vsel %vm1964, %v1970, 0.0
        %1972 = vadd.xlane.f32.xlu0 %v1971
        %v1973 = vpop.xlane.xlu0 %1972
        %v1974 = vrcp.pop %v1973
        %v1975 = vmul.f32 %v1970, %v1974
        %vm1976 = vcmp.ge.f32.partialorder %v1959, %v1967
        %v1977 = vsel %vm1976, -1e+30, %v1959
        %v1978 = vsel %vm1964, %v1977, -inf
        %1979 = vmax.xlane.f32.xlu0 %v1978
        %v1980 = vpop.xlane.xlu0 %1979
        %vm1981 = vcmp.ge.f32.partialorder %v1977, %v1980
        %vm1982 = vmor %vm1976, %vm1981
        %v1983 = vsel %vm1982, %v1975, 0.0
        %v1984 = vsel %vm1964, %v1983, 0.0
        %1985 = vadd.xlane.f32.xlu0 %v1984
        %v1986 = vpop.xlane.xlu0 %1985
        %v1987 = vrcp.pop %v1986
        %v1988 = vmul.f32 %v1983, %v1987
        %v1989 = vld [vmem:[%s9] sm:$0xff]
        %v1990 = vld [vmem:[%s9 + $0x8] sm:$0xf]
        %v1991 = vld [vmem:[%s9 + $0xc] sm:$0xff]
        %v1992 = vld [vmem:[%s9 + $0x14] sm:$0xf]
        %v1993 = vld [vmem:[%s9 + $0x18] sm:$0xff]
        %v1994 = vld [vmem:[%s9 + $0x20] sm:$0xf]
        %v1995 = vld [vmem:[%s9 + $0x24] sm:$0xff]
        %v1996 = vld [vmem:[%s9 + $0x2c] sm:$0xf]
        %v1998 = vlaneseq
        %v1999 = vshrl.u32 %v1998, 7
        %v2000 = vsub.s32 0, %v1999
        %v2001 = vrot.slane %v1901, %v2000
        %v2002 = vlaneseq
        %v2003 = vshrl.u32 %v2002, 7
        %v2004 = vsub.s32 1, %v2003
        %v2005 = vrot.slane %v1901, %v2004
        %v2006 = vlaneseq
        %v2007 = vshrl.u32 %v2006, 7
        %v2008 = vsub.s32 2, %v2007
        %v2009 = vrot.slane %v1901, %v2008
        %v2021 = vunpack.c.l.b16 %v1989
        %v2022 = vunpack.c.h.b16 %v1989
        %v2023 = vunpack.c.l.b16 %v1990
        %v2024 = vunpack.c.l.b16 %v1991
        %v2025 = vunpack.c.h.b16 %v1991
        %v2026 = vunpack.c.l.b16 %v1992
        %v2027 = vunpack.c.l.b16 %v1993
        %v2028 = vunpack.c.h.b16 %v1993
        %v2029 = vunpack.c.l.b16 %v1994
        %v2030 = vunpack.c.l.b16 %v1995
        %v2031 = vunpack.c.h.b16 %v1995
        %v2032 = vunpack.c.l.b16 %v1996
        %v2033 = vpack.c.b16 %v2024, %v2021
        %v2034 = vpack.c.b16 %v2025, %v2022
        %v2035 = vpack.c.b16 %v2026, %v2023
        %v2036 = vpack.c.b16 %v2030, %v2027
        %v2037 = vpack.c.b16 %v2031, %v2028
        %v2038 = vpack.c.b16 %v2032, %v2029
        %2045 = vmatprep.subr.bf16.mxu0 0
        %2046 = vmatpush1.bf16.msra.mxu0 0
        %2047 = vmatprep.subr.bf16.mxu0 0
        %2048 = vmatpush1.bf16.msra.mxu0 0
        %2049 = vmatprep.subr.bf16.mxu0 0
        %2050 = vmatpush1.bf16.msra.mxu0 0
        %2051 = vmatprep.subr.bf16.mxu0 0
        %2052 = vmatpush1.bf16.msra.mxu0 0
        %2053 = vmatprep.subr.bf16.mxu0 0
        %2054 = vmatpush1.bf16.msra.mxu0 0
        %2055 = vmatprep.subr.bf16.mxu0 0
        %2056 = vmatpush1.bf16.msra.mxu0 0
        %2057 = vmatprep.subr.bf16.mxu0 %v2037
        %2058 = vmatpush1.bf16.msra.mxu0 %v2036
        %2059 = vmatprep.subr.bf16.mxu0 %v2034
        %2060 = vmatpush1.bf16.msra.mxu0 %v2033
        %2061 = vmatprep.subr.bf16.mxu0 0
        %2062 = vmatpush2.bf16.msra.mxu0 0
        %2063 = vmatprep.subr.bf16.mxu0 0
        %2064 = vmatpush2.bf16.msra.mxu0 0
        %2065 = vmatprep.subr.bf16.mxu0 0
        %2066 = vmatpush2.bf16.msra.mxu0 0
        %2067 = vmatprep.subr.bf16.mxu0 0
        %2068 = vmatpush2.bf16.msra.mxu0 0
        %2069 = vmatprep.subr.bf16.mxu0 0
        %2070 = vmatpush2.bf16.msra.mxu0 0
        %2071 = vmatprep.subr.bf16.mxu0 0
        %2072 = vmatpush2.bf16.msra.mxu0 0
        %2073 = vmatprep.subr.bf16.mxu0 0
        %2074 = vmatpush2.bf16.msra.mxu0 0
        %2075 = vmatprep.subr.bf16.mxu0 0
        %2076 = vmatpush2.bf16.msra.mxu0 0
        %2077 = vmatprep.mubr.bf16.mxu0 0
        %2078 = vmatmul.mubr.bf16.gmra.mxu0 %v1922
        %v2079 = vpop.f32.mrf.mxu0
        %v2080 = vadd.f32 %v2001, %v2079
        %v2081 = vpop.f32.mrf.mxu0
        %v2082 = vadd.f32 %v2005, %v2081
        %v2083 = vpop.f32.mrf.mxu0
        %v2084 = vpop.f32.mrf.mxu0
        %2085 = vdwg.mxu0
        %2086 = vmatprep.subr.bf16.mxu0 0
        %2087 = vmatpush1.bf16.msra.mxu0 0
        %2088 = vmatprep.subr.bf16.mxu0 0
        %2089 = vmatpush1.bf16.msra.mxu0 0
        %2090 = vmatprep.subr.bf16.mxu0 0
        %2091 = vmatpush1.bf16.msra.mxu0 0
        %2092 = vmatprep.subr.bf16.mxu0 0
        %2093 = vmatpush1.bf16.msra.mxu0 0
        %2094 = vmatprep.subr.bf16.mxu0 0
        %2095 = vmatpush1.bf16.msra.mxu0 0
        %2096 = vmatprep.subr.bf16.mxu0 0
        %2097 = vmatpush1.bf16.msra.mxu0 0
        %2098 = vmatprep.subr.bf16.mxu0 0
        %2099 = vmatpush1.bf16.msra.mxu0 %v2038
        %2100 = vmatprep.subr.bf16.mxu0 0
        %2101 = vmatpush1.bf16.msra.mxu0 %v2035
        %2102 = vmatprep.subr.bf16.mxu0 0
        %2103 = vmatpush2.bf16.msra.mxu0 0
        %2104 = vmatprep.subr.bf16.mxu0 0
        %2105 = vmatpush2.bf16.msra.mxu0 0
        %2106 = vmatprep.subr.bf16.mxu0 0
        %2107 = vmatpush2.bf16.msra.mxu0 0
        %2108 = vmatprep.subr.bf16.mxu0 0
        %2109 = vmatpush2.bf16.msra.mxu0 0
        %2110 = vmatprep.subr.bf16.mxu0 0
        %2111 = vmatpush2.bf16.msra.mxu0 0
        %2112 = vmatprep.subr.bf16.mxu0 0
        %2113 = vmatpush2.bf16.msra.mxu0 0
        %2114 = vmatprep.subr.bf16.mxu0 0
        %2115 = vmatpush2.bf16.msra.mxu0 0
        %2116 = vmatprep.subr.bf16.mxu0 0
        %2117 = vmatpush2.bf16.msra.mxu0 0
        %2118 = vmatprep.mubr.bf16.mxu0 0
        %2119 = vmatmul.mubr.bf16.gmra.mxu0 %v1922
        %v2120 = vpop.f32.mrf.mxu0
        %v2121 = vadd.f32 %v2009, %v2120
        %v2122 = vpop.f32.mrf.mxu0
        %v2123 = vpop.f32.mrf.mxu0
        %v2124 = vpop.f32.mrf.mxu0
        %2125 = vdwg.mxu0
        %2127 = vset.pattern.permute.xlu0 0
        %2128 = vperm.xlu0 %2127, %v1988
        %v2129 = vpop.permute.xlu0 %2128
        %v2131 = vmul.f32 %v2129, %v2080
        %v2132 = vadd.f32 %v2131, 0.0
        %2133 = vset.pattern.permute.xlu0 1
        %2134 = vperm.xlu0 %2133, %v1988
        %v2135 = vpop.permute.xlu0 %2134
        %v2137 = vmul.f32 %v2135, %v2080
        %2139 = vrot.lane.b32.xlu0 %v2137, 64
        %v2140 = vpop.permute.xlu0 %2139
        %v2142 = vadd.f32 %v2132, %v2140
        %2143 = vset.pattern.permute.xlu0 2
        %2144 = vperm.xlu0 %2143, %v1988
        %v2145 = vpop.permute.xlu0 %2144
        %v2147 = vmul.f32 %v2145, %v2082
        %v2148 = vadd.f32 %v2142, %v2147
        %2149 = vset.pattern.permute.xlu0 3
        %2150 = vperm.xlu0 %2149, %v1988
        %v2151 = vpop.permute.xlu0 %2150
        %v2153 = vmul.f32 %v2151, %v2082
        %2155 = vrot.lane.b32.xlu0 %v2153, 64
        %v2156 = vpop.permute.xlu0 %2155
        %v2158 = vadd.f32 %v2148, %v2156
        %v2159 = vadd.f32 %v2158, %v2121
        %v2160 = vmul.f32 %v2159, 0.5
        %v2161 = vmul.f32 %v2159, 0.044715
        %v2162 = vmul.f32 %v2161, %v2159
        %v2163 = vmul.f32 %v2162, %v2159
        %v2164 = vadd.f32 %v2159, %v2163
        %v2165 = vmul.f32 %v2164, 0.7978846
        %v2166 = vtanh.pop %v2165
        %v2167 = vadd.f32 %v2166, 1.0
        %v2168 = vmul.f32 %v2160, %v2167
        %v2169 = vld [vmem:[%s10] sm:$0xf]
        %v2170 = vld [vmem:[%s10 + $0x4] sm:$0xf]
        %v2171 = vld [vmem:[%s10 + $0x8] sm:$0xf]
        %v2172 = vld [vmem:[%s10 + $0xc] sm:$0xf]
        %v2173 = vld [vmem:[%s10 + $0x10] sm:$0xf]
        %v2174 = vld [vmem:[%s10 + $0x14] sm:$0xf]
        %v2175 = vld [vmem:[%s10 + $0x18] sm:$0xf]
        %v2176 = vld [vmem:[%s10 + $0x1c] sm:$0xf]
        %v2177 = vpack.c.bf16 %v2168, %v2168
        %v2186 = vunpack.c.l.b16 %v2169
        %v2187 = vunpack.c.l.b16 %v2170
        %v2188 = vunpack.c.l.b16 %v2171
        %v2189 = vunpack.c.l.b16 %v2172
        %v2190 = vunpack.c.l.b16 %v2173
        %v2191 = vunpack.c.l.b16 %v2174
        %v2192 = vunpack.c.l.b16 %v2175
        %v2193 = vunpack.c.l.b16 %v2176
        %v2194 = vpack.c.b16 %v2187, %v2186
        %v2195 = vpack.c.b16 %v2189, %v2188
        %v2196 = vpack.c.b16 %v2191, %v2190
        %v2197 = vpack.c.b16 %v2193, %v2192
        %v2203 = vsel %vm1240, %v2177, 0
        %2205 = vmatprep.subr.bf16.mxu0 0
        %2206 = vmatpush1.bf16.msra.mxu0 0
        %2207 = vmatprep.subr.bf16.mxu0 0
        %2208 = vmatpush1.bf16.msra.mxu0 0
        %2209 = vmatprep.subr.bf16.mxu0 0
        %2210 = vmatpush1.bf16.msra.mxu0 0
        %2211 = vmatprep.subr.bf16.mxu0 0
        %2212 = vmatpush1.bf16.msra.mxu0 0
        %2213 = vmatprep.subr.bf16.mxu0 0
        %2214 = vmatpush1.bf16.msra.mxu0 %v2197
        %2215 = vmatprep.subr.bf16.mxu0 0
        %2216 = vmatpush1.bf16.msra.mxu0 %v2196
        %2217 = vmatprep.subr.bf16.mxu0 0
        %2218 = vmatpush1.bf16.msra.mxu0 %v2195
        %2219 = vmatprep.subr.bf16.mxu0 0
        %2220 = vmatpush1.bf16.msra.mxu0 %v2194
        %2221 = vmatprep.subr.bf16.mxu0 0
        %2222 = vmatpush2.bf16.msra.mxu0 0
        %2223 = vmatprep.subr.bf16.mxu0 0
        %2224 = vmatpush2.bf16.msra.mxu0 0
        %2225 = vmatprep.subr.bf16.mxu0 0
        %2226 = vmatpush2.bf16.msra.mxu0 0
        %2227 = vmatprep.subr.bf16.mxu0 0
        %2228 = vmatpush2.bf16.msra.mxu0 0
        %2229 = vmatprep.subr.bf16.mxu0 0
        %2230 = vmatpush2.bf16.msra.mxu0 0
        %2231 = vmatprep.subr.bf16.mxu0 0
        %2232 = vmatpush2.bf16.msra.mxu0 0
        %2233 = vmatprep.subr.bf16.mxu0 0
        %2234 = vmatpush2.bf16.msra.mxu0 0
        %2235 = vmatprep.subr.bf16.mxu0 0
        %2236 = vmatpush2.bf16.msra.mxu0 0
        %2237 = vmatprep.mubr.bf16.mxu0 0
        %2238 = vmatmul.mubr.bf16.gmra.mxu0 %v2203
        %v2239 = vpop.f32.mrf.mxu0
        %v2240 = vadd.f32 %v1902, %v2239
        %v2241 = vpop.f32.mrf.mxu0
        %v2242 = vpop.f32.mrf.mxu0
        %v2243 = vpop.f32.mrf.mxu0
        %2244 = vdwg.mxu0
        %v2245 = vadd.f32 %v2240, %v1897
        %v2246 = vsel %vm551, %v2245, 0.0
        %2247 = vadd.xlane.f32.xlu0 %v2246
        %v2248 = vpop.xlane.xlu0 %2247
        %v2249 = vmul.f32 %v2248, %v1121
        %v2250 = vsub.f32 %v2245, %v2249
        %v2251 = vmul.f32 %v2250, %v2250
        %v2252 = vsel %vm551, %v2251, 0.0
        %2253 = vadd.xlane.f32.xlu0 %v2252
        %v2254 = vpop.xlane.xlu0 %2253
        %v2255 = vmul.f32 %v2254, %v1121
        %v2256 = vadd.f32 %v2255, 1e-12
        %v2257 = vrsqrt.pop %v2256
        %v2258 = vmul.f32 %v2250, %v2257
        %v2259 = vmul.f32 %v2258, %v1903
        %v2260 = vadd.f32 %v2259, %v1904
        %v2261 = vld [vmem:[%s1 + $0x31] ss:$0 sm:$0xff]
        %v2262 = vld [vmem:[%s1 + $0x32] ss:$0 sm:$0xff]
        %v2263 = vld [vmem:[#allocation11] sm:$0xf]
        %v2264 = vld [vmem:[#allocation11 + $0x4] sm:$0xf]
        %v2265 = vld [vmem:[#allocation11 + $0x8] sm:$0xf]
        %v2266 = vld [vmem:[#allocation11 + $0xc] sm:$0xf]
        %v2267 = vpack.c.bf16 %v2260, %v2260
        %v2272 = vunpack.c.l.b16 %v2263
        %v2273 = vunpack.c.l.b16 %v2264
        %v2274 = vunpack.c.l.b16 %v2265
        %v2275 = vunpack.c.l.b16 %v2266
        %v2276 = vpack.c.b16 %v2273, %v2272
        %v2277 = vpack.c.b16 %v2275, %v2274
        %v2281 = vsel %vm551, %v2267, 0
        %2283 = vmatprep.subr.bf16.mxu0 0
        %2284 = vmatpush1.bf16.msra.mxu0 0
        %2285 = vmatprep.subr.bf16.mxu0 0
        %2286 = vmatpush1.bf16.msra.mxu0 0
        %2287 = vmatprep.subr.bf16.mxu0 0
        %2288 = vmatpush1.bf16.msra.mxu0 0
        %2289 = vmatprep.subr.bf16.mxu0 0
        %2290 = vmatpush1.bf16.msra.mxu0 0
        %2291 = vmatprep.subr.bf16.mxu0 0
        %2292 = vmatpush1.bf16.msra.mxu0 0
        %2293 = vmatprep.subr.bf16.mxu0 0
        %2294 = vmatpush1.bf16.msra.mxu0 0
        %2295 = vmatprep.subr.bf16.mxu0 0
        %2296 = vmatpush1.bf16.msra.mxu0 %v2277
        %2297 = vmatprep.subr.bf16.mxu0 0
        %2298 = vmatpush1.bf16.msra.mxu0 %v2276
        %2299 = vmatprep.subr.bf16.mxu0 0
        %2300 = vmatpush2.bf16.msra.mxu0 0
        %2301 = vmatprep.subr.bf16.mxu0 0
        %2302 = vmatpush2.bf16.msra.mxu0 0
        %2303 = vmatprep.subr.bf16.mxu0 0
        %2304 = vmatpush2.bf16.msra.mxu0 0
        %2305 = vmatprep.subr.bf16.mxu0 0
        %2306 = vmatpush2.bf16.msra.mxu0 0
        %2307 = vmatprep.subr.bf16.mxu0 0
        %2308 = vmatpush2.bf16.msra.mxu0 0
        %2309 = vmatprep.subr.bf16.mxu0 0
        %2310 = vmatpush2.bf16.msra.mxu0 0
        %2311 = vmatprep.subr.bf16.mxu0 0
        %2312 = vmatpush2.bf16.msra.mxu0 0
        %2313 = vmatprep.subr.bf16.mxu0 0
        %2314 = vmatpush2.bf16.msra.mxu0 0
        %2315 = vmatprep.mubr.bf16.mxu0 0
        %2316 = vmatmul.mubr.bf16.gmra.mxu0 %v2281
        %v2317 = vpop.f32.mrf.mxu0
        %v2318 = vadd.f32 %v2261, %v2317
        %v2319 = vpop.f32.mrf.mxu0
        %v2320 = vpop.f32.mrf.mxu0
        %v2321 = vpop.f32.mrf.mxu0
        %2322 = vdwg.mxu0
        %v2323 = vtanh.pop %v2318
        %v2324 = vld [vmem:[%s12] sm:$0xf]
        %v2325 = vld [vmem:[%s12 + $0x4] sm:$0xf]
        %v2326 = vld [vmem:[%s12 + $0x8] sm:$0xf]
        %v2327 = vld [vmem:[%s12 + $0xc] sm:$0xf]
        %v2328 = vpack.c.bf16 %v2323, %v2323
        %v2333 = vunpack.c.l.b16 %v2324
        %v2334 = vunpack.c.l.b16 %v2325
        %v2335 = vunpack.c.l.b16 %v2326
        %v2336 = vunpack.c.l.b16 %v2327
        %v2337 = vpack.c.b16 %v2334, %v2333
        %v2338 = vpack.c.b16 %v2336, %v2335
        %v2342 = vsel %vm551, %v2328, 0
        %2344 = vmatprep.subr.bf16.mxu0 0
        %2345 = vmatpush1.bf16.msra.mxu0 0
        %2346 = vmatprep.subr.bf16.mxu0 0
        %2347 = vmatpush1.bf16.msra.mxu0 0
        %2348 = vmatprep.subr.bf16.mxu0 0
        %2349 = vmatpush1.bf16.msra.mxu0 0
        %2350 = vmatprep.subr.bf16.mxu0 0
        %2351 = vmatpush1.bf16.msra.mxu0 0
        %2352 = vmatprep.subr.bf16.mxu0 0
        %2353 = vmatpush1.bf16.msra.mxu0 0
        %2354 = vmatprep.subr.bf16.mxu0 0
        %2355 = vmatpush1.bf16.msra.mxu0 0
        %2356 = vmatprep.subr.bf16.mxu0 0
        %2357 = vmatpush1.bf16.msra.mxu0 %v2338
        %2358 = vmatprep.subr.bf16.mxu0 0
        %2359 = vmatpush1.bf16.msra.mxu0 %v2337
        %2360 = vmatprep.subr.bf16.mxu0 0
        %2361 = vmatpush2.bf16.msra.mxu0 0
        %2362 = vmatprep.subr.bf16.mxu0 0
        %2363 = vmatpush2.bf16.msra.mxu0 0
        %2364 = vmatprep.subr.bf16.mxu0 0
        %2365 = vmatpush2.bf16.msra.mxu0 0
        %2366 = vmatprep.subr.bf16.mxu0 0
        %2367 = vmatpush2.bf16.msra.mxu0 0
        %2368 = vmatprep.subr.bf16.mxu0 0
        %2369 = vmatpush2.bf16.msra.mxu0 0
        %2370 = vmatprep.subr.bf16.mxu0 0
        %2371 = vmatpush2.bf16.msra.mxu0 0
        %2372 = vmatprep.subr.bf16.mxu0 0
        %2373 = vmatpush2.bf16.msra.mxu0 0
        %2374 = vmatprep.subr.bf16.mxu0 0
        %2375 = vmatpush2.bf16.msra.mxu0 0
        %2376 = vmatprep.mubr.bf16.mxu0 0
        %2377 = vmatmul.mubr.bf16.gmra.mxu0 %v2342
        %v2378 = vpop.f32.mrf.mxu0
        %v2379 = vadd.f32 %v2262, %v2378
        %v2380 = vpop.f32.mrf.mxu0
        %v2381 = vpop.f32.mrf.mxu0
        %v2382 = vpop.f32.mrf.mxu0
        %2383 = vdwg.mxu0
        %vm2384 = vcmask 8192
        %2385 = vst.msk [vmem:[%s527] sm:$0x1] %vm2384, %v2379
        %s2386 = sand.u32 %s319, 1
        %s2387 = scalar_lea.sflag [#allocation4], %s2386
        %s2388 = sand.u32 %s319, 1
        %s2389 = scalar_lea.vmem [#allocation13], %s2388
        // Predicated region
        $region97: #{tpu_custom_call.1} parent=71 // pred_check
          %p2390 = pneg %p329
        $region98: #{tpu_custom_call.1} parent=71 // pred_check_branch
          %2392 = sbr.rel (%p2390) target = $region100
        $region99: #{tpu_custom_call.1} parent=71 // pred_region
          %s2394 = ssub.s32 16, 16
          %2395 = vsyncadd %s2387, %s2394
          %s2396 = smul.addr %s33, 16
          %s2397 = scalar_lea.hbm %s13, %s2396
          %s2399 = sshll.u32 %s2389, 4
          %s2400 = int_to_ptr.vmem [resolvable:$true] %s2399
          %2402 = dma.vmem_to_hbm [thread:$0]  %s2400, 16, %s2397, %s2387
        $region100: #{tpu_custom_call.1} parent=71 // pred_fallthru
          _
      $region72: #{tpu_custom_call.1} parent=5 // pred_fallthru
        _
      %p2403 = scmp.le.s32.totalorder 2, %s28
      // Predicated region
      $region101: #{tpu_custom_call.1} parent=5 // pred_check
        %p2404 = pneg %p2403
      $region102: #{tpu_custom_call.1} parent=5 // pred_check_branch
        %2406 = sbr.rel (%p2404) target = $region104
      $region103: #{tpu_custom_call.1} parent=5 // pred_region
        %s2407 = ssub.s32 %s28, 2
        // Predicated region
        $region105: #{tpu_custom_call.1} parent=103 // pred_check
          %p2408 = pneg %p335
        $region106: #{tpu_custom_call.1} parent=103 // pred_check_branch
          %2410 = sbr.rel (%p2408) target = $region108
        $region107: #{tpu_custom_call.1} parent=103 // pred_region
          %s2411 = sand.u32 %s320, 1
          %s2412 = scalar_lea.sflag [#allocation4], %s2411
          %s2413 = sand.u32 %s320, 1
          %s2414 = scalar_lea.vmem [#allocation13], %s2413
          %2415 = dma.done %s2412, 16
        $region108: #{tpu_custom_call.1} parent=103 // pred_fallthru
          _
      $region104: #{tpu_custom_call.1} parent=5 // pred_fallthru
        _
    $region6: #{tpu_custom_call.1} parent=1 // loop_footer
      %s32 = sadd.s32 1, %s28
    $region7: #{tpu_custom_call.1} parent=1 // loop_footer_branch
      %27 = sbr.rel target = $region3
    $region8: #{tpu_custom_call.1} parent=1 // loop_exit
      _
    %2416 = vsyncpa [#allocation3], 1
    %s2417 = scalar_lea.sflag [#allocation3], 1
    %2418 = vsyncpa %s2417, 1
    %2419 = vsyncpa [#allocation6], 1
    %2420 = vsyncpa [#allocation9], 1
    %2421 = vsyncpa [#allocation12], 1
    %2422 = vsyncpa [#allocation4], 1
    %s2423 = scalar_lea.sflag [#allocation4], 1
    %2424 = vsyncpa %s2423, 1

</llo_original>
